<compile_context>
chip_gen: v7x
topology: tpu7x:2x2x1
jax: 0.10.0
libtpu: 0.0.40
codegen_flags: <defaults>
</compile_context>

<pallas_src>
import math

import jax
import jax.numpy as jnp
from jax.experimental import pallas as pl
from jax.experimental.pallas import tpu as pltpu

# ---- small, self-consistent hyperparameters (mirror MAE_Decoder.__init__) ----
INPUT_SIZE = 80      # input_size
PATCH_SIZE = 10      # patch_size     -> num patches H = 8, decoder seq T = 9
EMB_DIM    = 32      # emb_dim
NUM_LAYER  = 2       # num_layer
NUM_HEAD   = 4       # num_head       -> head_dim = 8
MLP_RATIO  = 4       # timm Block default mlp_ratio
BATCH      = 2
T_VISIBLE  = 4       # tokens coming from the encoder (cls + visible patches)
HEAD_PAD   = 128     # lane-dense padding of the prediction-head output


# ----------------------------- in-kernel helpers ------------------------------
def _layernorm(x, g, b, eps=1e-5):
  # single-pass variance: E[x^2] - mean^2 (independent lane reductions)
  mu = jnp.mean(x, axis=-1, keepdims=True)
  ms = jnp.mean(x * x, axis=-1, keepdims=True)
  var = ms - mu * mu
  return (x - mu) * jax.lax.rsqrt(var + eps) * g + b


def _gelu_tanh(x):
  # tanh-approx GELU (runs on the EUP).  ~1e-3 abs drift vs torch's erf GELU.
  c = math.sqrt(2.0 / math.pi)
  return 0.5 * x * (1.0 + jnp.tanh(c * (x + 0.044715 * x * x * x)))


# ------------------------------ decoder forward -------------------------------
def mae_decoder_forward(packed, features, restore_indexes):
  """features: (T_vis, B, C) float32;  restore_indexes: (H, B) int32."""
  T_vis, B, C = features.shape
  H = restore_indexes.shape[0]
  T = H + 1
  L = packed['w_attn'].shape[0]
  NH = NUM_HEAD
  HD = C // NH
  P = PATCH_SIZE
  f32 = jnp.float32

  # ---- cheap index / layout prep (pure XLA, negligible at these sizes) ----
  ridx = restore_indexes.astype(jnp.int32)                                  # (H, B)
  idx = jnp.concatenate([jnp.zeros((1, B), jnp.int32), ridx + 1], axis=0)   # (T, B)
  idx_bt = jnp.transpose(idx)                                               # (B, T)
  boff = jnp.arange(B, dtype=jnp.int32)[:, None] * T_vis
  # flat row into the batch-major feature table; masked tokens -> last row.
  gidx = jnp.where(idx_bt < T_vis, idx_bt + boff, B * T_vis).reshape(B * T, 1)

  # batch-major visible features with the mask token appended as the last row.
  table = jnp.concatenate(
      [jnp.transpose(features, (1, 0, 2)).reshape(B * T_vis, C),
       packed['mask_token']], axis=0)                                       # (B*T_vis+1, C)

  def _kernel(gidx_ref, table_ref, vecs_ref, wattn_ref, wfc1_ref, wfc2_ref,
              head_ref, out_ref):
    R = table_ref.shape[0]                       # B*T_vis + 1 (mask-token row last)
    vecs = vecs_ref[...]                         # (T + 6L, C)
    pos = vecs[:T]                               # (T, C)

    # fused take_indexes gather (incl. mask-token fill) as a one-hot matmul,
    # then positional-embedding add.
    gidx = gidx_ref[...]                         # (B*T, 1) int32, values in [0, R)
    onehot = (gidx == jax.lax.broadcasted_iota(jnp.int32, (B * T, R), 1)).astype(f32)
    x = jnp.dot(onehot, table_ref[...], preferred_element_type=f32)         # (B*T, C)
    x = x + jnp.concatenate([pos] * B, axis=0)

    for l in range(L):                           # static unroll over layers
      base = T + 6 * l
      ln1g, ln1b = vecs[base + 0:base + 1], vecs[base + 1:base + 2]
      ln2g, ln2b = vecs[base + 2:base + 3], vecs[base + 3:base + 4]
      b_o, b_fc2 = vecs[base + 4:base + 5], vecs[base + 5:base + 6]

      # ---- attention: ONE (B*T,C)x(C,4C) matmul gives q|k|v (Q pre-scaled);
      # lanes 3C:4C of `w` hold the concat-heads projection W_o (that slice of
      # `qkv` is unused padding of the same MXU pass).
      h1 = _layernorm(x, ln1g, ln1b)
      w = wattn_ref[l]                           # (C, 4C)
      qkv = jnp.dot(h1, w, preferred_element_type=f32)                      # (B*T, 4C)

      def _heads(off, qkv=qkv):                  # -> (B*NH, T, HD)
        return jnp.stack(
            [qkv[b * T:(b + 1) * T, off + h * HD: off + (h + 1) * HD]
             for b in range(B) for h in range(NH)], axis=0)

      q, k, v = _heads(0), _heads(C), _heads(2 * C)
      s = jnp.einsum('nqd,nkd->nqk', q, k, preferred_element_type=f32)      # (B*NH,T,T)
      s = s - jnp.max(s, axis=-1, keepdims=True)
      p = jnp.exp(s)
      p = p * pl.reciprocal(jnp.sum(p, axis=-1, keepdims=True), approx=True)
      ctx = jnp.einsum('nqk,nkd->nqd', p, v, preferred_element_type=f32)    # (B*NH,T,HD)

      # concat heads back to (B*T, NH*HD) and apply ONE output projection.
      ctx2 = jnp.concatenate(
          [jnp.concatenate([ctx[b * NH + h] for h in range(NH)], axis=-1)
           for b in range(B)], axis=0)                                      # (B*T, C)
      x = x + jnp.dot(ctx2, w[:, 3 * C:], preferred_element_type=f32) + b_o

      # ---- MLP (fc1 bias folded as the extra weight row) ----
      h2 = _layernorm(x, ln2g, ln2b)
      wf1 = wfc1_ref[l]                          # (C+1, HID)
      m = _gelu_tanh(jnp.dot(h2, wf1[:C], preferred_element_type=f32) + wf1[C:C + 1])
      x = x + jnp.dot(m, wfc2_ref[l], preferred_element_type=f32) + b_fc2

    # ---- prediction head, lane-dense (HEAD_PAD lanes); cls rows and the
    # lane padding are sliced off in the wrapper.
    hw = head_ref[...]                           # (C+1, HEAD_PAD)
    out_ref[...] = jnp.dot(x, hw[:C], preferred_element_type=f32) + hw[C:C + 1]

  def _full(shape):
    nd = len(shape)
    return pl.BlockSpec(shape, lambda i, nd=nd: (0,) * nd)

  inputs = (gidx, table, packed['vecs'], packed['w_attn'],
            packed['w_fc1'], packed['w_fc2'], packed['head'])

  out = pl.pallas_call(
      _kernel,
      grid=(1,),                                 # whole batch in one program
      in_specs=[_full(a.shape) for a in inputs],
      out_specs=pl.BlockSpec((B * T, HEAD_PAD), lambda i: (0, 0)),
      out_shape=jax.ShapeDtypeStruct((B * T, HEAD_PAD), jnp.float32),
      compiler_params=pltpu.CompilerParams(dimension_semantics=("arbitrary",)),
  )(*inputs)

  # patch2signal: drop the cls row and the lane padding, flatten 'h p' per batch.
  signal = out.reshape(B, T, HEAD_PAD)[:, 1:, :P].reshape(B, H * P)

  # mask depends only on restore_indexes: computed in the wrapper (free in XLA).
  # Matches the PyTorch module literally: mask[t:] = 1 with t = #visible tokens
  # (incl. cls), gathered by the original restore_indexes.
  mask = (jnp.transpose(ridx) >= T_vis).astype(signal.dtype)                # (B, H)
  mask = jnp.broadcast_to(mask[:, :, None], (B, H, P)).reshape(B, H * P)
  return signal, mask


# ------------------------------ parameter packing -----------------------------
def pack_params(params):
  """Pack the logical (torch-equivalent) parameters into the few dense slabs the
  kernel consumes: merged [Wq*scale | Wk | Wv | Wo] attention slab, fc1 bias as
  an extra weight row, one (T+6L, C) vector table, lane-padded head."""
  L, NH, C, HD = params['w_q'].shape
  P = params['head_w'].shape[-1]
  scale = 1.0 / math.sqrt(HD)

  def heads_to_cols(w):           # (L, NH, C, HD) -> (L, C, NH*HD), h-major columns
    return jnp.transpose(w, (0, 2, 1, 3)).reshape(L, C, NH * HD)

  w_attn = jnp.concatenate(
      [heads_to_cols(params['w_q'] * scale),
       heads_to_cols(params['w_k']),
       heads_to_cols(params['w_v']),
       params['w_o'].reshape(L, NH * HD, C)], axis=-1)                 # (L, C, 4C)

  vec_rows = [params['pos_embedding']]                                 # (T, C)
  for l in range(L):
    vec_rows += [params['ln1_g'][l], params['ln1_b'][l],
                 params['ln2_g'][l], params['ln2_b'][l],
                 params['b_o'][l], params['b_fc2'][l]]
  vecs = jnp.concatenate(vec_rows, axis=0)                             # (T + 6L, C)

  w_fc1 = jnp.concatenate([params['w_fc1'], params['b_fc1']], axis=1)  # (L, C+1, HID)

  pad = HEAD_PAD - P
  head = jnp.concatenate(
      [jnp.pad(params['head_w'], ((0, 0), (0, pad))),
       jnp.pad(params['head_b'], ((0, 0), (0, pad)))], axis=0)         # (C+1, HEAD_PAD)

  return {'mask_token': params['mask_token'], 'vecs': vecs, 'w_attn': w_attn,
          'w_fc1': w_fc1, 'w_fc2': params['w_fc2'], 'head': head}


# ------------------------------ parameter init --------------------------------
def init_params(key):
  # Deterministic synthetic init (trunc_normal_ std=0.02 -> normal*0.02).
  # Linear weights are stored in (in, out) / head-major layouts (mathematically
  # equivalent reshapes of PyTorch's (out, in) params); qkv_bias=False as in the
  # timm Block default.
  C, NH, HID, L = EMB_DIM, NUM_HEAD, MLP_RATIO * EMB_DIM, NUM_LAYER
  HD = C // NH
  H = INPUT_SIZE // PATCH_SIZE
  T = H + 1
  ks = jax.random.split(key, 11)
  n = lambda k, shape: 0.02 * jax.random.normal(k, shape, jnp.float32)
  return {
      'mask_token':    n(ks[0], (1, C)),
      'pos_embedding': n(ks[1], (T, C)),
      'head_w':        n(ks[2], (C, PATCH_SIZE)),
      'head_b':        n(ks[3], (1, PATCH_SIZE)),
      'ln1_g': jnp.ones((L, 1, C), jnp.float32),
      'ln1_b': jnp.zeros((L, 1, C), jnp.float32),
      'ln2_g': jnp.ones((L, 1, C), jnp.float32),
      'ln2_b': jnp.zeros((L, 1, C), jnp.float32),
      'w_q': n(ks[4], (L, NH, C, HD)),
      'w_k': n(ks[5], (L, NH, C, HD)),
      'w_v': n(ks[6], (L, NH, C, HD)),
      'w_o': n(ks[7], (L, NH, HD, C)),
      'b_o': n(ks[8], (L, 1, C)),
      'w_fc1': n(ks[9], (L, C, HID)),
      'b_fc1': jnp.zeros((L, 1, HID), jnp.float32),
      'w_fc2': n(ks[10], (L, HID, C)),
      'b_fc2': jnp.zeros((L, 1, C), jnp.float32),
  }


# --------------------------- plain-JAX reference ------------------------------
def mae_decoder_reference(params, features, restore_indexes):
  """Plain-JAX mirror of the PyTorch MAE_Decoder.forward (same weights)."""
  T_vis, B, C = features.shape
  T = params['pos_embedding'].shape[0]
  H = T - 1
  P = params['head_w'].shape[1]
  L = params['w_q'].shape[0]

  idx = jnp.concatenate(
      [jnp.zeros((1, B), restore_indexes.dtype), restore_indexes + 1], axis=0)
  feats = jnp.concatenate(
      [features,
       jnp.broadcast_to(params['mask_token'][None], (T - T_vis, B, C))], axis=0)
  feats = jnp.take_along_axis(
      feats, jnp.broadcast_to(idx[:, :, None], (T, B, C)), axis=0)
  feats = feats + params['pos_embedding'][:, None, :]

  x = jnp.transpose(feats, (1, 0, 2))                  # (B, T, C)
  for l in range(L):
    h1 = _layernorm(x, params['ln1_g'][l], params['ln1_b'][l])
    q = jnp.einsum('btc,hcd->bhtd', h1, params['w_q'][l])
    k = jnp.einsum('btc,hcd->bhtd', h1, params['w_k'][l])
    v = jnp.einsum('btc,hcd->bhtd', h1, params['w_v'][l])
    s = jnp.einsum('bhqd,bhkd->bhqk', q, k) / math.sqrt(q.shape[-1])
    p = jax.nn.softmax(s, axis=-1)
    ctx = jnp.einsum('bhqk,bhkd->bhqd', p, v)
    x = x + jnp.einsum('bhtd,hdc->btc', ctx, params['w_o'][l]) + params['b_o'][l]
    h2 = _layernorm(x, params['ln2_g'][l], params['ln2_b'][l])
    m = _gelu_tanh(jnp.einsum('btc,cf->btf', h2, params['w_fc1'][l])
                   + params['b_fc1'][l])
    x = x + jnp.einsum('btf,fc->btc', m, params['w_fc2'][l]) + params['b_fc2'][l]

  feats = jnp.transpose(x, (1, 0, 2))[1:]              # (H, B, C)
  patches = jnp.einsum('hbc,cp->hbp', feats, params['head_w']) + params['head_b']
  mask = jnp.broadcast_to(
      (jnp.arange(H)[:, None, None] >= T_vis).astype(patches.dtype), (H, B, P))
  mask = jnp.take_along_axis(
      mask, jnp.broadcast_to(restore_indexes[:, :, None], (H, B, P)), axis=0)
  signal = jnp.transpose(patches, (1, 0, 2)).reshape(B, H * P)
  mask = jnp.transpose(mask, (1, 0, 2)).reshape(B, H * P)
  return signal, mask


if __name__ == "__main__":
  key = jax.random.PRNGKey(0)
  pkey, fkey, ikey = jax.random.split(key, 3)
  params = init_params(pkey)
  packed = pack_params(params)

  H = INPUT_SIZE // PATCH_SIZE
  features = jax.random.normal(fkey, (T_VISIBLE, BATCH, EMB_DIM), jnp.float32)
  # restore_indexes: per-batch-column permutation of 0..H-1, shape (H, B)
  cols = [jax.random.permutation(k, H) for k in jax.random.split(ikey, BATCH)]
  restore_indexes = jnp.stack(cols, axis=1).astype(jnp.int32)

  signal, mask = jax.jit(mae_decoder_forward)(packed, features, restore_indexes)
  jax.block_until_ready((signal, mask))

  assert signal.shape == (BATCH, INPUT_SIZE) and signal.dtype == jnp.float32
  assert mask.shape == (BATCH, INPUT_SIZE)

  # correctness check against a plain-JAX transcription of the module
  sig_r, mask_r = mae_decoder_reference(params, features, restore_indexes)
  assert jnp.allclose(signal, sig_r, atol=1e-2, rtol=1e-2)
  assert jnp.array_equal(mask, mask_r.astype(mask.dtype))
  print("KERNEL_OK")
</pallas_src>

<mosaic_0001>
module attributes {stable_mosaic.version = 11 : i64} {
  func.func @_kernel(%arg0: i32, %arg1: memref<18x1xi32, #tpu.memory_space<vmem>>, %arg2: memref<9x32xf32, #tpu.memory_space<vmem>>, %arg3: memref<21x32xf32, #tpu.memory_space<vmem>>, %arg4: memref<2x32x128xf32, #tpu.memory_space<vmem>>, %arg5: memref<2x33x128xf32, #tpu.memory_space<vmem>>, %arg6: memref<2x128x32xf32, #tpu.memory_space<vmem>>, %arg7: memref<33x128xf32, #tpu.memory_space<vmem>>, %arg8: memref<18x128xf32, #tpu.memory_space<vmem>>) attributes {dimension_semantics = [#tpu.dimension_semantics<arbitrary>], iteration_bounds = array<i64: 1>, scalar_prefetch = 0 : i64, scratch_operands = 0 : i64, tpu.core_type = #tpu.core_type<tc>, window_params = [{pipeline_mode = #tpu.pipeline_mode<synchronous>, transform_indices = @transform_0, window_bounds = array<i64: 18, 1>}, {pipeline_mode = #tpu.pipeline_mode<synchronous>, transform_indices = @transform_1, window_bounds = array<i64: 9, 32>}, {pipeline_mode = #tpu.pipeline_mode<synchronous>, transform_indices = @transform_2, window_bounds = array<i64: 21, 32>}, {pipeline_mode = #tpu.pipeline_mode<synchronous>, transform_indices = @transform_3, window_bounds = array<i64: 2, 32, 128>}, {pipeline_mode = #tpu.pipeline_mode<synchronous>, transform_indices = @transform_4, window_bounds = array<i64: 2, 33, 128>}, {pipeline_mode = #tpu.pipeline_mode<synchronous>, transform_indices = @transform_5, window_bounds = array<i64: 2, 128, 32>}, {pipeline_mode = #tpu.pipeline_mode<synchronous>, transform_indices = @transform_6, window_bounds = array<i64: 33, 128>}, {pipeline_mode = #tpu.pipeline_mode<synchronous>, transform_indices = @transform_7, window_bounds = array<i64: 18, 128>}]} {
    %c0 = arith.constant 0 : index
    %c0_0 = arith.constant 0 : index
    %0 = vector.load %arg3[%c0, %c0_0] : memref<21x32xf32, #tpu.memory_space<vmem>>, vector<21x32xf32>
    %1 = vector.extract_strided_slice %0 {offsets = [0, 0], sizes = [9, 32], strides = [1, 1]} : vector<21x32xf32> to vector<9x32xf32>
    %c0_1 = arith.constant 0 : index
    %c0_2 = arith.constant 0 : index
    %2 = vector.load %arg1[%c0_1, %c0_2] : memref<18x1xi32, #tpu.memory_space<vmem>>, vector<18x1xi32>
    %3 = tpu.iota {dimensions = array<i32: 1>} : vector<18x9xi32>
    %4 = vector.broadcast %2 : vector<18x1xi32> to vector<18x9xi32>
    %5 = arith.cmpi eq, %4, %3 : vector<18x9xi32>
    %6 = arith.extui %5 : vector<18x9xi1> to vector<18x9xi32>
    %7 = arith.sitofp %6 : vector<18x9xi32> to vector<18x9xf32>
    %c0_3 = arith.constant 0 : index
    %c0_4 = arith.constant 0 : index
    %8 = vector.load %arg2[%c0_3, %c0_4] : memref<9x32xf32, #tpu.memory_space<vmem>>, vector<9x32xf32>
    %cst = arith.constant dense<0.000000e+00> : vector<18x32xf32>
    %9 = tpu.matmul %7, %8, %cst {dimension_numbers = #tpu.dot_dimension_numbers<[1], [0], [0], [1], [0, 0, 1, 1], [], []>} : vector<18x9xf32>, vector<9x32xf32>, vector<18x32xf32> -> vector<18x32xf32>
    %10 = tpu.concatenate %1, %1 in 0 : vector<9x32xf32>, vector<9x32xf32> -> vector<18x32xf32>
    %11 = arith.addf %9, %10 : vector<18x32xf32>
    %12 = vector.extract_strided_slice %0 {offsets = [9, 0], sizes = [1, 32], strides = [1, 1]} : vector<21x32xf32> to vector<1x32xf32>
    %13 = vector.extract_strided_slice %0 {offsets = [10, 0], sizes = [1, 32], strides = [1, 1]} : vector<21x32xf32> to vector<1x32xf32>
    %14 = vector.extract_strided_slice %0 {offsets = [11, 0], sizes = [1, 32], strides = [1, 1]} : vector<21x32xf32> to vector<1x32xf32>
    %15 = vector.extract_strided_slice %0 {offsets = [12, 0], sizes = [1, 32], strides = [1, 1]} : vector<21x32xf32> to vector<1x32xf32>
    %16 = vector.extract_strided_slice %0 {offsets = [13, 0], sizes = [1, 32], strides = [1, 1]} : vector<21x32xf32> to vector<1x32xf32>
    %17 = vector.extract_strided_slice %0 {offsets = [14, 0], sizes = [1, 32], strides = [1, 1]} : vector<21x32xf32> to vector<1x32xf32>
    %cst_5 = arith.constant dense<0.000000e+00> : vector<18xf32>
    %18 = vector.multi_reduction <add>, %11, %cst_5 [1] : vector<18x32xf32> to vector<18xf32>
    %19 = vector.shape_cast %18 : vector<18xf32> to vector<18x1xf32>
    %cst_6 = arith.constant 3.200000e+01 : f32
    %20 = vector.broadcast %cst_6 : f32 to vector<18x1xf32>
    %21 = arith.divf %19, %20 : vector<18x1xf32>
    %22 = arith.mulf %11, %11 : vector<18x32xf32>
    %cst_7 = arith.constant dense<0.000000e+00> : vector<18xf32>
    %23 = vector.multi_reduction <add>, %22, %cst_7 [1] : vector<18x32xf32> to vector<18xf32>
    %24 = vector.shape_cast %23 : vector<18xf32> to vector<18x1xf32>
    %cst_8 = arith.constant 3.200000e+01 : f32
    %25 = vector.broadcast %cst_8 : f32 to vector<18x1xf32>
    %26 = arith.divf %24, %25 : vector<18x1xf32>
    %27 = arith.mulf %21, %21 : vector<18x1xf32>
    %28 = arith.subf %26, %27 : vector<18x1xf32>
    %29 = vector.broadcast %21 : vector<18x1xf32> to vector<18x32xf32>
    %30 = arith.subf %11, %29 : vector<18x32xf32>
    %cst_9 = arith.constant 9.99999974E-6 : f32
    %31 = vector.broadcast %cst_9 : f32 to vector<18x1xf32>
    %32 = arith.addf %28, %31 : vector<18x1xf32>
    %33 = math.rsqrt %32 : vector<18x1xf32>
    %34 = vector.broadcast %33 : vector<18x1xf32> to vector<18x32xf32>
    %35 = arith.mulf %30, %34 : vector<18x32xf32>
    %36 = vector.broadcast %12 : vector<1x32xf32> to vector<18x32xf32>
    %37 = arith.mulf %35, %36 : vector<18x32xf32>
    %38 = vector.broadcast %13 : vector<1x32xf32> to vector<18x32xf32>
    %39 = arith.addf %37, %38 : vector<18x32xf32>
    %c0_10 = arith.constant 0 : index
    %c0_11 = arith.constant 0 : index
    %c0_12 = arith.constant 0 : index
    %40 = vector.load %arg4[%c0_10, %c0_11, %c0_12] : memref<2x32x128xf32, #tpu.memory_space<vmem>>, vector<1x32x128xf32>
    %41 = vector.shape_cast %40 : vector<1x32x128xf32> to vector<32x128xf32>
    %cst_13 = arith.constant dense<0.000000e+00> : vector<18x128xf32>
    %42 = tpu.matmul %39, %41, %cst_13 {dimension_numbers = #tpu.dot_dimension_numbers<[1], [0], [0], [1], [0, 0, 1, 1], [], []>} : vector<18x32xf32>, vector<32x128xf32>, vector<18x128xf32> -> vector<18x128xf32>
    %43 = vector.extract_strided_slice %42 {offsets = [0, 0], sizes = [9, 8], strides = [1, 1]} : vector<18x128xf32> to vector<9x8xf32>
    %44 = vector.extract_strided_slice %42 {offsets = [0, 8], sizes = [9, 8], strides = [1, 1]} : vector<18x128xf32> to vector<9x8xf32>
    %45 = vector.extract_strided_slice %42 {offsets = [0, 16], sizes = [9, 8], strides = [1, 1]} : vector<18x128xf32> to vector<9x8xf32>
    %46 = vector.extract_strided_slice %42 {offsets = [0, 24], sizes = [9, 8], strides = [1, 1]} : vector<18x128xf32> to vector<9x8xf32>
    %47 = vector.extract_strided_slice %42 {offsets = [9, 0], sizes = [9, 8], strides = [1, 1]} : vector<18x128xf32> to vector<9x8xf32>
    %48 = vector.extract_strided_slice %42 {offsets = [9, 8], sizes = [9, 8], strides = [1, 1]} : vector<18x128xf32> to vector<9x8xf32>
    %49 = vector.extract_strided_slice %42 {offsets = [9, 16], sizes = [9, 8], strides = [1, 1]} : vector<18x128xf32> to vector<9x8xf32>
    %50 = vector.extract_strided_slice %42 {offsets = [9, 24], sizes = [9, 8], strides = [1, 1]} : vector<18x128xf32> to vector<9x8xf32>
    %51 = vector.shape_cast %43 : vector<9x8xf32> to vector<1x9x8xf32>
    %52 = vector.shape_cast %44 : vector<9x8xf32> to vector<1x9x8xf32>
    %53 = vector.shape_cast %45 : vector<9x8xf32> to vector<1x9x8xf32>
    %54 = vector.shape_cast %46 : vector<9x8xf32> to vector<1x9x8xf32>
    %55 = vector.shape_cast %47 : vector<9x8xf32> to vector<1x9x8xf32>
    %56 = vector.shape_cast %48 : vector<9x8xf32> to vector<1x9x8xf32>
    %57 = vector.shape_cast %49 : vector<9x8xf32> to vector<1x9x8xf32>
    %58 = vector.shape_cast %50 : vector<9x8xf32> to vector<1x9x8xf32>
    %59 = tpu.concatenate %51, %52, %53, %54, %55, %56, %57, %58 in 0 : vector<1x9x8xf32>, vector<1x9x8xf32>, vector<1x9x8xf32>, vector<1x9x8xf32>, vector<1x9x8xf32>, vector<1x9x8xf32>, vector<1x9x8xf32>, vector<1x9x8xf32> -> vector<8x9x8xf32>
    %60 = vector.extract_strided_slice %42 {offsets = [0, 32], sizes = [9, 8], strides = [1, 1]} : vector<18x128xf32> to vector<9x8xf32>
    %61 = vector.extract_strided_slice %42 {offsets = [0, 40], sizes = [9, 8], strides = [1, 1]} : vector<18x128xf32> to vector<9x8xf32>
    %62 = vector.extract_strided_slice %42 {offsets = [0, 48], sizes = [9, 8], strides = [1, 1]} : vector<18x128xf32> to vector<9x8xf32>
    %63 = vector.extract_strided_slice %42 {offsets = [0, 56], sizes = [9, 8], strides = [1, 1]} : vector<18x128xf32> to vector<9x8xf32>
    %64 = vector.extract_strided_slice %42 {offsets = [9, 32], sizes = [9, 8], strides = [1, 1]} : vector<18x128xf32> to vector<9x8xf32>
    %65 = vector.extract_strided_slice %42 {offsets = [9, 40], sizes = [9, 8], strides = [1, 1]} : vector<18x128xf32> to vector<9x8xf32>
    %66 = vector.extract_strided_slice %42 {offsets = [9, 48], sizes = [9, 8], strides = [1, 1]} : vector<18x128xf32> to vector<9x8xf32>
    %67 = vector.extract_strided_slice %42 {offsets = [9, 56], sizes = [9, 8], strides = [1, 1]} : vector<18x128xf32> to vector<9x8xf32>
    %68 = vector.shape_cast %60 : vector<9x8xf32> to vector<1x9x8xf32>
    %69 = vector.shape_cast %61 : vector<9x8xf32> to vector<1x9x8xf32>
    %70 = vector.shape_cast %62 : vector<9x8xf32> to vector<1x9x8xf32>
    %71 = vector.shape_cast %63 : vector<9x8xf32> to vector<1x9x8xf32>
    %72 = vector.shape_cast %64 : vector<9x8xf32> to vector<1x9x8xf32>
    %73 = vector.shape_cast %65 : vector<9x8xf32> to vector<1x9x8xf32>
    %74 = vector.shape_cast %66 : vector<9x8xf32> to vector<1x9x8xf32>
    %75 = vector.shape_cast %67 : vector<9x8xf32> to vector<1x9x8xf32>
    %76 = tpu.concatenate %68, %69, %70, %71, %72, %73, %74, %75 in 0 : vector<1x9x8xf32>, vector<1x9x8xf32>, vector<1x9x8xf32>, vector<1x9x8xf32>, vector<1x9x8xf32>, vector<1x9x8xf32>, vector<1x9x8xf32>, vector<1x9x8xf32> -> vector<8x9x8xf32>
    %77 = vector.extract_strided_slice %42 {offsets = [0, 64], sizes = [9, 8], strides = [1, 1]} : vector<18x128xf32> to vector<9x8xf32>
    %78 = vector.extract_strided_slice %42 {offsets = [0, 72], sizes = [9, 8], strides = [1, 1]} : vector<18x128xf32> to vector<9x8xf32>
    %79 = vector.extract_strided_slice %42 {offsets = [0, 80], sizes = [9, 8], strides = [1, 1]} : vector<18x128xf32> to vector<9x8xf32>
    %80 = vector.extract_strided_slice %42 {offsets = [0, 88], sizes = [9, 8], strides = [1, 1]} : vector<18x128xf32> to vector<9x8xf32>
    %81 = vector.extract_strided_slice %42 {offsets = [9, 64], sizes = [9, 8], strides = [1, 1]} : vector<18x128xf32> to vector<9x8xf32>
    %82 = vector.extract_strided_slice %42 {offsets = [9, 72], sizes = [9, 8], strides = [1, 1]} : vector<18x128xf32> to vector<9x8xf32>
    %83 = vector.extract_strided_slice %42 {offsets = [9, 80], sizes = [9, 8], strides = [1, 1]} : vector<18x128xf32> to vector<9x8xf32>
    %84 = vector.extract_strided_slice %42 {offsets = [9, 88], sizes = [9, 8], strides = [1, 1]} : vector<18x128xf32> to vector<9x8xf32>
    %85 = vector.shape_cast %77 : vector<9x8xf32> to vector<1x9x8xf32>
    %86 = vector.shape_cast %78 : vector<9x8xf32> to vector<1x9x8xf32>
    %87 = vector.shape_cast %79 : vector<9x8xf32> to vector<1x9x8xf32>
    %88 = vector.shape_cast %80 : vector<9x8xf32> to vector<1x9x8xf32>
    %89 = vector.shape_cast %81 : vector<9x8xf32> to vector<1x9x8xf32>
    %90 = vector.shape_cast %82 : vector<9x8xf32> to vector<1x9x8xf32>
    %91 = vector.shape_cast %83 : vector<9x8xf32> to vector<1x9x8xf32>
    %92 = vector.shape_cast %84 : vector<9x8xf32> to vector<1x9x8xf32>
    %93 = tpu.concatenate %85, %86, %87, %88, %89, %90, %91, %92 in 0 : vector<1x9x8xf32>, vector<1x9x8xf32>, vector<1x9x8xf32>, vector<1x9x8xf32>, vector<1x9x8xf32>, vector<1x9x8xf32>, vector<1x9x8xf32>, vector<1x9x8xf32> -> vector<8x9x8xf32>
    "tpu.trace_start"() <{level = 10 : i32, message = "nqd,nkd->nqk"}> : () -> ()
    %cst_14 = arith.constant dense<0.000000e+00> : vector<8x9x9xf32>
    %94 = tpu.matmul %59, %76, %cst_14 {dimension_numbers = #tpu.dot_dimension_numbers<[2], [2], [1], [1], [0, 0, 0, 1, 1, 1], [0], [0]>} : vector<8x9x8xf32>, vector<8x9x8xf32>, vector<8x9x9xf32> -> vector<8x9x9xf32>
    "tpu.trace_stop"() : () -> ()
    %cst_15 = arith.constant dense<0xFF800000> : vector<8x9xf32>
    %95 = vector.multi_reduction <maximumf>, %94, %cst_15 [2] : vector<8x9x9xf32> to vector<8x9xf32>
    %96 = vector.shape_cast %95 : vector<8x9xf32> to vector<8x9x1xf32>
    %97 = vector.broadcast %96 : vector<8x9x1xf32> to vector<8x9x9xf32>
    %98 = arith.subf %94, %97 : vector<8x9x9xf32>
    %99 = math.exp %98 : vector<8x9x9xf32>
    %cst_16 = arith.constant dense<0.000000e+00> : vector<8x9xf32>
    %100 = vector.multi_reduction <add>, %99, %cst_16 [2] : vector<8x9x9xf32> to vector<8x9xf32>
    %101 = vector.shape_cast %100 : vector<8x9xf32> to vector<8x9x1xf32>
    %102 = tpu.reciprocal %101 {approx = true} : vector<8x9x1xf32> -> vector<8x9x1xf32>
    %103 = vector.broadcast %102 : vector<8x9x1xf32> to vector<8x9x9xf32>
    %104 = arith.mulf %99, %103 : vector<8x9x9xf32>
    "tpu.trace_start"() <{level = 10 : i32, message = "nqk,nkd->nqd"}> : () -> ()
    %cst_17 = arith.constant dense<0.000000e+00> : vector<8x9x8xf32>
    %105 = tpu.matmul %104, %93, %cst_17 {dimension_numbers = #tpu.dot_dimension_numbers<[2], [1], [1], [2], [0, 0, 0, 1, 1, 2], [0], [0]>} : vector<8x9x9xf32>, vector<8x9x8xf32>, vector<8x9x8xf32> -> vector<8x9x8xf32>
    "tpu.trace_stop"() : () -> ()
    %106 = vector.extract_strided_slice %105 {offsets = [0, 0, 0], sizes = [1, 9, 8], strides = [1, 1, 1]} : vector<8x9x8xf32> to vector<1x9x8xf32>
    %107 = vector.shape_cast %106 : vector<1x9x8xf32> to vector<9x8xf32>
    %108 = vector.extract_strided_slice %105 {offsets = [1, 0, 0], sizes = [1, 9, 8], strides = [1, 1, 1]} : vector<8x9x8xf32> to vector<1x9x8xf32>
    %109 = vector.shape_cast %108 : vector<1x9x8xf32> to vector<9x8xf32>
    %110 = vector.extract_strided_slice %105 {offsets = [2, 0, 0], sizes = [1, 9, 8], strides = [1, 1, 1]} : vector<8x9x8xf32> to vector<1x9x8xf32>
    %111 = vector.shape_cast %110 : vector<1x9x8xf32> to vector<9x8xf32>
    %112 = vector.extract_strided_slice %105 {offsets = [3, 0, 0], sizes = [1, 9, 8], strides = [1, 1, 1]} : vector<8x9x8xf32> to vector<1x9x8xf32>
    %113 = vector.shape_cast %112 : vector<1x9x8xf32> to vector<9x8xf32>
    %114 = tpu.concatenate %107, %109, %111, %113 in 1 : vector<9x8xf32>, vector<9x8xf32>, vector<9x8xf32>, vector<9x8xf32> -> vector<9x32xf32>
    %115 = vector.extract_strided_slice %105 {offsets = [4, 0, 0], sizes = [1, 9, 8], strides = [1, 1, 1]} : vector<8x9x8xf32> to vector<1x9x8xf32>
    %116 = vector.shape_cast %115 : vector<1x9x8xf32> to vector<9x8xf32>
    %117 = vector.extract_strided_slice %105 {offsets = [5, 0, 0], sizes = [1, 9, 8], strides = [1, 1, 1]} : vector<8x9x8xf32> to vector<1x9x8xf32>
    %118 = vector.shape_cast %117 : vector<1x9x8xf32> to vector<9x8xf32>
    %119 = vector.extract_strided_slice %105 {offsets = [6, 0, 0], sizes = [1, 9, 8], strides = [1, 1, 1]} : vector<8x9x8xf32> to vector<1x9x8xf32>
    %120 = vector.shape_cast %119 : vector<1x9x8xf32> to vector<9x8xf32>
    %121 = vector.extract_strided_slice %105 {offsets = [7, 0, 0], sizes = [1, 9, 8], strides = [1, 1, 1]} : vector<8x9x8xf32> to vector<1x9x8xf32>
    %122 = vector.shape_cast %121 : vector<1x9x8xf32> to vector<9x8xf32>
    %123 = tpu.concatenate %116, %118, %120, %122 in 1 : vector<9x8xf32>, vector<9x8xf32>, vector<9x8xf32>, vector<9x8xf32> -> vector<9x32xf32>
    %124 = tpu.concatenate %114, %123 in 0 : vector<9x32xf32>, vector<9x32xf32> -> vector<18x32xf32>
    %125 = vector.extract_strided_slice %41 {offsets = [0, 96], sizes = [32, 32], strides = [1, 1]} : vector<32x128xf32> to vector<32x32xf32>
    %cst_18 = arith.constant dense<0.000000e+00> : vector<18x32xf32>
    %126 = tpu.matmul %124, %125, %cst_18 {dimension_numbers = #tpu.dot_dimension_numbers<[1], [0], [0], [1], [0, 0, 1, 1], [], []>} : vector<18x32xf32>, vector<32x32xf32>, vector<18x32xf32> -> vector<18x32xf32>
    %127 = arith.addf %11, %126 : vector<18x32xf32>
    %128 = vector.broadcast %16 : vector<1x32xf32> to vector<18x32xf32>
    %129 = arith.addf %127, %128 : vector<18x32xf32>
    %cst_19 = arith.constant dense<0.000000e+00> : vector<18xf32>
    %130 = vector.multi_reduction <add>, %129, %cst_19 [1] : vector<18x32xf32> to vector<18xf32>
    %131 = vector.shape_cast %130 : vector<18xf32> to vector<18x1xf32>
    %cst_20 = arith.constant 3.200000e+01 : f32
    %132 = vector.broadcast %cst_20 : f32 to vector<18x1xf32>
    %133 = arith.divf %131, %132 : vector<18x1xf32>
    %134 = arith.mulf %129, %129 : vector<18x32xf32>
    %cst_21 = arith.constant dense<0.000000e+00> : vector<18xf32>
    %135 = vector.multi_reduction <add>, %134, %cst_21 [1] : vector<18x32xf32> to vector<18xf32>
    %136 = vector.shape_cast %135 : vector<18xf32> to vector<18x1xf32>
    %cst_22 = arith.constant 3.200000e+01 : f32
    %137 = vector.broadcast %cst_22 : f32 to vector<18x1xf32>
    %138 = arith.divf %136, %137 : vector<18x1xf32>
    %139 = arith.mulf %133, %133 : vector<18x1xf32>
    %140 = arith.subf %138, %139 : vector<18x1xf32>
    %141 = vector.broadcast %133 : vector<18x1xf32> to vector<18x32xf32>
    %142 = arith.subf %129, %141 : vector<18x32xf32>
    %cst_23 = arith.constant 9.99999974E-6 : f32
    %143 = vector.broadcast %cst_23 : f32 to vector<18x1xf32>
    %144 = arith.addf %140, %143 : vector<18x1xf32>
    %145 = math.rsqrt %144 : vector<18x1xf32>
    %146 = vector.broadcast %145 : vector<18x1xf32> to vector<18x32xf32>
    %147 = arith.mulf %142, %146 : vector<18x32xf32>
    %148 = vector.broadcast %14 : vector<1x32xf32> to vector<18x32xf32>
    %149 = arith.mulf %147, %148 : vector<18x32xf32>
    %150 = vector.broadcast %15 : vector<1x32xf32> to vector<18x32xf32>
    %151 = arith.addf %149, %150 : vector<18x32xf32>
    %c0_24 = arith.constant 0 : index
    %c0_25 = arith.constant 0 : index
    %c0_26 = arith.constant 0 : index
    %152 = vector.load %arg5[%c0_24, %c0_25, %c0_26] : memref<2x33x128xf32, #tpu.memory_space<vmem>>, vector<1x33x128xf32>
    %153 = vector.shape_cast %152 : vector<1x33x128xf32> to vector<33x128xf32>
    %154 = vector.extract_strided_slice %153 {offsets = [0, 0], sizes = [32, 128], strides = [1, 1]} : vector<33x128xf32> to vector<32x128xf32>
    %cst_27 = arith.constant dense<0.000000e+00> : vector<18x128xf32>
    %155 = tpu.matmul %151, %154, %cst_27 {dimension_numbers = #tpu.dot_dimension_numbers<[1], [0], [0], [1], [0, 0, 1, 1], [], []>} : vector<18x32xf32>, vector<32x128xf32>, vector<18x128xf32> -> vector<18x128xf32>
    %156 = vector.extract_strided_slice %153 {offsets = [32, 0], sizes = [1, 128], strides = [1, 1]} : vector<33x128xf32> to vector<1x128xf32>
    %157 = vector.broadcast %156 : vector<1x128xf32> to vector<18x128xf32>
    %158 = arith.addf %155, %157 : vector<18x128xf32>
    %cst_28 = arith.constant 5.000000e-01 : f32
    %159 = vector.broadcast %cst_28 : f32 to vector<18x128xf32>
    %160 = arith.mulf %159, %158 : vector<18x128xf32>
    %cst_29 = arith.constant 4.471500e-02 : f32
    %161 = vector.broadcast %cst_29 : f32 to vector<18x128xf32>
    %162 = arith.mulf %161, %158 : vector<18x128xf32>
    %163 = arith.mulf %162, %158 : vector<18x128xf32>
    %164 = arith.mulf %163, %158 : vector<18x128xf32>
    %165 = arith.addf %158, %164 : vector<18x128xf32>
    %cst_30 = arith.constant 0.797884583 : f32
    %166 = vector.broadcast %cst_30 : f32 to vector<18x128xf32>
    %167 = arith.mulf %166, %165 : vector<18x128xf32>
    %168 = math.tanh %167 : vector<18x128xf32>
    %cst_31 = arith.constant 1.000000e+00 : f32
    %169 = vector.broadcast %cst_31 : f32 to vector<18x128xf32>
    %170 = arith.addf %169, %168 : vector<18x128xf32>
    %171 = arith.mulf %160, %170 : vector<18x128xf32>
    %c0_32 = arith.constant 0 : index
    %c0_33 = arith.constant 0 : index
    %c0_34 = arith.constant 0 : index
    %172 = vector.load %arg6[%c0_32, %c0_33, %c0_34] : memref<2x128x32xf32, #tpu.memory_space<vmem>>, vector<1x128x32xf32>
    %173 = vector.shape_cast %172 : vector<1x128x32xf32> to vector<128x32xf32>
    %cst_35 = arith.constant dense<0.000000e+00> : vector<18x32xf32>
    %174 = tpu.matmul %171, %173, %cst_35 {dimension_numbers = #tpu.dot_dimension_numbers<[1], [0], [0], [1], [0, 0, 1, 1], [], []>} : vector<18x128xf32>, vector<128x32xf32>, vector<18x32xf32> -> vector<18x32xf32>
    %175 = arith.addf %129, %174 : vector<18x32xf32>
    %176 = vector.broadcast %17 : vector<1x32xf32> to vector<18x32xf32>
    %177 = arith.addf %175, %176 : vector<18x32xf32>
    %178 = vector.extract_strided_slice %0 {offsets = [15, 0], sizes = [1, 32], strides = [1, 1]} : vector<21x32xf32> to vector<1x32xf32>
    %179 = vector.extract_strided_slice %0 {offsets = [16, 0], sizes = [1, 32], strides = [1, 1]} : vector<21x32xf32> to vector<1x32xf32>
    %180 = vector.extract_strided_slice %0 {offsets = [17, 0], sizes = [1, 32], strides = [1, 1]} : vector<21x32xf32> to vector<1x32xf32>
    %181 = vector.extract_strided_slice %0 {offsets = [18, 0], sizes = [1, 32], strides = [1, 1]} : vector<21x32xf32> to vector<1x32xf32>
    %182 = vector.extract_strided_slice %0 {offsets = [19, 0], sizes = [1, 32], strides = [1, 1]} : vector<21x32xf32> to vector<1x32xf32>
    %183 = vector.extract_strided_slice %0 {offsets = [20, 0], sizes = [1, 32], strides = [1, 1]} : vector<21x32xf32> to vector<1x32xf32>
    %cst_36 = arith.constant dense<0.000000e+00> : vector<18xf32>
    %184 = vector.multi_reduction <add>, %177, %cst_36 [1] : vector<18x32xf32> to vector<18xf32>
    %185 = vector.shape_cast %184 : vector<18xf32> to vector<18x1xf32>
    %cst_37 = arith.constant 3.200000e+01 : f32
    %186 = vector.broadcast %cst_37 : f32 to vector<18x1xf32>
    %187 = arith.divf %185, %186 : vector<18x1xf32>
    %188 = arith.mulf %177, %177 : vector<18x32xf32>
    %cst_38 = arith.constant dense<0.000000e+00> : vector<18xf32>
    %189 = vector.multi_reduction <add>, %188, %cst_38 [1] : vector<18x32xf32> to vector<18xf32>
    %190 = vector.shape_cast %189 : vector<18xf32> to vector<18x1xf32>
    %cst_39 = arith.constant 3.200000e+01 : f32
    %191 = vector.broadcast %cst_39 : f32 to vector<18x1xf32>
    %192 = arith.divf %190, %191 : vector<18x1xf32>
    %193 = arith.mulf %187, %187 : vector<18x1xf32>
    %194 = arith.subf %192, %193 : vector<18x1xf32>
    %195 = vector.broadcast %187 : vector<18x1xf32> to vector<18x32xf32>
    %196 = arith.subf %177, %195 : vector<18x32xf32>
    %cst_40 = arith.constant 9.99999974E-6 : f32
    %197 = vector.broadcast %cst_40 : f32 to vector<18x1xf32>
    %198 = arith.addf %194, %197 : vector<18x1xf32>
    %199 = math.rsqrt %198 : vector<18x1xf32>
    %200 = vector.broadcast %199 : vector<18x1xf32> to vector<18x32xf32>
    %201 = arith.mulf %196, %200 : vector<18x32xf32>
    %202 = vector.broadcast %178 : vector<1x32xf32> to vector<18x32xf32>
    %203 = arith.mulf %201, %202 : vector<18x32xf32>
    %204 = vector.broadcast %179 : vector<1x32xf32> to vector<18x32xf32>
    %205 = arith.addf %203, %204 : vector<18x32xf32>
    %c1 = arith.constant 1 : index
    %c0_41 = arith.constant 0 : index
    %c0_42 = arith.constant 0 : index
    %206 = vector.load %arg4[%c1, %c0_41, %c0_42] : memref<2x32x128xf32, #tpu.memory_space<vmem>>, vector<1x32x128xf32>
    %207 = vector.shape_cast %206 : vector<1x32x128xf32> to vector<32x128xf32>
    %cst_43 = arith.constant dense<0.000000e+00> : vector<18x128xf32>
    %208 = tpu.matmul %205, %207, %cst_43 {dimension_numbers = #tpu.dot_dimension_numbers<[1], [0], [0], [1], [0, 0, 1, 1], [], []>} : vector<18x32xf32>, vector<32x128xf32>, vector<18x128xf32> -> vector<18x128xf32>
    %209 = vector.extract_strided_slice %208 {offsets = [0, 0], sizes = [9, 8], strides = [1, 1]} : vector<18x128xf32> to vector<9x8xf32>
    %210 = vector.extract_strided_slice %208 {offsets = [0, 8], sizes = [9, 8], strides = [1, 1]} : vector<18x128xf32> to vector<9x8xf32>
    %211 = vector.extract_strided_slice %208 {offsets = [0, 16], sizes = [9, 8], strides = [1, 1]} : vector<18x128xf32> to vector<9x8xf32>
    %212 = vector.extract_strided_slice %208 {offsets = [0, 24], sizes = [9, 8], strides = [1, 1]} : vector<18x128xf32> to vector<9x8xf32>
    %213 = vector.extract_strided_slice %208 {offsets = [9, 0], sizes = [9, 8], strides = [1, 1]} : vector<18x128xf32> to vector<9x8xf32>
    %214 = vector.extract_strided_slice %208 {offsets = [9, 8], sizes = [9, 8], strides = [1, 1]} : vector<18x128xf32> to vector<9x8xf32>
    %215 = vector.extract_strided_slice %208 {offsets = [9, 16], sizes = [9, 8], strides = [1, 1]} : vector<18x128xf32> to vector<9x8xf32>
    %216 = vector.extract_strided_slice %208 {offsets = [9, 24], sizes = [9, 8], strides = [1, 1]} : vector<18x128xf32> to vector<9x8xf32>
    %217 = vector.shape_cast %209 : vector<9x8xf32> to vector<1x9x8xf32>
    %218 = vector.shape_cast %210 : vector<9x8xf32> to vector<1x9x8xf32>
    %219 = vector.shape_cast %211 : vector<9x8xf32> to vector<1x9x8xf32>
    %220 = vector.shape_cast %212 : vector<9x8xf32> to vector<1x9x8xf32>
    %221 = vector.shape_cast %213 : vector<9x8xf32> to vector<1x9x8xf32>
    %222 = vector.shape_cast %214 : vector<9x8xf32> to vector<1x9x8xf32>
    %223 = vector.shape_cast %215 : vector<9x8xf32> to vector<1x9x8xf32>
    %224 = vector.shape_cast %216 : vector<9x8xf32> to vector<1x9x8xf32>
    %225 = tpu.concatenate %217, %218, %219, %220, %221, %222, %223, %224 in 0 : vector<1x9x8xf32>, vector<1x9x8xf32>, vector<1x9x8xf32>, vector<1x9x8xf32>, vector<1x9x8xf32>, vector<1x9x8xf32>, vector<1x9x8xf32>, vector<1x9x8xf32> -> vector<8x9x8xf32>
    %226 = vector.extract_strided_slice %208 {offsets = [0, 32], sizes = [9, 8], strides = [1, 1]} : vector<18x128xf32> to vector<9x8xf32>
    %227 = vector.extract_strided_slice %208 {offsets = [0, 40], sizes = [9, 8], strides = [1, 1]} : vector<18x128xf32> to vector<9x8xf32>
    %228 = vector.extract_strided_slice %208 {offsets = [0, 48], sizes = [9, 8], strides = [1, 1]} : vector<18x128xf32> to vector<9x8xf32>
    %229 = vector.extract_strided_slice %208 {offsets = [0, 56], sizes = [9, 8], strides = [1, 1]} : vector<18x128xf32> to vector<9x8xf32>
    %230 = vector.extract_strided_slice %208 {offsets = [9, 32], sizes = [9, 8], strides = [1, 1]} : vector<18x128xf32> to vector<9x8xf32>
    %231 = vector.extract_strided_slice %208 {offsets = [9, 40], sizes = [9, 8], strides = [1, 1]} : vector<18x128xf32> to vector<9x8xf32>
    %232 = vector.extract_strided_slice %208 {offsets = [9, 48], sizes = [9, 8], strides = [1, 1]} : vector<18x128xf32> to vector<9x8xf32>
    %233 = vector.extract_strided_slice %208 {offsets = [9, 56], sizes = [9, 8], strides = [1, 1]} : vector<18x128xf32> to vector<9x8xf32>
    %234 = vector.shape_cast %226 : vector<9x8xf32> to vector<1x9x8xf32>
    %235 = vector.shape_cast %227 : vector<9x8xf32> to vector<1x9x8xf32>
    %236 = vector.shape_cast %228 : vector<9x8xf32> to vector<1x9x8xf32>
    %237 = vector.shape_cast %229 : vector<9x8xf32> to vector<1x9x8xf32>
    %238 = vector.shape_cast %230 : vector<9x8xf32> to vector<1x9x8xf32>
    %239 = vector.shape_cast %231 : vector<9x8xf32> to vector<1x9x8xf32>
    %240 = vector.shape_cast %232 : vector<9x8xf32> to vector<1x9x8xf32>
    %241 = vector.shape_cast %233 : vector<9x8xf32> to vector<1x9x8xf32>
    %242 = tpu.concatenate %234, %235, %236, %237, %238, %239, %240, %241 in 0 : vector<1x9x8xf32>, vector<1x9x8xf32>, vector<1x9x8xf32>, vector<1x9x8xf32>, vector<1x9x8xf32>, vector<1x9x8xf32>, vector<1x9x8xf32>, vector<1x9x8xf32> -> vector<8x9x8xf32>
    %243 = vector.extract_strided_slice %208 {offsets = [0, 64], sizes = [9, 8], strides = [1, 1]} : vector<18x128xf32> to vector<9x8xf32>
    %244 = vector.extract_strided_slice %208 {offsets = [0, 72], sizes = [9, 8], strides = [1, 1]} : vector<18x128xf32> to vector<9x8xf32>
    %245 = vector.extract_strided_slice %208 {offsets = [0, 80], sizes = [9, 8], strides = [1, 1]} : vector<18x128xf32> to vector<9x8xf32>
    %246 = vector.extract_strided_slice %208 {offsets = [0, 88], sizes = [9, 8], strides = [1, 1]} : vector<18x128xf32> to vector<9x8xf32>
    %247 = vector.extract_strided_slice %208 {offsets = [9, 64], sizes = [9, 8], strides = [1, 1]} : vector<18x128xf32> to vector<9x8xf32>
    %248 = vector.extract_strided_slice %208 {offsets = [9, 72], sizes = [9, 8], strides = [1, 1]} : vector<18x128xf32> to vector<9x8xf32>
    %249 = vector.extract_strided_slice %208 {offsets = [9, 80], sizes = [9, 8], strides = [1, 1]} : vector<18x128xf32> to vector<9x8xf32>
    %250 = vector.extract_strided_slice %208 {offsets = [9, 88], sizes = [9, 8], strides = [1, 1]} : vector<18x128xf32> to vector<9x8xf32>
    %251 = vector.shape_cast %243 : vector<9x8xf32> to vector<1x9x8xf32>
    %252 = vector.shape_cast %244 : vector<9x8xf32> to vector<1x9x8xf32>
    %253 = vector.shape_cast %245 : vector<9x8xf32> to vector<1x9x8xf32>
    %254 = vector.shape_cast %246 : vector<9x8xf32> to vector<1x9x8xf32>
    %255 = vector.shape_cast %247 : vector<9x8xf32> to vector<1x9x8xf32>
    %256 = vector.shape_cast %248 : vector<9x8xf32> to vector<1x9x8xf32>
    %257 = vector.shape_cast %249 : vector<9x8xf32> to vector<1x9x8xf32>
    %258 = vector.shape_cast %250 : vector<9x8xf32> to vector<1x9x8xf32>
    %259 = tpu.concatenate %251, %252, %253, %254, %255, %256, %257, %258 in 0 : vector<1x9x8xf32>, vector<1x9x8xf32>, vector<1x9x8xf32>, vector<1x9x8xf32>, vector<1x9x8xf32>, vector<1x9x8xf32>, vector<1x9x8xf32>, vector<1x9x8xf32> -> vector<8x9x8xf32>
    "tpu.trace_start"() <{level = 10 : i32, message = "nqd,nkd->nqk"}> : () -> ()
    %cst_44 = arith.constant dense<0.000000e+00> : vector<8x9x9xf32>
    %260 = tpu.matmul %225, %242, %cst_44 {dimension_numbers = #tpu.dot_dimension_numbers<[2], [2], [1], [1], [0, 0, 0, 1, 1, 1], [0], [0]>} : vector<8x9x8xf32>, vector<8x9x8xf32>, vector<8x9x9xf32> -> vector<8x9x9xf32>
    "tpu.trace_stop"() : () -> ()
    %cst_45 = arith.constant dense<0xFF800000> : vector<8x9xf32>
    %261 = vector.multi_reduction <maximumf>, %260, %cst_45 [2] : vector<8x9x9xf32> to vector<8x9xf32>
    %262 = vector.shape_cast %261 : vector<8x9xf32> to vector<8x9x1xf32>
    %263 = vector.broadcast %262 : vector<8x9x1xf32> to vector<8x9x9xf32>
    %264 = arith.subf %260, %263 : vector<8x9x9xf32>
    %265 = math.exp %264 : vector<8x9x9xf32>
    %cst_46 = arith.constant dense<0.000000e+00> : vector<8x9xf32>
    %266 = vector.multi_reduction <add>, %265, %cst_46 [2] : vector<8x9x9xf32> to vector<8x9xf32>
    %267 = vector.shape_cast %266 : vector<8x9xf32> to vector<8x9x1xf32>
    %268 = tpu.reciprocal %267 {approx = true} : vector<8x9x1xf32> -> vector<8x9x1xf32>
    %269 = vector.broadcast %268 : vector<8x9x1xf32> to vector<8x9x9xf32>
    %270 = arith.mulf %265, %269 : vector<8x9x9xf32>
    "tpu.trace_start"() <{level = 10 : i32, message = "nqk,nkd->nqd"}> : () -> ()
    %cst_47 = arith.constant dense<0.000000e+00> : vector<8x9x8xf32>
    %271 = tpu.matmul %270, %259, %cst_47 {dimension_numbers = #tpu.dot_dimension_numbers<[2], [1], [1], [2], [0, 0, 0, 1, 1, 2], [0], [0]>} : vector<8x9x9xf32>, vector<8x9x8xf32>, vector<8x9x8xf32> -> vector<8x9x8xf32>
    "tpu.trace_stop"() : () -> ()
    %272 = vector.extract_strided_slice %271 {offsets = [0, 0, 0], sizes = [1, 9, 8], strides = [1, 1, 1]} : vector<8x9x8xf32> to vector<1x9x8xf32>
    %273 = vector.shape_cast %272 : vector<1x9x8xf32> to vector<9x8xf32>
    %274 = vector.extract_strided_slice %271 {offsets = [1, 0, 0], sizes = [1, 9, 8], strides = [1, 1, 1]} : vector<8x9x8xf32> to vector<1x9x8xf32>
    %275 = vector.shape_cast %274 : vector<1x9x8xf32> to vector<9x8xf32>
    %276 = vector.extract_strided_slice %271 {offsets = [2, 0, 0], sizes = [1, 9, 8], strides = [1, 1, 1]} : vector<8x9x8xf32> to vector<1x9x8xf32>
    %277 = vector.shape_cast %276 : vector<1x9x8xf32> to vector<9x8xf32>
    %278 = vector.extract_strided_slice %271 {offsets = [3, 0, 0], sizes = [1, 9, 8], strides = [1, 1, 1]} : vector<8x9x8xf32> to vector<1x9x8xf32>
    %279 = vector.shape_cast %278 : vector<1x9x8xf32> to vector<9x8xf32>
    %280 = tpu.concatenate %273, %275, %277, %279 in 1 : vector<9x8xf32>, vector<9x8xf32>, vector<9x8xf32>, vector<9x8xf32> -> vector<9x32xf32>
    %281 = vector.extract_strided_slice %271 {offsets = [4, 0, 0], sizes = [1, 9, 8], strides = [1, 1, 1]} : vector<8x9x8xf32> to vector<1x9x8xf32>
    %282 = vector.shape_cast %281 : vector<1x9x8xf32> to vector<9x8xf32>
    %283 = vector.extract_strided_slice %271 {offsets = [5, 0, 0], sizes = [1, 9, 8], strides = [1, 1, 1]} : vector<8x9x8xf32> to vector<1x9x8xf32>
    %284 = vector.shape_cast %283 : vector<1x9x8xf32> to vector<9x8xf32>
    %285 = vector.extract_strided_slice %271 {offsets = [6, 0, 0], sizes = [1, 9, 8], strides = [1, 1, 1]} : vector<8x9x8xf32> to vector<1x9x8xf32>
    %286 = vector.shape_cast %285 : vector<1x9x8xf32> to vector<9x8xf32>
    %287 = vector.extract_strided_slice %271 {offsets = [7, 0, 0], sizes = [1, 9, 8], strides = [1, 1, 1]} : vector<8x9x8xf32> to vector<1x9x8xf32>
    %288 = vector.shape_cast %287 : vector<1x9x8xf32> to vector<9x8xf32>
    %289 = tpu.concatenate %282, %284, %286, %288 in 1 : vector<9x8xf32>, vector<9x8xf32>, vector<9x8xf32>, vector<9x8xf32> -> vector<9x32xf32>
    %290 = tpu.concatenate %280, %289 in 0 : vector<9x32xf32>, vector<9x32xf32> -> vector<18x32xf32>
    %291 = vector.extract_strided_slice %207 {offsets = [0, 96], sizes = [32, 32], strides = [1, 1]} : vector<32x128xf32> to vector<32x32xf32>
    %cst_48 = arith.constant dense<0.000000e+00> : vector<18x32xf32>
    %292 = tpu.matmul %290, %291, %cst_48 {dimension_numbers = #tpu.dot_dimension_numbers<[1], [0], [0], [1], [0, 0, 1, 1], [], []>} : vector<18x32xf32>, vector<32x32xf32>, vector<18x32xf32> -> vector<18x32xf32>
    %293 = arith.addf %177, %292 : vector<18x32xf32>
    %294 = vector.broadcast %182 : vector<1x32xf32> to vector<18x32xf32>
    %295 = arith.addf %293, %294 : vector<18x32xf32>
    %cst_49 = arith.constant dense<0.000000e+00> : vector<18xf32>
    %296 = vector.multi_reduction <add>, %295, %cst_49 [1] : vector<18x32xf32> to vector<18xf32>
    %297 = vector.shape_cast %296 : vector<18xf32> to vector<18x1xf32>
    %cst_50 = arith.constant 3.200000e+01 : f32
    %298 = vector.broadcast %cst_50 : f32 to vector<18x1xf32>
    %299 = arith.divf %297, %298 : vector<18x1xf32>
    %300 = arith.mulf %295, %295 : vector<18x32xf32>
    %cst_51 = arith.constant dense<0.000000e+00> : vector<18xf32>
    %301 = vector.multi_reduction <add>, %300, %cst_51 [1] : vector<18x32xf32> to vector<18xf32>
    %302 = vector.shape_cast %301 : vector<18xf32> to vector<18x1xf32>
    %cst_52 = arith.constant 3.200000e+01 : f32
    %303 = vector.broadcast %cst_52 : f32 to vector<18x1xf32>
    %304 = arith.divf %302, %303 : vector<18x1xf32>
    %305 = arith.mulf %299, %299 : vector<18x1xf32>
    %306 = arith.subf %304, %305 : vector<18x1xf32>
    %307 = vector.broadcast %299 : vector<18x1xf32> to vector<18x32xf32>
    %308 = arith.subf %295, %307 : vector<18x32xf32>
    %cst_53 = arith.constant 9.99999974E-6 : f32
    %309 = vector.broadcast %cst_53 : f32 to vector<18x1xf32>
    %310 = arith.addf %306, %309 : vector<18x1xf32>
    %311 = math.rsqrt %310 : vector<18x1xf32>
    %312 = vector.broadcast %311 : vector<18x1xf32> to vector<18x32xf32>
    %313 = arith.mulf %308, %312 : vector<18x32xf32>
    %314 = vector.broadcast %180 : vector<1x32xf32> to vector<18x32xf32>
    %315 = arith.mulf %313, %314 : vector<18x32xf32>
    %316 = vector.broadcast %181 : vector<1x32xf32> to vector<18x32xf32>
    %317 = arith.addf %315, %316 : vector<18x32xf32>
    %c1_54 = arith.constant 1 : index
    %c0_55 = arith.constant 0 : index
    %c0_56 = arith.constant 0 : index
    %318 = vector.load %arg5[%c1_54, %c0_55, %c0_56] : memref<2x33x128xf32, #tpu.memory_space<vmem>>, vector<1x33x128xf32>
    %319 = vector.shape_cast %318 : vector<1x33x128xf32> to vector<33x128xf32>
    %320 = vector.extract_strided_slice %319 {offsets = [0, 0], sizes = [32, 128], strides = [1, 1]} : vector<33x128xf32> to vector<32x128xf32>
    %cst_57 = arith.constant dense<0.000000e+00> : vector<18x128xf32>
    %321 = tpu.matmul %317, %320, %cst_57 {dimension_numbers = #tpu.dot_dimension_numbers<[1], [0], [0], [1], [0, 0, 1, 1], [], []>} : vector<18x32xf32>, vector<32x128xf32>, vector<18x128xf32> -> vector<18x128xf32>
    %322 = vector.extract_strided_slice %319 {offsets = [32, 0], sizes = [1, 128], strides = [1, 1]} : vector<33x128xf32> to vector<1x128xf32>
    %323 = vector.broadcast %322 : vector<1x128xf32> to vector<18x128xf32>
    %324 = arith.addf %321, %323 : vector<18x128xf32>
    %cst_58 = arith.constant 5.000000e-01 : f32
    %325 = vector.broadcast %cst_58 : f32 to vector<18x128xf32>
    %326 = arith.mulf %325, %324 : vector<18x128xf32>
    %cst_59 = arith.constant 4.471500e-02 : f32
    %327 = vector.broadcast %cst_59 : f32 to vector<18x128xf32>
    %328 = arith.mulf %327, %324 : vector<18x128xf32>
    %329 = arith.mulf %328, %324 : vector<18x128xf32>
    %330 = arith.mulf %329, %324 : vector<18x128xf32>
    %331 = arith.addf %324, %330 : vector<18x128xf32>
    %cst_60 = arith.constant 0.797884583 : f32
    %332 = vector.broadcast %cst_60 : f32 to vector<18x128xf32>
    %333 = arith.mulf %332, %331 : vector<18x128xf32>
    %334 = math.tanh %333 : vector<18x128xf32>
    %cst_61 = arith.constant 1.000000e+00 : f32
    %335 = vector.broadcast %cst_61 : f32 to vector<18x128xf32>
    %336 = arith.addf %335, %334 : vector<18x128xf32>
    %337 = arith.mulf %326, %336 : vector<18x128xf32>
    %c1_62 = arith.constant 1 : index
    %c0_63 = arith.constant 0 : index
    %c0_64 = arith.constant 0 : index
    %338 = vector.load %arg6[%c1_62, %c0_63, %c0_64] : memref<2x128x32xf32, #tpu.memory_space<vmem>>, vector<1x128x32xf32>
    %339 = vector.shape_cast %338 : vector<1x128x32xf32> to vector<128x32xf32>
    %cst_65 = arith.constant dense<0.000000e+00> : vector<18x32xf32>
    %340 = tpu.matmul %337, %339, %cst_65 {dimension_numbers = #tpu.dot_dimension_numbers<[1], [0], [0], [1], [0, 0, 1, 1], [], []>} : vector<18x128xf32>, vector<128x32xf32>, vector<18x32xf32> -> vector<18x32xf32>
    %341 = arith.addf %295, %340 : vector<18x32xf32>
    %342 = vector.broadcast %183 : vector<1x32xf32> to vector<18x32xf32>
    %343 = arith.addf %341, %342 : vector<18x32xf32>
    %c0_66 = arith.constant 0 : index
    %c0_67 = arith.constant 0 : index
    %344 = vector.load %arg7[%c0_66, %c0_67] : memref<33x128xf32, #tpu.memory_space<vmem>>, vector<33x128xf32>
    %345 = vector.extract_strided_slice %344 {offsets = [0, 0], sizes = [32, 128], strides = [1, 1]} : vector<33x128xf32> to vector<32x128xf32>
    %cst_68 = arith.constant dense<0.000000e+00> : vector<18x128xf32>
    %346 = tpu.matmul %343, %345, %cst_68 {dimension_numbers = #tpu.dot_dimension_numbers<[1], [0], [0], [1], [0, 0, 1, 1], [], []>} : vector<18x32xf32>, vector<32x128xf32>, vector<18x128xf32> -> vector<18x128xf32>
    %347 = vector.extract_strided_slice %344 {offsets = [32, 0], sizes = [1, 128], strides = [1, 1]} : vector<33x128xf32> to vector<1x128xf32>
    %348 = vector.broadcast %347 : vector<1x128xf32> to vector<18x128xf32>
    %349 = arith.addf %346, %348 : vector<18x128xf32>
    %c0_69 = arith.constant 0 : index
    %c0_70 = arith.constant 0 : index
    %350 = vector.load %arg8[%c0_69, %c0_70] : memref<18x128xf32, #tpu.memory_space<vmem>>, vector<18x128xf32>
    tpu.vector_store %arg8[%c0_69, %c0_70], %349 {strides = array<i32>} : memref<18x128xf32, #tpu.memory_space<vmem>>, vector<18x128xf32>,
    return
  }
  func.func @transform_0(%arg0: i32) -> (i32, i32) {
    %c0_i32 = arith.constant 0 : i32
    %c0_i32_0 = arith.constant 0 : i32
    %c0_i32_1 = arith.constant 0 : i32
    return %c0_i32, %c0_i32_0 : i32, i32
  }
  func.func @transform_1(%arg0: i32) -> (i32, i32) {
    %c0_i32 = arith.constant 0 : i32
    %c0_i32_0 = arith.constant 0 : i32
    %c0_i32_1 = arith.constant 0 : i32
    return %c0_i32, %c0_i32_0 : i32, i32
  }
  func.func @transform_2(%arg0: i32) -> (i32, i32) {
    %c0_i32 = arith.constant 0 : i32
    %c0_i32_0 = arith.constant 0 : i32
    %c0_i32_1 = arith.constant 0 : i32
    return %c0_i32, %c0_i32_0 : i32, i32
  }
  func.func @transform_3(%arg0: i32) -> (i32, i32, i32) {
    %c0_i32 = arith.constant 0 : i32
    %c0_i32_0 = arith.constant 0 : i32
    %c0_i32_1 = arith.constant 0 : i32
    %c0_i32_2 = arith.constant 0 : i32
    return %c0_i32, %c0_i32_0, %c0_i32_1 : i32, i32, i32
  }
  func.func @transform_4(%arg0: i32) -> (i32, i32, i32) {
    %c0_i32 = arith.constant 0 : i32
    %c0_i32_0 = arith.constant 0 : i32
    %c0_i32_1 = arith.constant 0 : i32
    %c0_i32_2 = arith.constant 0 : i32
    return %c0_i32, %c0_i32_0, %c0_i32_1 : i32, i32, i32
  }
  func.func @transform_5(%arg0: i32) -> (i32, i32, i32) {
    %c0_i32 = arith.constant 0 : i32
    %c0_i32_0 = arith.constant 0 : i32
    %c0_i32_1 = arith.constant 0 : i32
    %c0_i32_2 = arith.constant 0 : i32
    return %c0_i32, %c0_i32_0, %c0_i32_1 : i32, i32, i32
  }
  func.func @transform_6(%arg0: i32) -> (i32, i32) {
    %c0_i32 = arith.constant 0 : i32
    %c0_i32_0 = arith.constant 0 : i32
    %c0_i32_1 = arith.constant 0 : i32
    return %c0_i32, %c0_i32_0 : i32, i32
  }
  func.func @transform_7(%arg0: i32) -> (i32, i32) {
    %c0_i32 = arith.constant 0 : i32
    %c0_i32_0 = arith.constant 0 : i32
    %c0_i32_1 = arith.constant 0 : i32
    return %c0_i32, %c0_i32_0 : i32, i32
  }
}

</mosaic_0001>

<llo_original>
// kernel: mae_decoder_forward.1
$region0: #{mae_decoder_forward.1}
  #allocation0 [shape = 'u32[]', space=smem, size = 0x4, offset = 0x4, fixed_abs, tag = 'smem constant byte address 0x4 - core index']
  #allocation1 [shape = 'u32[144,128]{1,0:T(1,128)}', space=vmem, size = 0x12000, scoped, tag = 'internal scratch']
  %s0 = inlined_call_operand.vmem [shape: s32[18,1], index: 0, kind: input, shape index: {}]
  %s1 = inlined_call_operand.vmem [shape: f32[9,32], index: 1, kind: input, shape index: {}]
  %s2 = inlined_call_operand.vmem [shape: f32[21,32], index: 2, kind: input, shape index: {}]
  %s3 = inlined_call_operand.vmem [shape: f32[2,32,128], index: 3, kind: input, shape index: {}]
  %s4 = inlined_call_operand.vmem [shape: f32[2,33,128], index: 4, kind: input, shape index: {}]
  %s5 = inlined_call_operand.vmem [shape: f32[2,128,32], index: 5, kind: input, shape index: {}]
  %s6 = inlined_call_operand.vmem [shape: f32[33,128], index: 6, kind: input, shape index: {}]
  %s7 = inlined_call_operand.vmem [shape: f32[18,128], index: 7, kind: output, shape index: {}]
  %s8 = sld [smem:[#allocation0]]
  $region38: #{mae_decoder_forward.1} parent=0
    _
  %s10 = ssub.s32 1, %s8
  %s11 = scalar_select 0, %s10, %s8
  // Predicated region
  $region2: #{mae_decoder_forward.1} parent=0 // pred_check
    _
  $region3: #{mae_decoder_forward.1} parent=0 // pred_check_branch
    %13 = sbr.rel (0) target = $region5
  $region4: #{mae_decoder_forward.1} parent=0 // pred_region
    _
  $region5: #{mae_decoder_forward.1} parent=0 // pred_fallthru
    _
  // Predicated region
  $region6: #{mae_decoder_forward.1} parent=0 // pred_check
    _
  $region7: #{mae_decoder_forward.1} parent=0 // pred_check_branch
    %15 = sbr.rel (0) target = $region9
  $region8: #{mae_decoder_forward.1} parent=0 // pred_region
    _
  $region9: #{mae_decoder_forward.1} parent=0 // pred_fallthru
    _
  // Predicated region
  $region10: #{mae_decoder_forward.1} parent=0 // pred_check
    _
  $region11: #{mae_decoder_forward.1} parent=0 // pred_check_branch
    %17 = sbr.rel (0) target = $region13
  $region12: #{mae_decoder_forward.1} parent=0 // pred_region
    _
  $region13: #{mae_decoder_forward.1} parent=0 // pred_fallthru
    _
  // Predicated region
  $region14: #{mae_decoder_forward.1} parent=0 // pred_check
    _
  $region15: #{mae_decoder_forward.1} parent=0 // pred_check_branch
    %19 = sbr.rel (0) target = $region17
  $region16: #{mae_decoder_forward.1} parent=0 // pred_region
    _
  $region17: #{mae_decoder_forward.1} parent=0 // pred_fallthru
    _
  // Predicated region
  $region18: #{mae_decoder_forward.1} parent=0 // pred_check
    _
  $region19: #{mae_decoder_forward.1} parent=0 // pred_check_branch
    %21 = sbr.rel (0) target = $region21
  $region20: #{mae_decoder_forward.1} parent=0 // pred_region
    _
  $region21: #{mae_decoder_forward.1} parent=0 // pred_fallthru
    _
  // Predicated region
  $region22: #{mae_decoder_forward.1} parent=0 // pred_check
    _
  $region23: #{mae_decoder_forward.1} parent=0 // pred_check_branch
    %23 = sbr.rel (0) target = $region25
  $region24: #{mae_decoder_forward.1} parent=0 // pred_region
    _
  $region25: #{mae_decoder_forward.1} parent=0 // pred_fallthru
    _
  // Predicated region
  $region26: #{mae_decoder_forward.1} parent=0 // pred_check
    _
  $region27: #{mae_decoder_forward.1} parent=0 // pred_check_branch
    %25 = sbr.rel (0) target = $region29
  $region28: #{mae_decoder_forward.1} parent=0 // pred_region
    _
  $region29: #{mae_decoder_forward.1} parent=0 // pred_fallthru
    _
  %v26 = vld [vmem:[%s2] sm:$0xff]
  %v27 = vld [vmem:[%s2 + $0x8] sm:$0xff]
  %v28 = vld [vmem:[%s2 + $0x10] sm:$0x1f]
  %v29 = vld [vmem:[%s0] sm:$0xff]
  %v30 = vld [vmem:[%s0 + $0x8] sm:$0xff]
  %v31 = vld [vmem:[%s0 + $0x10] sm:$0x3]
  %v32 = vlaneseq
  %v33 = vand.u32 %v32, 127
  %34 = vset.pattern.permute.xlu0 0
  %35 = vperm.xlu0 %34, %v29
  %v36 = vpop.permute.xlu0 %35
  %37 = vset.pattern.permute.xlu0 0
  %38 = vperm.xlu0 %37, %v30
  %v39 = vpop.permute.xlu0 %38
  %40 = vset.pattern.permute.xlu0 0
  %41 = vperm.xlu0 %40, %v31
  %v42 = vpop.permute.xlu0 %41
  %vm43 = vcmp.eq.s32.totalorder %v36, %v33
  %vm44 = vcmp.eq.s32.totalorder %v39, %v33
  %vm45 = vcmp.eq.s32.totalorder %v42, %v33
  %v46 = vsel %vm43, 1, 0
  %v47 = vsel %vm44, 1, 0
  %v48 = vsel %vm45, 1, 0
  %v49 = vcvt.s32.f32 %v46
  %v50 = vcvt.s32.f32 %v47
  %v51 = vcvt.s32.f32 %v48
  %v52 = vld [vmem:[%s1] sm:$0xff]
  %v53 = vld [vmem:[%s1 + $0x8] sm:$0x1]
  %vm56 = vcmask 1040384
  %v57 = vrot.slane %v26, 7
  %v58 = vrot.slane %v27, 7
  %v59 = vsel %vm56, %v57, %v58
  %v62 = vsel %vm56, %v27, %v57
  %vm63 = vcmask 72704
  %v65 = vsel %vm63, %v49, 0
  %v68 = vsel %vm63, %v50, 0
  %v71 = vsel %vm63, %v51, 0
  %v74 = vsel %vm56, %v53, 0
  %76 = vmatprep.subr.mxu0 0.0
  %77 = vmatpush1.msra.mxu0 %v52
  %78 = vmatprep.subr.mxu0 0.0
  %79 = vmatpush1.msra.mxu0 %v74
  %80 = vmatprep.subr.mxu0 0.0
  %81 = vmatpush1.msra.mxu0 0.0
  %82 = vmatprep.subr.mxu0 0.0
  %83 = vmatpush1.msra.mxu0 0.0
  %84 = vmatprep.subr.mxu0 0.0
  %85 = vmatpush1.msra.mxu0 0.0
  %86 = vmatprep.subr.mxu0 0.0
  %87 = vmatpush1.msra.mxu0 0.0
  %88 = vmatprep.subr.mxu0 0.0
  %89 = vmatpush1.msra.mxu0 0.0
  %90 = vmatprep.subr.mxu0 0.0
  %91 = vmatpush1.msra.mxu0 0.0
  %92 = vmatprep.subr.mxu0 0.0
  %93 = vmatpush1.msra.mxu0 0.0
  %94 = vmatprep.subr.mxu0 0.0
  %95 = vmatpush1.msra.mxu0 0.0
  %96 = vmatprep.subr.mxu0 0.0
  %97 = vmatpush1.msra.mxu0 0.0
  %98 = vmatprep.subr.mxu0 0.0
  %99 = vmatpush1.msra.mxu0 0.0
  %100 = vmatprep.subr.mxu0 0.0
  %101 = vmatpush1.msra.mxu0 0.0
  %102 = vmatprep.subr.mxu0 0.0
  %103 = vmatpush1.msra.mxu0 0.0
  %104 = vmatprep.subr.mxu0 0.0
  %105 = vmatpush1.msra.mxu0 0.0
  %106 = vmatprep.subr.mxu0 0.0
  %107 = vmatpush1.msra.mxu0 0.0
  %108 = vmatprep.subr.mxu0 0.0
  %109 = vmatpush1.msra.mxu0 0.0
  %110 = vmatprep.subr.mxu0 0.0
  %111 = vmatpush1.msra.mxu0 0.0
  %112 = vmatprep.subr.mxu0 0.0
  %113 = vmatpush1.msra.mxu0 0.0
  %114 = vmatprep.subr.mxu0 0.0
  %115 = vmatpush1.msra.mxu0 0.0
  %116 = vmatprep.subr.mxu0 0.0
  %117 = vmatpush1.msra.mxu0 0.0
  %118 = vmatprep.subr.mxu0 0.0
  %119 = vmatpush1.msra.mxu0 0.0
  %120 = vmatprep.subr.mxu0 0.0
  %121 = vmatpush1.msra.mxu0 0.0
  %122 = vmatprep.subr.mxu0 0.0
  %123 = vmatpush1.msra.mxu0 0.0
  %124 = vmatprep.subr.mxu0 0.0
  %125 = vmatpush1.msra.mxu0 0.0
  %126 = vmatprep.subr.mxu0 0.0
  %127 = vmatpush1.msra.mxu0 0.0
  %128 = vmatprep.subr.mxu0 0.0
  %129 = vmatpush1.msra.mxu0 0.0
  %130 = vmatprep.subr.mxu0 0.0
  %131 = vmatpush1.msra.mxu0 0.0
  %132 = vmatprep.subr.mxu0 0.0
  %133 = vmatpush1.msra.mxu0 0.0
  %134 = vmatprep.subr.mxu0 0.0
  %135 = vmatpush1.msra.mxu0 0.0
  %136 = vmatprep.subr.mxu0 0.0
  %137 = vmatpush1.msra.mxu0 0.0
  %138 = vmatprep.subr.mxu0 0.0
  %139 = vmatpush1.msra.mxu0 0.0
  %140 = vmatprep.mubr.f32.mxu0 0.0
  %141 = vmatmul.mubr.f32.gmra.mrb[0].mxu0 %v65
  %v142 = vpop.f32.mrb[0].mxu0
  %v143 = vadd.f32 %v26, %v142
  %v144 = vpop.f32.mrb[0].mxu0
  %145 = vmatprep.mubr.f32.mxu0 0.0
  %146 = vmatmul.mubr.f32.gmra.mrb[0].mxu0 %v68
  %v147 = vpop.f32.mrb[0].mxu0
  %v148 = vadd.f32 %v62, %v147
  %v149 = vpop.f32.mrb[0].mxu0
  %150 = vmatprep.mubr.f32.mxu0 0.0
  %151 = vmatmul.mubr.f32.gmra.mrb[0].mxu0 %v71
  %v152 = vpop.f32.mrb[0].mxu0
  %v153 = vadd.f32 %v59, %v152
  %v154 = vpop.f32.mrb[0].mxu0
  %155 = vdwg.mxu0
  %vm156 = vcmask 261120
  %v157 = vsel %vm156, %v143, 0.0
  %158 = vadd.xlane.f32.xlu0 %v157
  %v159 = vpop.xlane.xlu0 %158
  %v160 = vsel %vm156, %v148, 0.0
  %161 = vadd.xlane.f32.xlu0 %v160
  %v162 = vpop.xlane.xlu0 %161
  %vm163 = vcmask 254976
  %v164 = vsel %vm163, %v153, 0.0
  %165 = vadd.xlane.f32.xlu0 %v164
  %v166 = vpop.xlane.xlu0 %165
  %v167 = vrcp.pop 32.0
  %v168 = vmul.f32 %v159, %v167
  %v169 = vmul.f32 %v162, %v167
  %v170 = vmul.f32 %v166, %v167
  %v171 = vmul.f32 %v143, %v143
  %v172 = vmul.f32 %v148, %v148
  %v173 = vmul.f32 %v153, %v153
  %v174 = vsel %vm156, %v171, 0.0
  %175 = vadd.xlane.f32.xlu0 %v174
  %v176 = vpop.xlane.xlu0 %175
  %v177 = vsel %vm156, %v172, 0.0
  %178 = vadd.xlane.f32.xlu0 %v177
  %v179 = vpop.xlane.xlu0 %178
  %v180 = vsel %vm163, %v173, 0.0
  %181 = vadd.xlane.f32.xlu0 %v180
  %v182 = vpop.xlane.xlu0 %181
  %v183 = vmul.f32 %v176, %v167
  %v184 = vmul.f32 %v179, %v167
  %v185 = vmul.f32 %v182, %v167
  %v186 = vmul.f32 %v168, %v168
  %v187 = vmul.f32 %v169, %v169
  %v188 = vmul.f32 %v170, %v170
  %v189 = vsub.f32 %v183, %v186
  %v190 = vsub.f32 %v184, %v187
  %v191 = vsub.f32 %v185, %v188
  %v192 = vsub.f32 %v143, %v168
  %v193 = vsub.f32 %v148, %v169
  %v194 = vsub.f32 %v153, %v170
  %v195 = vadd.f32 %v189, 1e-05
  %v196 = vadd.f32 %v190, 1e-05
  %v197 = vadd.f32 %v191, 1e-05
  %v198 = vrsqrt.pop %v195
  %v199 = vrsqrt.pop %v196
  %v200 = vrsqrt.pop %v197
  %v201 = vmul.f32 %v192, %v198
  %v202 = vmul.f32 %v193, %v199
  %v203 = vmul.f32 %v194, %v200
  %v204 = vlaneseq
  %v205 = vshrl.u32 %v204, 7
  %v206 = vsub.s32 1, %v205
  %v207 = vrot.slane %v27, %v206
  %v208 = vmul.f32 %v201, %v207
  %v209 = vmul.f32 %v202, %v207
  %v210 = vmul.f32 %v203, %v207
  %v211 = vlaneseq
  %v212 = vshrl.u32 %v211, 7
  %v213 = vsub.s32 2, %v212
  %v214 = vrot.slane %v27, %v213
  %v215 = vadd.f32 %v208, %v214
  %v216 = vadd.f32 %v209, %v214
  %v217 = vadd.f32 %v210, %v214
  %v218 = vld [vmem:[%s3] sm:$0xff]
  %v219 = vld [vmem:[%s3 + $0x8] sm:$0xff]
  %v220 = vld [vmem:[%s3 + $0x10] sm:$0xff]
  %v221 = vld [vmem:[%s3 + $0x18] sm:$0xff]
  %v223 = vsel %vm156, %v215, 0
  %v226 = vsel %vm156, %v216, 0
  %v229 = vsel %vm156, %v217, 0
  %231 = vmatprep.subr.mxu0 0.0
  %232 = vmatpush1.msra.mxu0 %v218
  %233 = vmatprep.subr.mxu0 0.0
  %234 = vmatpush1.msra.mxu0 %v219
  %235 = vmatprep.subr.mxu0 0.0
  %236 = vmatpush1.msra.mxu0 %v220
  %237 = vmatprep.subr.mxu0 0.0
  %238 = vmatpush1.msra.mxu0 %v221
  %239 = vmatprep.subr.mxu0 0.0
  %240 = vmatpush1.msra.mxu0 0.0
  %241 = vmatprep.subr.mxu0 0.0
  %242 = vmatpush1.msra.mxu0 0.0
  %243 = vmatprep.subr.mxu0 0.0
  %244 = vmatpush1.msra.mxu0 0.0
  %245 = vmatprep.subr.mxu0 0.0
  %246 = vmatpush1.msra.mxu0 0.0
  %247 = vmatprep.subr.mxu0 0.0
  %248 = vmatpush1.msra.mxu0 0.0
  %249 = vmatprep.subr.mxu0 0.0
  %250 = vmatpush1.msra.mxu0 0.0
  %251 = vmatprep.subr.mxu0 0.0
  %252 = vmatpush1.msra.mxu0 0.0
  %253 = vmatprep.subr.mxu0 0.0
  %254 = vmatpush1.msra.mxu0 0.0
  %255 = vmatprep.subr.mxu0 0.0
  %256 = vmatpush1.msra.mxu0 0.0
  %257 = vmatprep.subr.mxu0 0.0
  %258 = vmatpush1.msra.mxu0 0.0
  %259 = vmatprep.subr.mxu0 0.0
  %260 = vmatpush1.msra.mxu0 0.0
  %261 = vmatprep.subr.mxu0 0.0
  %262 = vmatpush1.msra.mxu0 0.0
  %263 = vmatprep.subr.mxu0 0.0
  %264 = vmatpush1.msra.mxu0 0.0
  %265 = vmatprep.subr.mxu0 0.0
  %266 = vmatpush1.msra.mxu0 0.0
  %267 = vmatprep.subr.mxu0 0.0
  %268 = vmatpush1.msra.mxu0 0.0
  %269 = vmatprep.subr.mxu0 0.0
  %270 = vmatpush1.msra.mxu0 0.0
  %271 = vmatprep.subr.mxu0 0.0
  %272 = vmatpush1.msra.mxu0 0.0
  %273 = vmatprep.subr.mxu0 0.0
  %274 = vmatpush1.msra.mxu0 0.0
  %275 = vmatprep.subr.mxu0 0.0
  %276 = vmatpush1.msra.mxu0 0.0
  %277 = vmatprep.subr.mxu0 0.0
  %278 = vmatpush1.msra.mxu0 0.0
  %279 = vmatprep.subr.mxu0 0.0
  %280 = vmatpush1.msra.mxu0 0.0
  %281 = vmatprep.subr.mxu0 0.0
  %282 = vmatpush1.msra.mxu0 0.0
  %283 = vmatprep.subr.mxu0 0.0
  %284 = vmatpush1.msra.mxu0 0.0
  %285 = vmatprep.subr.mxu0 0.0
  %286 = vmatpush1.msra.mxu0 0.0
  %287 = vmatprep.subr.mxu0 0.0
  %288 = vmatpush1.msra.mxu0 0.0
  %289 = vmatprep.subr.mxu0 0.0
  %290 = vmatpush1.msra.mxu0 0.0
  %291 = vmatprep.subr.mxu0 0.0
  %292 = vmatpush1.msra.mxu0 0.0
  %293 = vmatprep.subr.mxu0 0.0
  %294 = vmatpush1.msra.mxu0 0.0
  %295 = vmatprep.mubr.f32.mxu0 0.0
  %296 = vmatmul.mubr.f32.gmra.mrb[0].mxu0 %v223
  %v297 = vpop.f32.mrb[0].mxu0
  %v298 = vadd.f32 0.0, %v297
  %v299 = vpop.f32.mrb[0].mxu0
  %300 = vmatprep.mubr.f32.mxu0 0.0
  %301 = vmatmul.mubr.f32.gmra.mrb[0].mxu0 %v226
  %v302 = vpop.f32.mrb[0].mxu0
  %v303 = vadd.f32 0.0, %v302
  %v304 = vpop.f32.mrb[0].mxu0
  %305 = vmatprep.mubr.f32.mxu0 0.0
  %306 = vmatmul.mubr.f32.gmra.mrb[0].mxu0 %v229
  %v307 = vpop.f32.mrb[0].mxu0
  %v308 = vadd.f32 0.0, %v307
  %v309 = vpop.f32.mrb[0].mxu0
  %310 = vdwg.mxu0
  %313 = vrot.lane.b32.xlu0 %v298, 120
  %v314 = vpop.permute.xlu0 %313
  %315 = vrot.lane.b32.xlu0 %v303, 120
  %v316 = vpop.permute.xlu0 %315
  %317 = vrot.lane.b32.xlu0 %v298, 112
  %v318 = vpop.permute.xlu0 %317
  %319 = vrot.lane.b32.xlu0 %v303, 112
  %v320 = vpop.permute.xlu0 %319
  %321 = vrot.lane.b32.xlu0 %v298, 104
  %v322 = vpop.permute.xlu0 %321
  %323 = vrot.lane.b32.xlu0 %v303, 104
  %v324 = vpop.permute.xlu0 %323
  %vm326 = vcmask 1046528
  %v327 = vrot.slane %v303, 1
  %v328 = vrot.slane %v308, 1
  %v329 = vsel %vm326, %v327, %v328
  %330 = vrot.lane.b32.xlu0 %v329, 120
  %v331 = vpop.permute.xlu0 %330
  %332 = vrot.lane.b32.xlu0 %v328, 120
  %v333 = vpop.permute.xlu0 %332
  %334 = vrot.lane.b32.xlu0 %v329, 112
  %v335 = vpop.permute.xlu0 %334
  %336 = vrot.lane.b32.xlu0 %v328, 112
  %v337 = vpop.permute.xlu0 %336
  %338 = vrot.lane.b32.xlu0 %v329, 104
  %v339 = vpop.permute.xlu0 %338
  %340 = vrot.lane.b32.xlu0 %v328, 104
  %v341 = vpop.permute.xlu0 %340
  %342 = vrot.lane.b32.xlu0 %v298, 96
  %v343 = vpop.permute.xlu0 %342
  %344 = vrot.lane.b32.xlu0 %v303, 96
  %v345 = vpop.permute.xlu0 %344
  %vm346 = vcmask 64512
  %v347 = vsel %vm346, %v298, 0
  %v349 = vsel %vm346, %v303, 0
  %v351 = vsel %vm346, %v343, 0
  %v353 = vsel %vm346, %v345, 0
  %355 = vmatprep.subr.mxu0 0.0
  %356 = vmatpush1.xpose.msra.mxu0 %v351
  %357 = vmatprep.subr.mxu0 0.0
  %358 = vmatpush1.xpose.msra.mxu0 %v353
  %359 = vmatprep.subr.mxu0 0.0
  %360 = vmatpush1.xpose.msra.mxu0 0.0
  %361 = vmatprep.subr.mxu0 0.0
  %362 = vmatpush1.xpose.msra.mxu0 0.0
  %363 = vmatprep.subr.mxu0 0.0
  %364 = vmatpush1.xpose.msra.mxu0 0.0
  %365 = vmatprep.subr.mxu0 0.0
  %366 = vmatpush1.xpose.msra.mxu0 0.0
  %367 = vmatprep.subr.mxu0 0.0
  %368 = vmatpush1.xpose.msra.mxu0 0.0
  %369 = vmatprep.subr.mxu0 0.0
  %370 = vmatpush1.xpose.msra.mxu0 0.0
  %371 = vmatprep.subr.mxu0 0.0
  %372 = vmatpush1.xpose.msra.mxu0 0.0
  %373 = vmatprep.subr.mxu0 0.0
  %374 = vmatpush1.xpose.msra.mxu0 0.0
  %375 = vmatprep.subr.mxu0 0.0
  %376 = vmatpush1.xpose.msra.mxu0 0.0
  %377 = vmatprep.subr.mxu0 0.0
  %378 = vmatpush1.xpose.msra.mxu0 0.0
  %379 = vmatprep.subr.mxu0 0.0
  %380 = vmatpush1.xpose.msra.mxu0 0.0
  %381 = vmatprep.subr.mxu0 0.0
  %382 = vmatpush1.xpose.msra.mxu0 0.0
  %383 = vmatprep.subr.mxu0 0.0
  %384 = vmatpush1.xpose.msra.mxu0 0.0
  %385 = vmatprep.subr.mxu0 0.0
  %386 = vmatpush1.xpose.msra.mxu0 0.0
  %387 = vmatprep.subr.mxu0 0.0
  %388 = vmatpush1.xpose.msra.mxu0 0.0
  %389 = vmatprep.subr.mxu0 0.0
  %390 = vmatpush1.xpose.msra.mxu0 0.0
  %391 = vmatprep.subr.mxu0 0.0
  %392 = vmatpush1.xpose.msra.mxu0 0.0
  %393 = vmatprep.subr.mxu0 0.0
  %394 = vmatpush1.xpose.msra.mxu0 0.0
  %395 = vmatprep.subr.mxu0 0.0
  %396 = vmatpush1.xpose.msra.mxu0 0.0
  %397 = vmatprep.subr.mxu0 0.0
  %398 = vmatpush1.xpose.msra.mxu0 0.0
  %399 = vmatprep.subr.mxu0 0.0
  %400 = vmatpush1.xpose.msra.mxu0 0.0
  %401 = vmatprep.subr.mxu0 0.0
  %402 = vmatpush1.xpose.msra.mxu0 0.0
  %403 = vmatprep.subr.mxu0 0.0
  %404 = vmatpush1.xpose.msra.mxu0 0.0
  %405 = vmatprep.subr.mxu0 0.0
  %406 = vmatpush1.xpose.msra.mxu0 0.0
  %407 = vmatprep.subr.mxu0 0.0
  %408 = vmatpush1.xpose.msra.mxu0 0.0
  %409 = vmatprep.subr.mxu0 0.0
  %410 = vmatpush1.xpose.msra.mxu0 0.0
  %411 = vmatprep.subr.mxu0 0.0
  %412 = vmatpush1.xpose.msra.mxu0 0.0
  %413 = vmatprep.subr.mxu0 0.0
  %414 = vmatpush1.xpose.msra.mxu0 0.0
  %415 = vmatprep.subr.mxu0 0.0
  %416 = vmatpush1.xpose.msra.mxu0 0.0
  %417 = vmatprep.subr.mxu0 0.0
  %418 = vmatpush1.xpose.msra.mxu0 0.0
  %419 = vmatprep.mubr.f32.mxu0 0.0
  %420 = vmatmul.mubr.f32.gmra.mrb[0].mxu0 %v347
  %v421 = vpop.f32.mrb[0].mxu0
  %v422 = vadd.f32 0.0, %v421
  %v423 = vpop.f32.mrb[0].mxu0
  %424 = vmatprep.mubr.f32.mxu0 0.0
  %425 = vmatmul.mubr.f32.gmra.mrb[0].mxu0 %v349
  %v426 = vpop.f32.mrb[0].mxu0
  %v427 = vadd.f32 0.0, %v426
  %v428 = vpop.f32.mrb[0].mxu0
  %429 = vdwg.mxu0
  %430 = vrot.lane.b32.xlu0 %v314, 96
  %v431 = vpop.permute.xlu0 %430
  %432 = vrot.lane.b32.xlu0 %v316, 96
  %v433 = vpop.permute.xlu0 %432
  %v434 = vsel %vm346, %v314, 0
  %v436 = vsel %vm346, %v316, 0
  %v438 = vsel %vm346, %v431, 0
  %v440 = vsel %vm346, %v433, 0
  %442 = vmatprep.subr.mxu0 0.0
  %443 = vmatpush1.xpose.msra.mxu0 %v438
  %444 = vmatprep.subr.mxu0 0.0
  %445 = vmatpush1.xpose.msra.mxu0 %v440
  %446 = vmatprep.subr.mxu0 0.0
  %447 = vmatpush1.xpose.msra.mxu0 0.0
  %448 = vmatprep.subr.mxu0 0.0
  %449 = vmatpush1.xpose.msra.mxu0 0.0
  %450 = vmatprep.subr.mxu0 0.0
  %451 = vmatpush1.xpose.msra.mxu0 0.0
  %452 = vmatprep.subr.mxu0 0.0
  %453 = vmatpush1.xpose.msra.mxu0 0.0
  %454 = vmatprep.subr.mxu0 0.0
  %455 = vmatpush1.xpose.msra.mxu0 0.0
  %456 = vmatprep.subr.mxu0 0.0
  %457 = vmatpush1.xpose.msra.mxu0 0.0
  %458 = vmatprep.subr.mxu0 0.0
  %459 = vmatpush1.xpose.msra.mxu0 0.0
  %460 = vmatprep.subr.mxu0 0.0
  %461 = vmatpush1.xpose.msra.mxu0 0.0
  %462 = vmatprep.subr.mxu0 0.0
  %463 = vmatpush1.xpose.msra.mxu0 0.0
  %464 = vmatprep.subr.mxu0 0.0
  %465 = vmatpush1.xpose.msra.mxu0 0.0
  %466 = vmatprep.subr.mxu0 0.0
  %467 = vmatpush1.xpose.msra.mxu0 0.0
  %468 = vmatprep.subr.mxu0 0.0
  %469 = vmatpush1.xpose.msra.mxu0 0.0
  %470 = vmatprep.subr.mxu0 0.0
  %471 = vmatpush1.xpose.msra.mxu0 0.0
  %472 = vmatprep.subr.mxu0 0.0
  %473 = vmatpush1.xpose.msra.mxu0 0.0
  %474 = vmatprep.subr.mxu0 0.0
  %475 = vmatpush1.xpose.msra.mxu0 0.0
  %476 = vmatprep.subr.mxu0 0.0
  %477 = vmatpush1.xpose.msra.mxu0 0.0
  %478 = vmatprep.subr.mxu0 0.0
  %479 = vmatpush1.xpose.msra.mxu0 0.0
  %480 = vmatprep.subr.mxu0 0.0
  %481 = vmatpush1.xpose.msra.mxu0 0.0
  %482 = vmatprep.subr.mxu0 0.0
  %483 = vmatpush1.xpose.msra.mxu0 0.0
  %484 = vmatprep.subr.mxu0 0.0
  %485 = vmatpush1.xpose.msra.mxu0 0.0
  %486 = vmatprep.subr.mxu0 0.0
  %487 = vmatpush1.xpose.msra.mxu0 0.0
  %488 = vmatprep.subr.mxu0 0.0
  %489 = vmatpush1.xpose.msra.mxu0 0.0
  %490 = vmatprep.subr.mxu0 0.0
  %491 = vmatpush1.xpose.msra.mxu0 0.0
  %492 = vmatprep.subr.mxu0 0.0
  %493 = vmatpush1.xpose.msra.mxu0 0.0
  %494 = vmatprep.subr.mxu0 0.0
  %495 = vmatpush1.xpose.msra.mxu0 0.0
  %496 = vmatprep.subr.mxu0 0.0
  %497 = vmatpush1.xpose.msra.mxu0 0.0
  %498 = vmatprep.subr.mxu0 0.0
  %499 = vmatpush1.xpose.msra.mxu0 0.0
  %500 = vmatprep.subr.mxu0 0.0
  %501 = vmatpush1.xpose.msra.mxu0 0.0
  %502 = vmatprep.subr.mxu0 0.0
  %503 = vmatpush1.xpose.msra.mxu0 0.0
  %504 = vmatprep.subr.mxu0 0.0
  %505 = vmatpush1.xpose.msra.mxu0 0.0
  %506 = vmatprep.mubr.f32.mxu0 0.0
  %507 = vmatmul.mubr.f32.gmra.mrb[0].mxu0 %v434
  %v508 = vpop.f32.mrb[0].mxu0
  %v509 = vadd.f32 0.0, %v508
  %v510 = vpop.f32.mrb[0].mxu0
  %511 = vmatprep.mubr.f32.mxu0 0.0
  %512 = vmatmul.mubr.f32.gmra.mrb[0].mxu0 %v436
  %v513 = vpop.f32.mrb[0].mxu0
  %v514 = vadd.f32 0.0, %v513
  %v515 = vpop.f32.mrb[0].mxu0
  %516 = vdwg.mxu0
  %517 = vrot.lane.b32.xlu0 %v318, 96
  %v518 = vpop.permute.xlu0 %517
  %519 = vrot.lane.b32.xlu0 %v320, 96
  %v520 = vpop.permute.xlu0 %519
  %v521 = vsel %vm346, %v318, 0
  %v523 = vsel %vm346, %v320, 0
  %v525 = vsel %vm346, %v518, 0
  %v527 = vsel %vm346, %v520, 0
  %529 = vmatprep.subr.mxu0 0.0
  %530 = vmatpush1.xpose.msra.mxu0 %v525
  %531 = vmatprep.subr.mxu0 0.0
  %532 = vmatpush1.xpose.msra.mxu0 %v527
  %533 = vmatprep.subr.mxu0 0.0
  %534 = vmatpush1.xpose.msra.mxu0 0.0
  %535 = vmatprep.subr.mxu0 0.0
  %536 = vmatpush1.xpose.msra.mxu0 0.0
  %537 = vmatprep.subr.mxu0 0.0
  %538 = vmatpush1.xpose.msra.mxu0 0.0
  %539 = vmatprep.subr.mxu0 0.0
  %540 = vmatpush1.xpose.msra.mxu0 0.0
  %541 = vmatprep.subr.mxu0 0.0
  %542 = vmatpush1.xpose.msra.mxu0 0.0
  %543 = vmatprep.subr.mxu0 0.0
  %544 = vmatpush1.xpose.msra.mxu0 0.0
  %545 = vmatprep.subr.mxu0 0.0
  %546 = vmatpush1.xpose.msra.mxu0 0.0
  %547 = vmatprep.subr.mxu0 0.0
  %548 = vmatpush1.xpose.msra.mxu0 0.0
  %549 = vmatprep.subr.mxu0 0.0
  %550 = vmatpush1.xpose.msra.mxu0 0.0
  %551 = vmatprep.subr.mxu0 0.0
  %552 = vmatpush1.xpose.msra.mxu0 0.0
  %553 = vmatprep.subr.mxu0 0.0
  %554 = vmatpush1.xpose.msra.mxu0 0.0
  %555 = vmatprep.subr.mxu0 0.0
  %556 = vmatpush1.xpose.msra.mxu0 0.0
  %557 = vmatprep.subr.mxu0 0.0
  %558 = vmatpush1.xpose.msra.mxu0 0.0
  %559 = vmatprep.subr.mxu0 0.0
  %560 = vmatpush1.xpose.msra.mxu0 0.0
  %561 = vmatprep.subr.mxu0 0.0
  %562 = vmatpush1.xpose.msra.mxu0 0.0
  %563 = vmatprep.subr.mxu0 0.0
  %564 = vmatpush1.xpose.msra.mxu0 0.0
  %565 = vmatprep.subr.mxu0 0.0
  %566 = vmatpush1.xpose.msra.mxu0 0.0
  %567 = vmatprep.subr.mxu0 0.0
  %568 = vmatpush1.xpose.msra.mxu0 0.0
  %569 = vmatprep.subr.mxu0 0.0
  %570 = vmatpush1.xpose.msra.mxu0 0.0
  %571 = vmatprep.subr.mxu0 0.0
  %572 = vmatpush1.xpose.msra.mxu0 0.0
  %573 = vmatprep.subr.mxu0 0.0
  %574 = vmatpush1.xpose.msra.mxu0 0.0
  %575 = vmatprep.subr.mxu0 0.0
  %576 = vmatpush1.xpose.msra.mxu0 0.0
  %577 = vmatprep.subr.mxu0 0.0
  %578 = vmatpush1.xpose.msra.mxu0 0.0
  %579 = vmatprep.subr.mxu0 0.0
  %580 = vmatpush1.xpose.msra.mxu0 0.0
  %581 = vmatprep.subr.mxu0 0.0
  %582 = vmatpush1.xpose.msra.mxu0 0.0
  %583 = vmatprep.subr.mxu0 0.0
  %584 = vmatpush1.xpose.msra.mxu0 0.0
  %585 = vmatprep.subr.mxu0 0.0
  %586 = vmatpush1.xpose.msra.mxu0 0.0
  %587 = vmatprep.subr.mxu0 0.0
  %588 = vmatpush1.xpose.msra.mxu0 0.0
  %589 = vmatprep.subr.mxu0 0.0
  %590 = vmatpush1.xpose.msra.mxu0 0.0
  %591 = vmatprep.subr.mxu0 0.0
  %592 = vmatpush1.xpose.msra.mxu0 0.0
  %593 = vmatprep.mubr.f32.mxu0 0.0
  %594 = vmatmul.mubr.f32.gmra.mrb[0].mxu0 %v521
  %v595 = vpop.f32.mrb[0].mxu0
  %v596 = vadd.f32 0.0, %v595
  %v597 = vpop.f32.mrb[0].mxu0
  %598 = vmatprep.mubr.f32.mxu0 0.0
  %599 = vmatmul.mubr.f32.gmra.mrb[0].mxu0 %v523
  %v600 = vpop.f32.mrb[0].mxu0
  %v601 = vadd.f32 0.0, %v600
  %v602 = vpop.f32.mrb[0].mxu0
  %603 = vdwg.mxu0
  %604 = vrot.lane.b32.xlu0 %v322, 96
  %v605 = vpop.permute.xlu0 %604
  %606 = vrot.lane.b32.xlu0 %v324, 96
  %v607 = vpop.permute.xlu0 %606
  %v608 = vsel %vm346, %v322, 0
  %v610 = vsel %vm346, %v324, 0
  %v612 = vsel %vm346, %v605, 0
  %v614 = vsel %vm346, %v607, 0
  %616 = vmatprep.subr.mxu0 0.0
  %617 = vmatpush1.xpose.msra.mxu0 %v612
  %618 = vmatprep.subr.mxu0 0.0
  %619 = vmatpush1.xpose.msra.mxu0 %v614
  %620 = vmatprep.subr.mxu0 0.0
  %621 = vmatpush1.xpose.msra.mxu0 0.0
  %622 = vmatprep.subr.mxu0 0.0
  %623 = vmatpush1.xpose.msra.mxu0 0.0
  %624 = vmatprep.subr.mxu0 0.0
  %625 = vmatpush1.xpose.msra.mxu0 0.0
  %626 = vmatprep.subr.mxu0 0.0
  %627 = vmatpush1.xpose.msra.mxu0 0.0
  %628 = vmatprep.subr.mxu0 0.0
  %629 = vmatpush1.xpose.msra.mxu0 0.0
  %630 = vmatprep.subr.mxu0 0.0
  %631 = vmatpush1.xpose.msra.mxu0 0.0
  %632 = vmatprep.subr.mxu0 0.0
  %633 = vmatpush1.xpose.msra.mxu0 0.0
  %634 = vmatprep.subr.mxu0 0.0
  %635 = vmatpush1.xpose.msra.mxu0 0.0
  %636 = vmatprep.subr.mxu0 0.0
  %637 = vmatpush1.xpose.msra.mxu0 0.0
  %638 = vmatprep.subr.mxu0 0.0
  %639 = vmatpush1.xpose.msra.mxu0 0.0
  %640 = vmatprep.subr.mxu0 0.0
  %641 = vmatpush1.xpose.msra.mxu0 0.0
  %642 = vmatprep.subr.mxu0 0.0
  %643 = vmatpush1.xpose.msra.mxu0 0.0
  %644 = vmatprep.subr.mxu0 0.0
  %645 = vmatpush1.xpose.msra.mxu0 0.0
  %646 = vmatprep.subr.mxu0 0.0
  %647 = vmatpush1.xpose.msra.mxu0 0.0
  %648 = vmatprep.subr.mxu0 0.0
  %649 = vmatpush1.xpose.msra.mxu0 0.0
  %650 = vmatprep.subr.mxu0 0.0
  %651 = vmatpush1.xpose.msra.mxu0 0.0
  %652 = vmatprep.subr.mxu0 0.0
  %653 = vmatpush1.xpose.msra.mxu0 0.0
  %654 = vmatprep.subr.mxu0 0.0
  %655 = vmatpush1.xpose.msra.mxu0 0.0
  %656 = vmatprep.subr.mxu0 0.0
  %657 = vmatpush1.xpose.msra.mxu0 0.0
  %658 = vmatprep.subr.mxu0 0.0
  %659 = vmatpush1.xpose.msra.mxu0 0.0
  %660 = vmatprep.subr.mxu0 0.0
  %661 = vmatpush1.xpose.msra.mxu0 0.0
  %662 = vmatprep.subr.mxu0 0.0
  %663 = vmatpush1.xpose.msra.mxu0 0.0
  %664 = vmatprep.subr.mxu0 0.0
  %665 = vmatpush1.xpose.msra.mxu0 0.0
  %666 = vmatprep.subr.mxu0 0.0
  %667 = vmatpush1.xpose.msra.mxu0 0.0
  %668 = vmatprep.subr.mxu0 0.0
  %669 = vmatpush1.xpose.msra.mxu0 0.0
  %670 = vmatprep.subr.mxu0 0.0
  %671 = vmatpush1.xpose.msra.mxu0 0.0
  %672 = vmatprep.subr.mxu0 0.0
  %673 = vmatpush1.xpose.msra.mxu0 0.0
  %674 = vmatprep.subr.mxu0 0.0
  %675 = vmatpush1.xpose.msra.mxu0 0.0
  %676 = vmatprep.subr.mxu0 0.0
  %677 = vmatpush1.xpose.msra.mxu0 0.0
  %678 = vmatprep.subr.mxu0 0.0
  %679 = vmatpush1.xpose.msra.mxu0 0.0
  %680 = vmatprep.mubr.f32.mxu0 0.0
  %681 = vmatmul.mubr.f32.gmra.mrb[0].mxu0 %v608
  %v682 = vpop.f32.mrb[0].mxu0
  %v683 = vadd.f32 0.0, %v682
  %v684 = vpop.f32.mrb[0].mxu0
  %685 = vmatprep.mubr.f32.mxu0 0.0
  %686 = vmatmul.mubr.f32.gmra.mrb[0].mxu0 %v610
  %v687 = vpop.f32.mrb[0].mxu0
  %v688 = vadd.f32 0.0, %v687
  %v689 = vpop.f32.mrb[0].mxu0
  %690 = vdwg.mxu0
  %691 = vrot.lane.b32.xlu0 %v329, 96
  %v692 = vpop.permute.xlu0 %691
  %693 = vrot.lane.b32.xlu0 %v328, 96
  %v694 = vpop.permute.xlu0 %693
  %v695 = vsel %vm346, %v329, 0
  %v697 = vsel %vm346, %v328, 0
  %v699 = vsel %vm346, %v692, 0
  %v701 = vsel %vm346, %v694, 0
  %703 = vmatprep.subr.mxu0 0.0
  %704 = vmatpush1.xpose.msra.mxu0 %v699
  %705 = vmatprep.subr.mxu0 0.0
  %706 = vmatpush1.xpose.msra.mxu0 %v701
  %707 = vmatprep.subr.mxu0 0.0
  %708 = vmatpush1.xpose.msra.mxu0 0.0
  %709 = vmatprep.subr.mxu0 0.0
  %710 = vmatpush1.xpose.msra.mxu0 0.0
  %711 = vmatprep.subr.mxu0 0.0
  %712 = vmatpush1.xpose.msra.mxu0 0.0
  %713 = vmatprep.subr.mxu0 0.0
  %714 = vmatpush1.xpose.msra.mxu0 0.0
  %715 = vmatprep.subr.mxu0 0.0
  %716 = vmatpush1.xpose.msra.mxu0 0.0
  %717 = vmatprep.subr.mxu0 0.0
  %718 = vmatpush1.xpose.msra.mxu0 0.0
  %719 = vmatprep.subr.mxu0 0.0
  %720 = vmatpush1.xpose.msra.mxu0 0.0
  %721 = vmatprep.subr.mxu0 0.0
  %722 = vmatpush1.xpose.msra.mxu0 0.0
  %723 = vmatprep.subr.mxu0 0.0
  %724 = vmatpush1.xpose.msra.mxu0 0.0
  %725 = vmatprep.subr.mxu0 0.0
  %726 = vmatpush1.xpose.msra.mxu0 0.0
  %727 = vmatprep.subr.mxu0 0.0
  %728 = vmatpush1.xpose.msra.mxu0 0.0
  %729 = vmatprep.subr.mxu0 0.0
  %730 = vmatpush1.xpose.msra.mxu0 0.0
  %731 = vmatprep.subr.mxu0 0.0
  %732 = vmatpush1.xpose.msra.mxu0 0.0
  %733 = vmatprep.subr.mxu0 0.0
  %734 = vmatpush1.xpose.msra.mxu0 0.0
  %735 = vmatprep.subr.mxu0 0.0
  %736 = vmatpush1.xpose.msra.mxu0 0.0
  %737 = vmatprep.subr.mxu0 0.0
  %738 = vmatpush1.xpose.msra.mxu0 0.0
  %739 = vmatprep.subr.mxu0 0.0
  %740 = vmatpush1.xpose.msra.mxu0 0.0
  %741 = vmatprep.subr.mxu0 0.0
  %742 = vmatpush1.xpose.msra.mxu0 0.0
  %743 = vmatprep.subr.mxu0 0.0
  %744 = vmatpush1.xpose.msra.mxu0 0.0
  %745 = vmatprep.subr.mxu0 0.0
  %746 = vmatpush1.xpose.msra.mxu0 0.0
  %747 = vmatprep.subr.mxu0 0.0
  %748 = vmatpush1.xpose.msra.mxu0 0.0
  %749 = vmatprep.subr.mxu0 0.0
  %750 = vmatpush1.xpose.msra.mxu0 0.0
  %751 = vmatprep.subr.mxu0 0.0
  %752 = vmatpush1.xpose.msra.mxu0 0.0
  %753 = vmatprep.subr.mxu0 0.0
  %754 = vmatpush1.xpose.msra.mxu0 0.0
  %755 = vmatprep.subr.mxu0 0.0
  %756 = vmatpush1.xpose.msra.mxu0 0.0
  %757 = vmatprep.subr.mxu0 0.0
  %758 = vmatpush1.xpose.msra.mxu0 0.0
  %759 = vmatprep.subr.mxu0 0.0
  %760 = vmatpush1.xpose.msra.mxu0 0.0
  %761 = vmatprep.subr.mxu0 0.0
  %762 = vmatpush1.xpose.msra.mxu0 0.0
  %763 = vmatprep.subr.mxu0 0.0
  %764 = vmatpush1.xpose.msra.mxu0 0.0
  %765 = vmatprep.subr.mxu0 0.0
  %766 = vmatpush1.xpose.msra.mxu0 0.0
  %767 = vmatprep.mubr.f32.mxu0 0.0
  %768 = vmatmul.mubr.f32.gmra.mrb[0].mxu0 %v695
  %v769 = vpop.f32.mrb[0].mxu0
  %v770 = vadd.f32 0.0, %v769
  %v771 = vpop.f32.mrb[0].mxu0
  %772 = vmatprep.mubr.f32.mxu0 0.0
  %773 = vmatmul.mubr.f32.gmra.mrb[0].mxu0 %v697
  %v774 = vpop.f32.mrb[0].mxu0
  %v775 = vadd.f32 0.0, %v774
  %v776 = vpop.f32.mrb[0].mxu0
  %777 = vdwg.mxu0
  %778 = vrot.lane.b32.xlu0 %v331, 96
  %v779 = vpop.permute.xlu0 %778
  %780 = vrot.lane.b32.xlu0 %v333, 96
  %v781 = vpop.permute.xlu0 %780
  %v782 = vsel %vm346, %v331, 0
  %v784 = vsel %vm346, %v333, 0
  %v786 = vsel %vm346, %v779, 0
  %v788 = vsel %vm346, %v781, 0
  %790 = vmatprep.subr.mxu0 0.0
  %791 = vmatpush1.xpose.msra.mxu0 %v786
  %792 = vmatprep.subr.mxu0 0.0
  %793 = vmatpush1.xpose.msra.mxu0 %v788
  %794 = vmatprep.subr.mxu0 0.0
  %795 = vmatpush1.xpose.msra.mxu0 0.0
  %796 = vmatprep.subr.mxu0 0.0
  %797 = vmatpush1.xpose.msra.mxu0 0.0
  %798 = vmatprep.subr.mxu0 0.0
  %799 = vmatpush1.xpose.msra.mxu0 0.0
  %800 = vmatprep.subr.mxu0 0.0
  %801 = vmatpush1.xpose.msra.mxu0 0.0
  %802 = vmatprep.subr.mxu0 0.0
  %803 = vmatpush1.xpose.msra.mxu0 0.0
  %804 = vmatprep.subr.mxu0 0.0
  %805 = vmatpush1.xpose.msra.mxu0 0.0
  %806 = vmatprep.subr.mxu0 0.0
  %807 = vmatpush1.xpose.msra.mxu0 0.0
  %808 = vmatprep.subr.mxu0 0.0
  %809 = vmatpush1.xpose.msra.mxu0 0.0
  %810 = vmatprep.subr.mxu0 0.0
  %811 = vmatpush1.xpose.msra.mxu0 0.0
  %812 = vmatprep.subr.mxu0 0.0
  %813 = vmatpush1.xpose.msra.mxu0 0.0
  %814 = vmatprep.subr.mxu0 0.0
  %815 = vmatpush1.xpose.msra.mxu0 0.0
  %816 = vmatprep.subr.mxu0 0.0
  %817 = vmatpush1.xpose.msra.mxu0 0.0
  %818 = vmatprep.subr.mxu0 0.0
  %819 = vmatpush1.xpose.msra.mxu0 0.0
  %820 = vmatprep.subr.mxu0 0.0
  %821 = vmatpush1.xpose.msra.mxu0 0.0
  %822 = vmatprep.subr.mxu0 0.0
  %823 = vmatpush1.xpose.msra.mxu0 0.0
  %824 = vmatprep.subr.mxu0 0.0
  %825 = vmatpush1.xpose.msra.mxu0 0.0
  %826 = vmatprep.subr.mxu0 0.0
  %827 = vmatpush1.xpose.msra.mxu0 0.0
  %828 = vmatprep.subr.mxu0 0.0
  %829 = vmatpush1.xpose.msra.mxu0 0.0
  %830 = vmatprep.subr.mxu0 0.0
  %831 = vmatpush1.xpose.msra.mxu0 0.0
  %832 = vmatprep.subr.mxu0 0.0
  %833 = vmatpush1.xpose.msra.mxu0 0.0
  %834 = vmatprep.subr.mxu0 0.0
  %835 = vmatpush1.xpose.msra.mxu0 0.0
  %836 = vmatprep.subr.mxu0 0.0
  %837 = vmatpush1.xpose.msra.mxu0 0.0
  %838 = vmatprep.subr.mxu0 0.0
  %839 = vmatpush1.xpose.msra.mxu0 0.0
  %840 = vmatprep.subr.mxu0 0.0
  %841 = vmatpush1.xpose.msra.mxu0 0.0
  %842 = vmatprep.subr.mxu0 0.0
  %843 = vmatpush1.xpose.msra.mxu0 0.0
  %844 = vmatprep.subr.mxu0 0.0
  %845 = vmatpush1.xpose.msra.mxu0 0.0
  %846 = vmatprep.subr.mxu0 0.0
  %847 = vmatpush1.xpose.msra.mxu0 0.0
  %848 = vmatprep.subr.mxu0 0.0
  %849 = vmatpush1.xpose.msra.mxu0 0.0
  %850 = vmatprep.subr.mxu0 0.0
  %851 = vmatpush1.xpose.msra.mxu0 0.0
  %852 = vmatprep.subr.mxu0 0.0
  %853 = vmatpush1.xpose.msra.mxu0 0.0
  %854 = vmatprep.mubr.f32.mxu0 0.0
  %855 = vmatmul.mubr.f32.gmra.mrb[0].mxu0 %v782
  %v856 = vpop.f32.mrb[0].mxu0
  %v857 = vadd.f32 0.0, %v856
  %v858 = vpop.f32.mrb[0].mxu0
  %859 = vmatprep.mubr.f32.mxu0 0.0
  %860 = vmatmul.mubr.f32.gmra.mrb[0].mxu0 %v784
  %v861 = vpop.f32.mrb[0].mxu0
  %v862 = vadd.f32 0.0, %v861
  %v863 = vpop.f32.mrb[0].mxu0
  %864 = vdwg.mxu0
  %865 = vrot.lane.b32.xlu0 %v335, 96
  %v866 = vpop.permute.xlu0 %865
  %867 = vrot.lane.b32.xlu0 %v337, 96
  %v868 = vpop.permute.xlu0 %867
  %v869 = vsel %vm346, %v335, 0
  %v871 = vsel %vm346, %v337, 0
  %v873 = vsel %vm346, %v866, 0
  %v875 = vsel %vm346, %v868, 0
  %877 = vmatprep.subr.mxu0 0.0
  %878 = vmatpush1.xpose.msra.mxu0 %v873
  %879 = vmatprep.subr.mxu0 0.0
  %880 = vmatpush1.xpose.msra.mxu0 %v875
  %881 = vmatprep.subr.mxu0 0.0
  %882 = vmatpush1.xpose.msra.mxu0 0.0
  %883 = vmatprep.subr.mxu0 0.0
  %884 = vmatpush1.xpose.msra.mxu0 0.0
  %885 = vmatprep.subr.mxu0 0.0
  %886 = vmatpush1.xpose.msra.mxu0 0.0
  %887 = vmatprep.subr.mxu0 0.0
  %888 = vmatpush1.xpose.msra.mxu0 0.0
  %889 = vmatprep.subr.mxu0 0.0
  %890 = vmatpush1.xpose.msra.mxu0 0.0
  %891 = vmatprep.subr.mxu0 0.0
  %892 = vmatpush1.xpose.msra.mxu0 0.0
  %893 = vmatprep.subr.mxu0 0.0
  %894 = vmatpush1.xpose.msra.mxu0 0.0
  %895 = vmatprep.subr.mxu0 0.0
  %896 = vmatpush1.xpose.msra.mxu0 0.0
  %897 = vmatprep.subr.mxu0 0.0
  %898 = vmatpush1.xpose.msra.mxu0 0.0
  %899 = vmatprep.subr.mxu0 0.0
  %900 = vmatpush1.xpose.msra.mxu0 0.0
  %901 = vmatprep.subr.mxu0 0.0
  %902 = vmatpush1.xpose.msra.mxu0 0.0
  %903 = vmatprep.subr.mxu0 0.0
  %904 = vmatpush1.xpose.msra.mxu0 0.0
  %905 = vmatprep.subr.mxu0 0.0
  %906 = vmatpush1.xpose.msra.mxu0 0.0
  %907 = vmatprep.subr.mxu0 0.0
  %908 = vmatpush1.xpose.msra.mxu0 0.0
  %909 = vmatprep.subr.mxu0 0.0
  %910 = vmatpush1.xpose.msra.mxu0 0.0
  %911 = vmatprep.subr.mxu0 0.0
  %912 = vmatpush1.xpose.msra.mxu0 0.0
  %913 = vmatprep.subr.mxu0 0.0
  %914 = vmatpush1.xpose.msra.mxu0 0.0
  %915 = vmatprep.subr.mxu0 0.0
  %916 = vmatpush1.xpose.msra.mxu0 0.0
  %917 = vmatprep.subr.mxu0 0.0
  %918 = vmatpush1.xpose.msra.mxu0 0.0
  %919 = vmatprep.subr.mxu0 0.0
  %920 = vmatpush1.xpose.msra.mxu0 0.0
  %921 = vmatprep.subr.mxu0 0.0
  %922 = vmatpush1.xpose.msra.mxu0 0.0
  %923 = vmatprep.subr.mxu0 0.0
  %924 = vmatpush1.xpose.msra.mxu0 0.0
  %925 = vmatprep.subr.mxu0 0.0
  %926 = vmatpush1.xpose.msra.mxu0 0.0
  %927 = vmatprep.subr.mxu0 0.0
  %928 = vmatpush1.xpose.msra.mxu0 0.0
  %929 = vmatprep.subr.mxu0 0.0
  %930 = vmatpush1.xpose.msra.mxu0 0.0
  %931 = vmatprep.subr.mxu0 0.0
  %932 = vmatpush1.xpose.msra.mxu0 0.0
  %933 = vmatprep.subr.mxu0 0.0
  %934 = vmatpush1.xpose.msra.mxu0 0.0
  %935 = vmatprep.subr.mxu0 0.0
  %936 = vmatpush1.xpose.msra.mxu0 0.0
  %937 = vmatprep.subr.mxu0 0.0
  %938 = vmatpush1.xpose.msra.mxu0 0.0
  %939 = vmatprep.subr.mxu0 0.0
  %940 = vmatpush1.xpose.msra.mxu0 0.0
  %941 = vmatprep.mubr.f32.mxu0 0.0
  %942 = vmatmul.mubr.f32.gmra.mrb[0].mxu0 %v869
  %v943 = vpop.f32.mrb[0].mxu0
  %v944 = vadd.f32 0.0, %v943
  %v945 = vpop.f32.mrb[0].mxu0
  %946 = vmatprep.mubr.f32.mxu0 0.0
  %947 = vmatmul.mubr.f32.gmra.mrb[0].mxu0 %v871
  %v948 = vpop.f32.mrb[0].mxu0
  %v949 = vadd.f32 0.0, %v948
  %v950 = vpop.f32.mrb[0].mxu0
  %951 = vdwg.mxu0
  %952 = vrot.lane.b32.xlu0 %v339, 96
  %v953 = vpop.permute.xlu0 %952
  %954 = vrot.lane.b32.xlu0 %v341, 96
  %v955 = vpop.permute.xlu0 %954
  %v956 = vsel %vm346, %v339, 0
  %v958 = vsel %vm346, %v341, 0
  %v960 = vsel %vm346, %v953, 0
  %v962 = vsel %vm346, %v955, 0
  %964 = vmatprep.subr.mxu0 0.0
  %965 = vmatpush1.xpose.msra.mxu0 %v960
  %966 = vmatprep.subr.mxu0 0.0
  %967 = vmatpush1.xpose.msra.mxu0 %v962
  %968 = vmatprep.subr.mxu0 0.0
  %969 = vmatpush1.xpose.msra.mxu0 0.0
  %970 = vmatprep.subr.mxu0 0.0
  %971 = vmatpush1.xpose.msra.mxu0 0.0
  %972 = vmatprep.subr.mxu0 0.0
  %973 = vmatpush1.xpose.msra.mxu0 0.0
  %974 = vmatprep.subr.mxu0 0.0
  %975 = vmatpush1.xpose.msra.mxu0 0.0
  %976 = vmatprep.subr.mxu0 0.0
  %977 = vmatpush1.xpose.msra.mxu0 0.0
  %978 = vmatprep.subr.mxu0 0.0
  %979 = vmatpush1.xpose.msra.mxu0 0.0
  %980 = vmatprep.subr.mxu0 0.0
  %981 = vmatpush1.xpose.msra.mxu0 0.0
  %982 = vmatprep.subr.mxu0 0.0
  %983 = vmatpush1.xpose.msra.mxu0 0.0
  %984 = vmatprep.subr.mxu0 0.0
  %985 = vmatpush1.xpose.msra.mxu0 0.0
  %986 = vmatprep.subr.mxu0 0.0
  %987 = vmatpush1.xpose.msra.mxu0 0.0
  %988 = vmatprep.subr.mxu0 0.0
  %989 = vmatpush1.xpose.msra.mxu0 0.0
  %990 = vmatprep.subr.mxu0 0.0
  %991 = vmatpush1.xpose.msra.mxu0 0.0
  %992 = vmatprep.subr.mxu0 0.0
  %993 = vmatpush1.xpose.msra.mxu0 0.0
  %994 = vmatprep.subr.mxu0 0.0
  %995 = vmatpush1.xpose.msra.mxu0 0.0
  %996 = vmatprep.subr.mxu0 0.0
  %997 = vmatpush1.xpose.msra.mxu0 0.0
  %998 = vmatprep.subr.mxu0 0.0
  %999 = vmatpush1.xpose.msra.mxu0 0.0
  %1000 = vmatprep.subr.mxu0 0.0
  %1001 = vmatpush1.xpose.msra.mxu0 0.0
  %1002 = vmatprep.subr.mxu0 0.0
  %1003 = vmatpush1.xpose.msra.mxu0 0.0
  %1004 = vmatprep.subr.mxu0 0.0
  %1005 = vmatpush1.xpose.msra.mxu0 0.0
  %1006 = vmatprep.subr.mxu0 0.0
  %1007 = vmatpush1.xpose.msra.mxu0 0.0
  %1008 = vmatprep.subr.mxu0 0.0
  %1009 = vmatpush1.xpose.msra.mxu0 0.0
  %1010 = vmatprep.subr.mxu0 0.0
  %1011 = vmatpush1.xpose.msra.mxu0 0.0
  %1012 = vmatprep.subr.mxu0 0.0
  %1013 = vmatpush1.xpose.msra.mxu0 0.0
  %1014 = vmatprep.subr.mxu0 0.0
  %1015 = vmatpush1.xpose.msra.mxu0 0.0
  %1016 = vmatprep.subr.mxu0 0.0
  %1017 = vmatpush1.xpose.msra.mxu0 0.0
  %1018 = vmatprep.subr.mxu0 0.0
  %1019 = vmatpush1.xpose.msra.mxu0 0.0
  %1020 = vmatprep.subr.mxu0 0.0
  %1021 = vmatpush1.xpose.msra.mxu0 0.0
  %1022 = vmatprep.subr.mxu0 0.0
  %1023 = vmatpush1.xpose.msra.mxu0 0.0
  %1024 = vmatprep.subr.mxu0 0.0
  %1025 = vmatpush1.xpose.msra.mxu0 0.0
  %1026 = vmatprep.subr.mxu0 0.0
  %1027 = vmatpush1.xpose.msra.mxu0 0.0
  %1028 = vmatprep.mubr.f32.mxu0 0.0
  %1029 = vmatmul.mubr.f32.gmra.mrb[0].mxu0 %v956
  %v1030 = vpop.f32.mrb[0].mxu0
  %v1031 = vadd.f32 0.0, %v1030
  %v1032 = vpop.f32.mrb[0].mxu0
  %1033 = vmatprep.mubr.f32.mxu0 0.0
  %1034 = vmatmul.mubr.f32.gmra.mrb[0].mxu0 %v958
  %v1035 = vpop.f32.mrb[0].mxu0
  %v1036 = vadd.f32 0.0, %v1035
  %v1037 = vpop.f32.mrb[0].mxu0
  %1038 = vdwg.mxu0
  %v1039 = vsel %vm63, %v422, -inf
  %1040 = vmax.xlane.f32.xlu0 %v1039
  %v1041 = vpop.xlane.xlu0 %1040
  %vm1042 = vcmask 65536
  %v1043 = vsel %vm1042, %v427, -inf
  %1044 = vmax.xlane.f32.xlu0 %v1043
  %v1045 = vpop.xlane.xlu0 %1044
  %v1046 = vsel %vm63, %v509, -inf
  %1047 = vmax.xlane.f32.xlu0 %v1046
  %v1048 = vpop.xlane.xlu0 %1047
  %v1049 = vsel %vm1042, %v514, -inf
  %1050 = vmax.xlane.f32.xlu0 %v1049
  %v1051 = vpop.xlane.xlu0 %1050
  %v1052 = vsel %vm63, %v596, -inf
  %1053 = vmax.xlane.f32.xlu0 %v1052
  %v1054 = vpop.xlane.xlu0 %1053
  %v1055 = vsel %vm1042, %v601, -inf
  %1056 = vmax.xlane.f32.xlu0 %v1055
  %v1057 = vpop.xlane.xlu0 %1056
  %v1058 = vsel %vm63, %v683, -inf
  %1059 = vmax.xlane.f32.xlu0 %v1058
  %v1060 = vpop.xlane.xlu0 %1059
  %v1061 = vsel %vm1042, %v688, -inf
  %1062 = vmax.xlane.f32.xlu0 %v1061
  %v1063 = vpop.xlane.xlu0 %1062
  %v1064 = vsel %vm63, %v770, -inf
  %1065 = vmax.xlane.f32.xlu0 %v1064
  %v1066 = vpop.xlane.xlu0 %1065
  %v1067 = vsel %vm1042, %v775, -inf
  %1068 = vmax.xlane.f32.xlu0 %v1067
  %v1069 = vpop.xlane.xlu0 %1068
  %v1070 = vsel %vm63, %v857, -inf
  %1071 = vmax.xlane.f32.xlu0 %v1070
  %v1072 = vpop.xlane.xlu0 %1071
  %v1073 = vsel %vm1042, %v862, -inf
  %1074 = vmax.xlane.f32.xlu0 %v1073
  %v1075 = vpop.xlane.xlu0 %1074
  %v1076 = vsel %vm63, %v944, -inf
  %1077 = vmax.xlane.f32.xlu0 %v1076
  %v1078 = vpop.xlane.xlu0 %1077
  %v1079 = vsel %vm1042, %v949, -inf
  %1080 = vmax.xlane.f32.xlu0 %v1079
  %v1081 = vpop.xlane.xlu0 %1080
  %v1082 = vsel %vm63, %v1031, -inf
  %1083 = vmax.xlane.f32.xlu0 %v1082
  %v1084 = vpop.xlane.xlu0 %1083
  %v1085 = vsel %vm1042, %v1036, -inf
  %1086 = vmax.xlane.f32.xlu0 %v1085
  %v1087 = vpop.xlane.xlu0 %1086
  %v1088 = vsub.f32 %v422, %v1041
  %v1089 = vsub.f32 %v427, %v1045
  %v1090 = vsub.f32 %v509, %v1048
  %v1091 = vsub.f32 %v514, %v1051
  %v1092 = vsub.f32 %v596, %v1054
  %v1093 = vsub.f32 %v601, %v1057
  %v1094 = vsub.f32 %v683, %v1060
  %v1095 = vsub.f32 %v688, %v1063
  %v1096 = vsub.f32 %v770, %v1066
  %v1097 = vsub.f32 %v775, %v1069
  %v1098 = vsub.f32 %v857, %v1072
  %v1099 = vsub.f32 %v862, %v1075
  %v1100 = vsub.f32 %v944, %v1078
  %v1101 = vsub.f32 %v949, %v1081
  %v1102 = vsub.f32 %v1031, %v1084
  %v1103 = vsub.f32 %v1036, %v1087
  %v1104 = vmul.f32 %v1088, 1.442695
  %v1105 = vpow.pop %v1104
  %v1106 = vmul.f32 %v1089, 1.442695
  %v1107 = vpow.pop %v1106
  %v1108 = vmul.f32 %v1090, 1.442695
  %v1109 = vpow.pop %v1108
  %v1110 = vmul.f32 %v1091, 1.442695
  %v1111 = vpow.pop %v1110
  %v1112 = vmul.f32 %v1092, 1.442695
  %v1113 = vpow.pop %v1112
  %v1114 = vmul.f32 %v1093, 1.442695
  %v1115 = vpow.pop %v1114
  %v1116 = vmul.f32 %v1094, 1.442695
  %v1117 = vpow.pop %v1116
  %v1118 = vmul.f32 %v1095, 1.442695
  %v1119 = vpow.pop %v1118
  %v1120 = vmul.f32 %v1096, 1.442695
  %v1121 = vpow.pop %v1120
  %v1122 = vmul.f32 %v1097, 1.442695
  %v1123 = vpow.pop %v1122
  %v1124 = vmul.f32 %v1098, 1.442695
  %v1125 = vpow.pop %v1124
  %v1126 = vmul.f32 %v1099, 1.442695
  %v1127 = vpow.pop %v1126
  %v1128 = vmul.f32 %v1100, 1.442695
  %v1129 = vpow.pop %v1128
  %v1130 = vmul.f32 %v1101, 1.442695
  %v1131 = vpow.pop %v1130
  %v1132 = vmul.f32 %v1102, 1.442695
  %v1133 = vpow.pop %v1132
  %v1134 = vmul.f32 %v1103, 1.442695
  %v1135 = vpow.pop %v1134
  %v1136 = vsel %vm63, %v1105, 0.0
  %1137 = vadd.xlane.f32.xlu0 %v1136
  %v1138 = vpop.xlane.xlu0 %1137
  %v1139 = vsel %vm1042, %v1107, 0.0
  %1140 = vadd.xlane.f32.xlu0 %v1139
  %v1141 = vpop.xlane.xlu0 %1140
  %v1142 = vsel %vm63, %v1109, 0.0
  %1143 = vadd.xlane.f32.xlu0 %v1142
  %v1144 = vpop.xlane.xlu0 %1143
  %v1145 = vsel %vm1042, %v1111, 0.0
  %1146 = vadd.xlane.f32.xlu0 %v1145
  %v1147 = vpop.xlane.xlu0 %1146
  %v1148 = vsel %vm63, %v1113, 0.0
  %1149 = vadd.xlane.f32.xlu0 %v1148
  %v1150 = vpop.xlane.xlu0 %1149
  %v1151 = vsel %vm1042, %v1115, 0.0
  %1152 = vadd.xlane.f32.xlu0 %v1151
  %v1153 = vpop.xlane.xlu0 %1152
  %v1154 = vsel %vm63, %v1117, 0.0
  %1155 = vadd.xlane.f32.xlu0 %v1154
  %v1156 = vpop.xlane.xlu0 %1155
  %v1157 = vsel %vm1042, %v1119, 0.0
  %1158 = vadd.xlane.f32.xlu0 %v1157
  %v1159 = vpop.xlane.xlu0 %1158
  %v1160 = vsel %vm63, %v1121, 0.0
  %1161 = vadd.xlane.f32.xlu0 %v1160
  %v1162 = vpop.xlane.xlu0 %1161
  %v1163 = vsel %vm1042, %v1123, 0.0
  %1164 = vadd.xlane.f32.xlu0 %v1163
  %v1165 = vpop.xlane.xlu0 %1164
  %v1166 = vsel %vm63, %v1125, 0.0
  %1167 = vadd.xlane.f32.xlu0 %v1166
  %v1168 = vpop.xlane.xlu0 %1167
  %v1169 = vsel %vm1042, %v1127, 0.0
  %1170 = vadd.xlane.f32.xlu0 %v1169
  %v1171 = vpop.xlane.xlu0 %1170
  %v1172 = vsel %vm63, %v1129, 0.0
  %1173 = vadd.xlane.f32.xlu0 %v1172
  %v1174 = vpop.xlane.xlu0 %1173
  %v1175 = vsel %vm1042, %v1131, 0.0
  %1176 = vadd.xlane.f32.xlu0 %v1175
  %v1177 = vpop.xlane.xlu0 %1176
  %v1178 = vsel %vm63, %v1133, 0.0
  %1179 = vadd.xlane.f32.xlu0 %v1178
  %v1180 = vpop.xlane.xlu0 %1179
  %v1181 = vsel %vm1042, %v1135, 0.0
  %1182 = vadd.xlane.f32.xlu0 %v1181
  %v1183 = vpop.xlane.xlu0 %1182
  %v1184 = vrcp.pop %v1138
  %v1185 = vrcp.pop %v1141
  %v1186 = vrcp.pop %v1144
  %v1187 = vrcp.pop %v1147
  %v1188 = vrcp.pop %v1150
  %v1189 = vrcp.pop %v1153
  %v1190 = vrcp.pop %v1156
  %v1191 = vrcp.pop %v1159
  %v1192 = vrcp.pop %v1162
  %v1193 = vrcp.pop %v1165
  %v1194 = vrcp.pop %v1168
  %v1195 = vrcp.pop %v1171
  %v1196 = vrcp.pop %v1174
  %v1197 = vrcp.pop %v1177
  %v1198 = vrcp.pop %v1180
  %v1199 = vrcp.pop %v1183
  %v1200 = vmul.f32 %v1105, %v1184
  %v1201 = vmul.f32 %v1107, %v1185
  %v1202 = vmul.f32 %v1109, %v1186
  %v1203 = vmul.f32 %v1111, %v1187
  %v1204 = vmul.f32 %v1113, %v1188
  %v1205 = vmul.f32 %v1115, %v1189
  %v1206 = vmul.f32 %v1117, %v1190
  %v1207 = vmul.f32 %v1119, %v1191
  %v1208 = vmul.f32 %v1121, %v1192
  %v1209 = vmul.f32 %v1123, %v1193
  %v1210 = vmul.f32 %v1125, %v1194
  %v1211 = vmul.f32 %v1127, %v1195
  %v1212 = vmul.f32 %v1129, %v1196
  %v1213 = vmul.f32 %v1131, %v1197
  %v1214 = vmul.f32 %v1133, %v1198
  %v1215 = vmul.f32 %v1135, %v1199
  %1216 = vrot.lane.b32.xlu0 %v298, 64
  %v1217 = vpop.permute.xlu0 %1216
  %1218 = vrot.lane.b32.xlu0 %v303, 64
  %v1219 = vpop.permute.xlu0 %1218
  %v1222 = vsel %vm63, %v1200, 0
  %v1225 = vsel %vm63, %v1201, 0
  %v1227 = vsel %vm56, %v1219, 0
  %1229 = vmatprep.subr.mxu0 0.0
  %1230 = vmatpush1.msra.mxu0 %v1217
  %1231 = vmatprep.subr.mxu0 0.0
  %1232 = vmatpush1.msra.mxu0 %v1227
  %1233 = vmatprep.subr.mxu0 0.0
  %1234 = vmatpush1.msra.mxu0 0.0
  %1235 = vmatprep.subr.mxu0 0.0
  %1236 = vmatpush1.msra.mxu0 0.0
  %1237 = vmatprep.subr.mxu0 0.0
  %1238 = vmatpush1.msra.mxu0 0.0
  %1239 = vmatprep.subr.mxu0 0.0
  %1240 = vmatpush1.msra.mxu0 0.0
  %1241 = vmatprep.subr.mxu0 0.0
  %1242 = vmatpush1.msra.mxu0 0.0
  %1243 = vmatprep.subr.mxu0 0.0
  %1244 = vmatpush1.msra.mxu0 0.0
  %1245 = vmatprep.subr.mxu0 0.0
  %1246 = vmatpush1.msra.mxu0 0.0
  %1247 = vmatprep.subr.mxu0 0.0
  %1248 = vmatpush1.msra.mxu0 0.0
  %1249 = vmatprep.subr.mxu0 0.0
  %1250 = vmatpush1.msra.mxu0 0.0
  %1251 = vmatprep.subr.mxu0 0.0
  %1252 = vmatpush1.msra.mxu0 0.0
  %1253 = vmatprep.subr.mxu0 0.0
  %1254 = vmatpush1.msra.mxu0 0.0
  %1255 = vmatprep.subr.mxu0 0.0
  %1256 = vmatpush1.msra.mxu0 0.0
  %1257 = vmatprep.subr.mxu0 0.0
  %1258 = vmatpush1.msra.mxu0 0.0
  %1259 = vmatprep.subr.mxu0 0.0
  %1260 = vmatpush1.msra.mxu0 0.0
  %1261 = vmatprep.subr.mxu0 0.0
  %1262 = vmatpush1.msra.mxu0 0.0
  %1263 = vmatprep.subr.mxu0 0.0
  %1264 = vmatpush1.msra.mxu0 0.0
  %1265 = vmatprep.subr.mxu0 0.0
  %1266 = vmatpush1.msra.mxu0 0.0
  %1267 = vmatprep.subr.mxu0 0.0
  %1268 = vmatpush1.msra.mxu0 0.0
  %1269 = vmatprep.subr.mxu0 0.0
  %1270 = vmatpush1.msra.mxu0 0.0
  %1271 = vmatprep.subr.mxu0 0.0
  %1272 = vmatpush1.msra.mxu0 0.0
  %1273 = vmatprep.subr.mxu0 0.0
  %1274 = vmatpush1.msra.mxu0 0.0
  %1275 = vmatprep.subr.mxu0 0.0
  %1276 = vmatpush1.msra.mxu0 0.0
  %1277 = vmatprep.subr.mxu0 0.0
  %1278 = vmatpush1.msra.mxu0 0.0
  %1279 = vmatprep.subr.mxu0 0.0
  %1280 = vmatpush1.msra.mxu0 0.0
  %1281 = vmatprep.subr.mxu0 0.0
  %1282 = vmatpush1.msra.mxu0 0.0
  %1283 = vmatprep.subr.mxu0 0.0
  %1284 = vmatpush1.msra.mxu0 0.0
  %1285 = vmatprep.subr.mxu0 0.0
  %1286 = vmatpush1.msra.mxu0 0.0
  %1287 = vmatprep.subr.mxu0 0.0
  %1288 = vmatpush1.msra.mxu0 0.0
  %1289 = vmatprep.subr.mxu0 0.0
  %1290 = vmatpush1.msra.mxu0 0.0
  %1291 = vmatprep.subr.mxu0 0.0
  %1292 = vmatpush1.msra.mxu0 0.0
  %1293 = vmatprep.mubr.f32.mxu0 0.0
  %1294 = vmatmul.mubr.f32.gmra.mrb[0].mxu0 %v1222
  %v1295 = vpop.f32.mrb[0].mxu0
  %v1296 = vadd.f32 0.0, %v1295
  %v1297 = vpop.f32.mrb[0].mxu0
  %1298 = vmatprep.mubr.f32.mxu0 0.0
  %1299 = vmatmul.mubr.f32.gmra.mrb[0].mxu0 %v1225
  %v1300 = vpop.f32.mrb[0].mxu0
  %v1301 = vadd.f32 0.0, %v1300
  %v1302 = vpop.f32.mrb[0].mxu0
  %1303 = vdwg.mxu0
  %1304 = vrot.lane.b32.xlu0 %v314, 64
  %v1305 = vpop.permute.xlu0 %1304
  %1306 = vrot.lane.b32.xlu0 %v316, 64
  %v1307 = vpop.permute.xlu0 %1306
  %v1310 = vsel %vm63, %v1202, 0
  %v1313 = vsel %vm63, %v1203, 0
  %v1315 = vsel %vm56, %v1307, 0
  %1317 = vmatprep.subr.mxu0 0.0
  %1318 = vmatpush1.msra.mxu0 %v1305
  %1319 = vmatprep.subr.mxu0 0.0
  %1320 = vmatpush1.msra.mxu0 %v1315
  %1321 = vmatprep.subr.mxu0 0.0
  %1322 = vmatpush1.msra.mxu0 0.0
  %1323 = vmatprep.subr.mxu0 0.0
  %1324 = vmatpush1.msra.mxu0 0.0
  %1325 = vmatprep.subr.mxu0 0.0
  %1326 = vmatpush1.msra.mxu0 0.0
  %1327 = vmatprep.subr.mxu0 0.0
  %1328 = vmatpush1.msra.mxu0 0.0
  %1329 = vmatprep.subr.mxu0 0.0
  %1330 = vmatpush1.msra.mxu0 0.0
  %1331 = vmatprep.subr.mxu0 0.0
  %1332 = vmatpush1.msra.mxu0 0.0
  %1333 = vmatprep.subr.mxu0 0.0
  %1334 = vmatpush1.msra.mxu0 0.0
  %1335 = vmatprep.subr.mxu0 0.0
  %1336 = vmatpush1.msra.mxu0 0.0
  %1337 = vmatprep.subr.mxu0 0.0
  %1338 = vmatpush1.msra.mxu0 0.0
  %1339 = vmatprep.subr.mxu0 0.0
  %1340 = vmatpush1.msra.mxu0 0.0
  %1341 = vmatprep.subr.mxu0 0.0
  %1342 = vmatpush1.msra.mxu0 0.0
  %1343 = vmatprep.subr.mxu0 0.0
  %1344 = vmatpush1.msra.mxu0 0.0
  %1345 = vmatprep.subr.mxu0 0.0
  %1346 = vmatpush1.msra.mxu0 0.0
  %1347 = vmatprep.subr.mxu0 0.0
  %1348 = vmatpush1.msra.mxu0 0.0
  %1349 = vmatprep.subr.mxu0 0.0
  %1350 = vmatpush1.msra.mxu0 0.0
  %1351 = vmatprep.subr.mxu0 0.0
  %1352 = vmatpush1.msra.mxu0 0.0
  %1353 = vmatprep.subr.mxu0 0.0
  %1354 = vmatpush1.msra.mxu0 0.0
  %1355 = vmatprep.subr.mxu0 0.0
  %1356 = vmatpush1.msra.mxu0 0.0
  %1357 = vmatprep.subr.mxu0 0.0
  %1358 = vmatpush1.msra.mxu0 0.0
  %1359 = vmatprep.subr.mxu0 0.0
  %1360 = vmatpush1.msra.mxu0 0.0
  %1361 = vmatprep.subr.mxu0 0.0
  %1362 = vmatpush1.msra.mxu0 0.0
  %1363 = vmatprep.subr.mxu0 0.0
  %1364 = vmatpush1.msra.mxu0 0.0
  %1365 = vmatprep.subr.mxu0 0.0
  %1366 = vmatpush1.msra.mxu0 0.0
  %1367 = vmatprep.subr.mxu0 0.0
  %1368 = vmatpush1.msra.mxu0 0.0
  %1369 = vmatprep.subr.mxu0 0.0
  %1370 = vmatpush1.msra.mxu0 0.0
  %1371 = vmatprep.subr.mxu0 0.0
  %1372 = vmatpush1.msra.mxu0 0.0
  %1373 = vmatprep.subr.mxu0 0.0
  %1374 = vmatpush1.msra.mxu0 0.0
  %1375 = vmatprep.subr.mxu0 0.0
  %1376 = vmatpush1.msra.mxu0 0.0
  %1377 = vmatprep.subr.mxu0 0.0
  %1378 = vmatpush1.msra.mxu0 0.0
  %1379 = vmatprep.subr.mxu0 0.0
  %1380 = vmatpush1.msra.mxu0 0.0
  %1381 = vmatprep.mubr.f32.mxu0 0.0
  %1382 = vmatmul.mubr.f32.gmra.mrb[0].mxu0 %v1310
  %v1383 = vpop.f32.mrb[0].mxu0
  %v1384 = vadd.f32 0.0, %v1383
  %v1385 = vpop.f32.mrb[0].mxu0
  %1386 = vmatprep.mubr.f32.mxu0 0.0
  %1387 = vmatmul.mubr.f32.gmra.mrb[0].mxu0 %v1313
  %v1388 = vpop.f32.mrb[0].mxu0
  %v1389 = vadd.f32 0.0, %v1388
  %v1390 = vpop.f32.mrb[0].mxu0
  %1391 = vdwg.mxu0
  %1392 = vrot.lane.b32.xlu0 %v318, 64
  %v1393 = vpop.permute.xlu0 %1392
  %1394 = vrot.lane.b32.xlu0 %v320, 64
  %v1395 = vpop.permute.xlu0 %1394
  %v1398 = vsel %vm63, %v1204, 0
  %v1401 = vsel %vm63, %v1205, 0
  %v1403 = vsel %vm56, %v1395, 0
  %1405 = vmatprep.subr.mxu0 0.0
  %1406 = vmatpush1.msra.mxu0 %v1393
  %1407 = vmatprep.subr.mxu0 0.0
  %1408 = vmatpush1.msra.mxu0 %v1403
  %1409 = vmatprep.subr.mxu0 0.0
  %1410 = vmatpush1.msra.mxu0 0.0
  %1411 = vmatprep.subr.mxu0 0.0
  %1412 = vmatpush1.msra.mxu0 0.0
  %1413 = vmatprep.subr.mxu0 0.0
  %1414 = vmatpush1.msra.mxu0 0.0
  %1415 = vmatprep.subr.mxu0 0.0
  %1416 = vmatpush1.msra.mxu0 0.0
  %1417 = vmatprep.subr.mxu0 0.0
  %1418 = vmatpush1.msra.mxu0 0.0
  %1419 = vmatprep.subr.mxu0 0.0
  %1420 = vmatpush1.msra.mxu0 0.0
  %1421 = vmatprep.subr.mxu0 0.0
  %1422 = vmatpush1.msra.mxu0 0.0
  %1423 = vmatprep.subr.mxu0 0.0
  %1424 = vmatpush1.msra.mxu0 0.0
  %1425 = vmatprep.subr.mxu0 0.0
  %1426 = vmatpush1.msra.mxu0 0.0
  %1427 = vmatprep.subr.mxu0 0.0
  %1428 = vmatpush1.msra.mxu0 0.0
  %1429 = vmatprep.subr.mxu0 0.0
  %1430 = vmatpush1.msra.mxu0 0.0
  %1431 = vmatprep.subr.mxu0 0.0
  %1432 = vmatpush1.msra.mxu0 0.0
  %1433 = vmatprep.subr.mxu0 0.0
  %1434 = vmatpush1.msra.mxu0 0.0
  %1435 = vmatprep.subr.mxu0 0.0
  %1436 = vmatpush1.msra.mxu0 0.0
  %1437 = vmatprep.subr.mxu0 0.0
  %1438 = vmatpush1.msra.mxu0 0.0
  %1439 = vmatprep.subr.mxu0 0.0
  %1440 = vmatpush1.msra.mxu0 0.0
  %1441 = vmatprep.subr.mxu0 0.0
  %1442 = vmatpush1.msra.mxu0 0.0
  %1443 = vmatprep.subr.mxu0 0.0
  %1444 = vmatpush1.msra.mxu0 0.0
  %1445 = vmatprep.subr.mxu0 0.0
  %1446 = vmatpush1.msra.mxu0 0.0
  %1447 = vmatprep.subr.mxu0 0.0
  %1448 = vmatpush1.msra.mxu0 0.0
  %1449 = vmatprep.subr.mxu0 0.0
  %1450 = vmatpush1.msra.mxu0 0.0
  %1451 = vmatprep.subr.mxu0 0.0
  %1452 = vmatpush1.msra.mxu0 0.0
  %1453 = vmatprep.subr.mxu0 0.0
  %1454 = vmatpush1.msra.mxu0 0.0
  %1455 = vmatprep.subr.mxu0 0.0
  %1456 = vmatpush1.msra.mxu0 0.0
  %1457 = vmatprep.subr.mxu0 0.0
  %1458 = vmatpush1.msra.mxu0 0.0
  %1459 = vmatprep.subr.mxu0 0.0
  %1460 = vmatpush1.msra.mxu0 0.0
  %1461 = vmatprep.subr.mxu0 0.0
  %1462 = vmatpush1.msra.mxu0 0.0
  %1463 = vmatprep.subr.mxu0 0.0
  %1464 = vmatpush1.msra.mxu0 0.0
  %1465 = vmatprep.subr.mxu0 0.0
  %1466 = vmatpush1.msra.mxu0 0.0
  %1467 = vmatprep.subr.mxu0 0.0
  %1468 = vmatpush1.msra.mxu0 0.0
  %1469 = vmatprep.mubr.f32.mxu0 0.0
  %1470 = vmatmul.mubr.f32.gmra.mrb[0].mxu0 %v1398
  %v1471 = vpop.f32.mrb[0].mxu0
  %v1472 = vadd.f32 0.0, %v1471
  %v1473 = vpop.f32.mrb[0].mxu0
  %1474 = vmatprep.mubr.f32.mxu0 0.0
  %1475 = vmatmul.mubr.f32.gmra.mrb[0].mxu0 %v1401
  %v1476 = vpop.f32.mrb[0].mxu0
  %v1477 = vadd.f32 0.0, %v1476
  %v1478 = vpop.f32.mrb[0].mxu0
  %1479 = vdwg.mxu0
  %1480 = vrot.lane.b32.xlu0 %v322, 64
  %v1481 = vpop.permute.xlu0 %1480
  %1482 = vrot.lane.b32.xlu0 %v324, 64
  %v1483 = vpop.permute.xlu0 %1482
  %v1486 = vsel %vm63, %v1206, 0
  %v1489 = vsel %vm63, %v1207, 0
  %v1491 = vsel %vm56, %v1483, 0
  %1493 = vmatprep.subr.mxu0 0.0
  %1494 = vmatpush1.msra.mxu0 %v1481
  %1495 = vmatprep.subr.mxu0 0.0
  %1496 = vmatpush1.msra.mxu0 %v1491
  %1497 = vmatprep.subr.mxu0 0.0
  %1498 = vmatpush1.msra.mxu0 0.0
  %1499 = vmatprep.subr.mxu0 0.0
  %1500 = vmatpush1.msra.mxu0 0.0
  %1501 = vmatprep.subr.mxu0 0.0
  %1502 = vmatpush1.msra.mxu0 0.0
  %1503 = vmatprep.subr.mxu0 0.0
  %1504 = vmatpush1.msra.mxu0 0.0
  %1505 = vmatprep.subr.mxu0 0.0
  %1506 = vmatpush1.msra.mxu0 0.0
  %1507 = vmatprep.subr.mxu0 0.0
  %1508 = vmatpush1.msra.mxu0 0.0
  %1509 = vmatprep.subr.mxu0 0.0
  %1510 = vmatpush1.msra.mxu0 0.0
  %1511 = vmatprep.subr.mxu0 0.0
  %1512 = vmatpush1.msra.mxu0 0.0
  %1513 = vmatprep.subr.mxu0 0.0
  %1514 = vmatpush1.msra.mxu0 0.0
  %1515 = vmatprep.subr.mxu0 0.0
  %1516 = vmatpush1.msra.mxu0 0.0
  %1517 = vmatprep.subr.mxu0 0.0
  %1518 = vmatpush1.msra.mxu0 0.0
  %1519 = vmatprep.subr.mxu0 0.0
  %1520 = vmatpush1.msra.mxu0 0.0
  %1521 = vmatprep.subr.mxu0 0.0
  %1522 = vmatpush1.msra.mxu0 0.0
  %1523 = vmatprep.subr.mxu0 0.0
  %1524 = vmatpush1.msra.mxu0 0.0
  %1525 = vmatprep.subr.mxu0 0.0
  %1526 = vmatpush1.msra.mxu0 0.0
  %1527 = vmatprep.subr.mxu0 0.0
  %1528 = vmatpush1.msra.mxu0 0.0
  %1529 = vmatprep.subr.mxu0 0.0
  %1530 = vmatpush1.msra.mxu0 0.0
  %1531 = vmatprep.subr.mxu0 0.0
  %1532 = vmatpush1.msra.mxu0 0.0
  %1533 = vmatprep.subr.mxu0 0.0
  %1534 = vmatpush1.msra.mxu0 0.0
  %1535 = vmatprep.subr.mxu0 0.0
  %1536 = vmatpush1.msra.mxu0 0.0
  %1537 = vmatprep.subr.mxu0 0.0
  %1538 = vmatpush1.msra.mxu0 0.0
  %1539 = vmatprep.subr.mxu0 0.0
  %1540 = vmatpush1.msra.mxu0 0.0
  %1541 = vmatprep.subr.mxu0 0.0
  %1542 = vmatpush1.msra.mxu0 0.0
  %1543 = vmatprep.subr.mxu0 0.0
  %1544 = vmatpush1.msra.mxu0 0.0
  %1545 = vmatprep.subr.mxu0 0.0
  %1546 = vmatpush1.msra.mxu0 0.0
  %1547 = vmatprep.subr.mxu0 0.0
  %1548 = vmatpush1.msra.mxu0 0.0
  %1549 = vmatprep.subr.mxu0 0.0
  %1550 = vmatpush1.msra.mxu0 0.0
  %1551 = vmatprep.subr.mxu0 0.0
  %1552 = vmatpush1.msra.mxu0 0.0
  %1553 = vmatprep.subr.mxu0 0.0
  %1554 = vmatpush1.msra.mxu0 0.0
  %1555 = vmatprep.subr.mxu0 0.0
  %1556 = vmatpush1.msra.mxu0 0.0
  %1557 = vmatprep.mubr.f32.mxu0 0.0
  %1558 = vmatmul.mubr.f32.gmra.mrb[0].mxu0 %v1486
  %v1559 = vpop.f32.mrb[0].mxu0
  %v1560 = vadd.f32 0.0, %v1559
  %v1561 = vpop.f32.mrb[0].mxu0
  %1562 = vmatprep.mubr.f32.mxu0 0.0
  %1563 = vmatmul.mubr.f32.gmra.mrb[0].mxu0 %v1489
  %v1564 = vpop.f32.mrb[0].mxu0
  %v1565 = vadd.f32 0.0, %v1564
  %v1566 = vpop.f32.mrb[0].mxu0
  %1567 = vdwg.mxu0
  %1568 = vrot.lane.b32.xlu0 %v329, 64
  %v1569 = vpop.permute.xlu0 %1568
  %1570 = vrot.lane.b32.xlu0 %v328, 64
  %v1571 = vpop.permute.xlu0 %1570
  %v1574 = vsel %vm63, %v1208, 0
  %v1577 = vsel %vm63, %v1209, 0
  %v1579 = vsel %vm56, %v1571, 0
  %1581 = vmatprep.subr.mxu0 0.0
  %1582 = vmatpush1.msra.mxu0 %v1569
  %1583 = vmatprep.subr.mxu0 0.0
  %1584 = vmatpush1.msra.mxu0 %v1579
  %1585 = vmatprep.subr.mxu0 0.0
  %1586 = vmatpush1.msra.mxu0 0.0
  %1587 = vmatprep.subr.mxu0 0.0
  %1588 = vmatpush1.msra.mxu0 0.0
  %1589 = vmatprep.subr.mxu0 0.0
  %1590 = vmatpush1.msra.mxu0 0.0
  %1591 = vmatprep.subr.mxu0 0.0
  %1592 = vmatpush1.msra.mxu0 0.0
  %1593 = vmatprep.subr.mxu0 0.0
  %1594 = vmatpush1.msra.mxu0 0.0
  %1595 = vmatprep.subr.mxu0 0.0
  %1596 = vmatpush1.msra.mxu0 0.0
  %1597 = vmatprep.subr.mxu0 0.0
  %1598 = vmatpush1.msra.mxu0 0.0
  %1599 = vmatprep.subr.mxu0 0.0
  %1600 = vmatpush1.msra.mxu0 0.0
  %1601 = vmatprep.subr.mxu0 0.0
  %1602 = vmatpush1.msra.mxu0 0.0
  %1603 = vmatprep.subr.mxu0 0.0
  %1604 = vmatpush1.msra.mxu0 0.0
  %1605 = vmatprep.subr.mxu0 0.0
  %1606 = vmatpush1.msra.mxu0 0.0
  %1607 = vmatprep.subr.mxu0 0.0
  %1608 = vmatpush1.msra.mxu0 0.0
  %1609 = vmatprep.subr.mxu0 0.0
  %1610 = vmatpush1.msra.mxu0 0.0
  %1611 = vmatprep.subr.mxu0 0.0
  %1612 = vmatpush1.msra.mxu0 0.0
  %1613 = vmatprep.subr.mxu0 0.0
  %1614 = vmatpush1.msra.mxu0 0.0
  %1615 = vmatprep.subr.mxu0 0.0
  %1616 = vmatpush1.msra.mxu0 0.0
  %1617 = vmatprep.subr.mxu0 0.0
  %1618 = vmatpush1.msra.mxu0 0.0
  %1619 = vmatprep.subr.mxu0 0.0
  %1620 = vmatpush1.msra.mxu0 0.0
  %1621 = vmatprep.subr.mxu0 0.0
  %1622 = vmatpush1.msra.mxu0 0.0
  %1623 = vmatprep.subr.mxu0 0.0
  %1624 = vmatpush1.msra.mxu0 0.0
  %1625 = vmatprep.subr.mxu0 0.0
  %1626 = vmatpush1.msra.mxu0 0.0
  %1627 = vmatprep.subr.mxu0 0.0
  %1628 = vmatpush1.msra.mxu0 0.0
  %1629 = vmatprep.subr.mxu0 0.0
  %1630 = vmatpush1.msra.mxu0 0.0
  %1631 = vmatprep.subr.mxu0 0.0
  %1632 = vmatpush1.msra.mxu0 0.0
  %1633 = vmatprep.subr.mxu0 0.0
  %1634 = vmatpush1.msra.mxu0 0.0
  %1635 = vmatprep.subr.mxu0 0.0
  %1636 = vmatpush1.msra.mxu0 0.0
  %1637 = vmatprep.subr.mxu0 0.0
  %1638 = vmatpush1.msra.mxu0 0.0
  %1639 = vmatprep.subr.mxu0 0.0
  %1640 = vmatpush1.msra.mxu0 0.0
  %1641 = vmatprep.subr.mxu0 0.0
  %1642 = vmatpush1.msra.mxu0 0.0
  %1643 = vmatprep.subr.mxu0 0.0
  %1644 = vmatpush1.msra.mxu0 0.0
  %1645 = vmatprep.mubr.f32.mxu0 0.0
  %1646 = vmatmul.mubr.f32.gmra.mrb[0].mxu0 %v1574
  %v1647 = vpop.f32.mrb[0].mxu0
  %v1648 = vadd.f32 0.0, %v1647
  %v1649 = vpop.f32.mrb[0].mxu0
  %1650 = vmatprep.mubr.f32.mxu0 0.0
  %1651 = vmatmul.mubr.f32.gmra.mrb[0].mxu0 %v1577
  %v1652 = vpop.f32.mrb[0].mxu0
  %v1653 = vadd.f32 0.0, %v1652
  %v1654 = vpop.f32.mrb[0].mxu0
  %1655 = vdwg.mxu0
  %1656 = vrot.lane.b32.xlu0 %v331, 64
  %v1657 = vpop.permute.xlu0 %1656
  %1658 = vrot.lane.b32.xlu0 %v333, 64
  %v1659 = vpop.permute.xlu0 %1658
  %v1662 = vsel %vm63, %v1210, 0
  %v1665 = vsel %vm63, %v1211, 0
  %v1667 = vsel %vm56, %v1659, 0
  %1669 = vmatprep.subr.mxu0 0.0
  %1670 = vmatpush1.msra.mxu0 %v1657
  %1671 = vmatprep.subr.mxu0 0.0
  %1672 = vmatpush1.msra.mxu0 %v1667
  %1673 = vmatprep.subr.mxu0 0.0
  %1674 = vmatpush1.msra.mxu0 0.0
  %1675 = vmatprep.subr.mxu0 0.0
  %1676 = vmatpush1.msra.mxu0 0.0
  %1677 = vmatprep.subr.mxu0 0.0
  %1678 = vmatpush1.msra.mxu0 0.0
  %1679 = vmatprep.subr.mxu0 0.0
  %1680 = vmatpush1.msra.mxu0 0.0
  %1681 = vmatprep.subr.mxu0 0.0
  %1682 = vmatpush1.msra.mxu0 0.0
  %1683 = vmatprep.subr.mxu0 0.0
  %1684 = vmatpush1.msra.mxu0 0.0
  %1685 = vmatprep.subr.mxu0 0.0
  %1686 = vmatpush1.msra.mxu0 0.0
  %1687 = vmatprep.subr.mxu0 0.0
  %1688 = vmatpush1.msra.mxu0 0.0
  %1689 = vmatprep.subr.mxu0 0.0
  %1690 = vmatpush1.msra.mxu0 0.0
  %1691 = vmatprep.subr.mxu0 0.0
  %1692 = vmatpush1.msra.mxu0 0.0
  %1693 = vmatprep.subr.mxu0 0.0
  %1694 = vmatpush1.msra.mxu0 0.0
  %1695 = vmatprep.subr.mxu0 0.0
  %1696 = vmatpush1.msra.mxu0 0.0
  %1697 = vmatprep.subr.mxu0 0.0
  %1698 = vmatpush1.msra.mxu0 0.0
  %1699 = vmatprep.subr.mxu0 0.0
  %1700 = vmatpush1.msra.mxu0 0.0
  %1701 = vmatprep.subr.mxu0 0.0
  %1702 = vmatpush1.msra.mxu0 0.0
  %1703 = vmatprep.subr.mxu0 0.0
  %1704 = vmatpush1.msra.mxu0 0.0
  %1705 = vmatprep.subr.mxu0 0.0
  %1706 = vmatpush1.msra.mxu0 0.0
  %1707 = vmatprep.subr.mxu0 0.0
  %1708 = vmatpush1.msra.mxu0 0.0
  %1709 = vmatprep.subr.mxu0 0.0
  %1710 = vmatpush1.msra.mxu0 0.0
  %1711 = vmatprep.subr.mxu0 0.0
  %1712 = vmatpush1.msra.mxu0 0.0
  %1713 = vmatprep.subr.mxu0 0.0
  %1714 = vmatpush1.msra.mxu0 0.0
  %1715 = vmatprep.subr.mxu0 0.0
  %1716 = vmatpush1.msra.mxu0 0.0
  %1717 = vmatprep.subr.mxu0 0.0
  %1718 = vmatpush1.msra.mxu0 0.0
  %1719 = vmatprep.subr.mxu0 0.0
  %1720 = vmatpush1.msra.mxu0 0.0
  %1721 = vmatprep.subr.mxu0 0.0
  %1722 = vmatpush1.msra.mxu0 0.0
  %1723 = vmatprep.subr.mxu0 0.0
  %1724 = vmatpush1.msra.mxu0 0.0
  %1725 = vmatprep.subr.mxu0 0.0
  %1726 = vmatpush1.msra.mxu0 0.0
  %1727 = vmatprep.subr.mxu0 0.0
  %1728 = vmatpush1.msra.mxu0 0.0
  %1729 = vmatprep.subr.mxu0 0.0
  %1730 = vmatpush1.msra.mxu0 0.0
  %1731 = vmatprep.subr.mxu0 0.0
  %1732 = vmatpush1.msra.mxu0 0.0
  %1733 = vmatprep.mubr.f32.mxu0 0.0
  %1734 = vmatmul.mubr.f32.gmra.mrb[0].mxu0 %v1662
  %v1735 = vpop.f32.mrb[0].mxu0
  %v1736 = vadd.f32 0.0, %v1735
  %v1737 = vpop.f32.mrb[0].mxu0
  %1738 = vmatprep.mubr.f32.mxu0 0.0
  %1739 = vmatmul.mubr.f32.gmra.mrb[0].mxu0 %v1665
  %v1740 = vpop.f32.mrb[0].mxu0
  %v1741 = vadd.f32 0.0, %v1740
  %v1742 = vpop.f32.mrb[0].mxu0
  %1743 = vdwg.mxu0
  %1744 = vrot.lane.b32.xlu0 %v335, 64
  %v1745 = vpop.permute.xlu0 %1744
  %1746 = vrot.lane.b32.xlu0 %v337, 64
  %v1747 = vpop.permute.xlu0 %1746
  %v1750 = vsel %vm63, %v1212, 0
  %v1753 = vsel %vm63, %v1213, 0
  %v1755 = vsel %vm56, %v1747, 0
  %1757 = vmatprep.subr.mxu0 0.0
  %1758 = vmatpush1.msra.mxu0 %v1745
  %1759 = vmatprep.subr.mxu0 0.0
  %1760 = vmatpush1.msra.mxu0 %v1755
  %1761 = vmatprep.subr.mxu0 0.0
  %1762 = vmatpush1.msra.mxu0 0.0
  %1763 = vmatprep.subr.mxu0 0.0
  %1764 = vmatpush1.msra.mxu0 0.0
  %1765 = vmatprep.subr.mxu0 0.0
  %1766 = vmatpush1.msra.mxu0 0.0
  %1767 = vmatprep.subr.mxu0 0.0
  %1768 = vmatpush1.msra.mxu0 0.0
  %1769 = vmatprep.subr.mxu0 0.0
  %1770 = vmatpush1.msra.mxu0 0.0
  %1771 = vmatprep.subr.mxu0 0.0
  %1772 = vmatpush1.msra.mxu0 0.0
  %1773 = vmatprep.subr.mxu0 0.0
  %1774 = vmatpush1.msra.mxu0 0.0
  %1775 = vmatprep.subr.mxu0 0.0
  %1776 = vmatpush1.msra.mxu0 0.0
  %1777 = vmatprep.subr.mxu0 0.0
  %1778 = vmatpush1.msra.mxu0 0.0
  %1779 = vmatprep.subr.mxu0 0.0
  %1780 = vmatpush1.msra.mxu0 0.0
  %1781 = vmatprep.subr.mxu0 0.0
  %1782 = vmatpush1.msra.mxu0 0.0
  %1783 = vmatprep.subr.mxu0 0.0
  %1784 = vmatpush1.msra.mxu0 0.0
  %1785 = vmatprep.subr.mxu0 0.0
  %1786 = vmatpush1.msra.mxu0 0.0
  %1787 = vmatprep.subr.mxu0 0.0
  %1788 = vmatpush1.msra.mxu0 0.0
  %1789 = vmatprep.subr.mxu0 0.0
  %1790 = vmatpush1.msra.mxu0 0.0
  %1791 = vmatprep.subr.mxu0 0.0
  %1792 = vmatpush1.msra.mxu0 0.0
  %1793 = vmatprep.subr.mxu0 0.0
  %1794 = vmatpush1.msra.mxu0 0.0
  %1795 = vmatprep.subr.mxu0 0.0
  %1796 = vmatpush1.msra.mxu0 0.0
  %1797 = vmatprep.subr.mxu0 0.0
  %1798 = vmatpush1.msra.mxu0 0.0
  %1799 = vmatprep.subr.mxu0 0.0
  %1800 = vmatpush1.msra.mxu0 0.0
  %1801 = vmatprep.subr.mxu0 0.0
  %1802 = vmatpush1.msra.mxu0 0.0
  %1803 = vmatprep.subr.mxu0 0.0
  %1804 = vmatpush1.msra.mxu0 0.0
  %1805 = vmatprep.subr.mxu0 0.0
  %1806 = vmatpush1.msra.mxu0 0.0
  %1807 = vmatprep.subr.mxu0 0.0
  %1808 = vmatpush1.msra.mxu0 0.0
  %1809 = vmatprep.subr.mxu0 0.0
  %1810 = vmatpush1.msra.mxu0 0.0
  %1811 = vmatprep.subr.mxu0 0.0
  %1812 = vmatpush1.msra.mxu0 0.0
  %1813 = vmatprep.subr.mxu0 0.0
  %1814 = vmatpush1.msra.mxu0 0.0
  %1815 = vmatprep.subr.mxu0 0.0
  %1816 = vmatpush1.msra.mxu0 0.0
  %1817 = vmatprep.subr.mxu0 0.0
  %1818 = vmatpush1.msra.mxu0 0.0
  %1819 = vmatprep.subr.mxu0 0.0
  %1820 = vmatpush1.msra.mxu0 0.0
  %1821 = vmatprep.mubr.f32.mxu0 0.0
  %1822 = vmatmul.mubr.f32.gmra.mrb[0].mxu0 %v1750
  %v1823 = vpop.f32.mrb[0].mxu0
  %v1824 = vadd.f32 0.0, %v1823
  %v1825 = vpop.f32.mrb[0].mxu0
  %1826 = vmatprep.mubr.f32.mxu0 0.0
  %1827 = vmatmul.mubr.f32.gmra.mrb[0].mxu0 %v1753
  %v1828 = vpop.f32.mrb[0].mxu0
  %v1829 = vadd.f32 0.0, %v1828
  %v1830 = vpop.f32.mrb[0].mxu0
  %1831 = vdwg.mxu0
  %1832 = vrot.lane.b32.xlu0 %v339, 64
  %v1833 = vpop.permute.xlu0 %1832
  %1834 = vrot.lane.b32.xlu0 %v341, 64
  %v1835 = vpop.permute.xlu0 %1834
  %v1838 = vsel %vm63, %v1214, 0
  %v1841 = vsel %vm63, %v1215, 0
  %v1843 = vsel %vm56, %v1835, 0
  %1845 = vmatprep.subr.mxu0 0.0
  %1846 = vmatpush1.msra.mxu0 %v1833
  %1847 = vmatprep.subr.mxu0 0.0
  %1848 = vmatpush1.msra.mxu0 %v1843
  %1849 = vmatprep.subr.mxu0 0.0
  %1850 = vmatpush1.msra.mxu0 0.0
  %1851 = vmatprep.subr.mxu0 0.0
  %1852 = vmatpush1.msra.mxu0 0.0
  %1853 = vmatprep.subr.mxu0 0.0
  %1854 = vmatpush1.msra.mxu0 0.0
  %1855 = vmatprep.subr.mxu0 0.0
  %1856 = vmatpush1.msra.mxu0 0.0
  %1857 = vmatprep.subr.mxu0 0.0
  %1858 = vmatpush1.msra.mxu0 0.0
  %1859 = vmatprep.subr.mxu0 0.0
  %1860 = vmatpush1.msra.mxu0 0.0
  %1861 = vmatprep.subr.mxu0 0.0
  %1862 = vmatpush1.msra.mxu0 0.0
  %1863 = vmatprep.subr.mxu0 0.0
  %1864 = vmatpush1.msra.mxu0 0.0
  %1865 = vmatprep.subr.mxu0 0.0
  %1866 = vmatpush1.msra.mxu0 0.0
  %1867 = vmatprep.subr.mxu0 0.0
  %1868 = vmatpush1.msra.mxu0 0.0
  %1869 = vmatprep.subr.mxu0 0.0
  %1870 = vmatpush1.msra.mxu0 0.0
  %1871 = vmatprep.subr.mxu0 0.0
  %1872 = vmatpush1.msra.mxu0 0.0
  %1873 = vmatprep.subr.mxu0 0.0
  %1874 = vmatpush1.msra.mxu0 0.0
  %1875 = vmatprep.subr.mxu0 0.0
  %1876 = vmatpush1.msra.mxu0 0.0
  %1877 = vmatprep.subr.mxu0 0.0
  %1878 = vmatpush1.msra.mxu0 0.0
  %1879 = vmatprep.subr.mxu0 0.0
  %1880 = vmatpush1.msra.mxu0 0.0
  %1881 = vmatprep.subr.mxu0 0.0
  %1882 = vmatpush1.msra.mxu0 0.0
  %1883 = vmatprep.subr.mxu0 0.0
  %1884 = vmatpush1.msra.mxu0 0.0
  %1885 = vmatprep.subr.mxu0 0.0
  %1886 = vmatpush1.msra.mxu0 0.0
  %1887 = vmatprep.subr.mxu0 0.0
  %1888 = vmatpush1.msra.mxu0 0.0
  %1889 = vmatprep.subr.mxu0 0.0
  %1890 = vmatpush1.msra.mxu0 0.0
  %1891 = vmatprep.subr.mxu0 0.0
  %1892 = vmatpush1.msra.mxu0 0.0
  %1893 = vmatprep.subr.mxu0 0.0
  %1894 = vmatpush1.msra.mxu0 0.0
  %1895 = vmatprep.subr.mxu0 0.0
  %1896 = vmatpush1.msra.mxu0 0.0
  %1897 = vmatprep.subr.mxu0 0.0
  %1898 = vmatpush1.msra.mxu0 0.0
  %1899 = vmatprep.subr.mxu0 0.0
  %1900 = vmatpush1.msra.mxu0 0.0
  %1901 = vmatprep.subr.mxu0 0.0
  %1902 = vmatpush1.msra.mxu0 0.0
  %1903 = vmatprep.subr.mxu0 0.0
  %1904 = vmatpush1.msra.mxu0 0.0
  %1905 = vmatprep.subr.mxu0 0.0
  %1906 = vmatpush1.msra.mxu0 0.0
  %1907 = vmatprep.subr.mxu0 0.0
  %1908 = vmatpush1.msra.mxu0 0.0
  %1909 = vmatprep.mubr.f32.mxu0 0.0
  %1910 = vmatmul.mubr.f32.gmra.mrb[0].mxu0 %v1838
  %v1911 = vpop.f32.mrb[0].mxu0
  %v1912 = vadd.f32 0.0, %v1911
  %v1913 = vpop.f32.mrb[0].mxu0
  %1914 = vmatprep.mubr.f32.mxu0 0.0
  %1915 = vmatmul.mubr.f32.gmra.mrb[0].mxu0 %v1841
  %v1916 = vpop.f32.mrb[0].mxu0
  %v1917 = vadd.f32 0.0, %v1916
  %v1918 = vpop.f32.mrb[0].mxu0
  %1919 = vdwg.mxu0
  %1922 = vrot.lane.b32.xlu0 %v1384, 8
  %v1923 = vpop.permute.xlu0 %1922
  %1924 = vrot.lane.b32.xlu0 %v1389, 8
  %v1925 = vpop.permute.xlu0 %1924
  %1930 = vrot.lane.b32.xlu0 %v1472, 16
  %v1931 = vpop.permute.xlu0 %1930
  %1932 = vrot.lane.b32.xlu0 %v1477, 16
  %v1933 = vpop.permute.xlu0 %1932
  %1938 = vrot.lane.b32.xlu0 %v1560, 24
  %v1939 = vpop.permute.xlu0 %1938
  %1940 = vrot.lane.b32.xlu0 %v1565, 24
  %v1941 = vpop.permute.xlu0 %1940
  %v1944 = vsel %vm346, %v1296, %v1923
  %v1945 = vsel %vm346, %v1301, %v1925
  %vm1946 = vcmask 130048
  %v1947 = vsel %vm1946, %v1944, %v1931
  %v1948 = vsel %vm1946, %v1945, %v1933
  %vm1949 = vcmask 195584
  %v1950 = vsel %vm1949, %v1947, %v1939
  %v1951 = vsel %vm1949, %v1948, %v1941
  %1954 = vrot.lane.b32.xlu0 %v1736, 8
  %v1955 = vpop.permute.xlu0 %1954
  %1956 = vrot.lane.b32.xlu0 %v1741, 8
  %v1957 = vpop.permute.xlu0 %1956
  %1962 = vrot.lane.b32.xlu0 %v1824, 16
  %v1963 = vpop.permute.xlu0 %1962
  %1964 = vrot.lane.b32.xlu0 %v1829, 16
  %v1965 = vpop.permute.xlu0 %1964
  %1970 = vrot.lane.b32.xlu0 %v1912, 24
  %v1971 = vpop.permute.xlu0 %1970
  %1972 = vrot.lane.b32.xlu0 %v1917, 24
  %v1973 = vpop.permute.xlu0 %1972
  %v1976 = vsel %vm346, %v1648, %v1955
  %v1977 = vsel %vm346, %v1653, %v1957
  %v1978 = vsel %vm1946, %v1976, %v1963
  %v1979 = vsel %vm1946, %v1977, %v1965
  %v1980 = vsel %vm1949, %v1978, %v1971
  %v1981 = vsel %vm1949, %v1979, %v1973
  %v1984 = vrot.slane %v1980, 7
  %v1985 = vrot.slane %v1981, 7
  %v1986 = vsel %vm56, %v1984, %v1985
  %v1988 = vsel %vm56, %v1951, %v1984
  %1993 = vrot.lane.b32.xlu0 %v218, 32
  %v1994 = vpop.permute.xlu0 %1993
  %1995 = vrot.lane.b32.xlu0 %v219, 32
  %v1996 = vpop.permute.xlu0 %1995
  %1997 = vrot.lane.b32.xlu0 %v220, 32
  %v1998 = vpop.permute.xlu0 %1997
  %1999 = vrot.lane.b32.xlu0 %v221, 32
  %v2000 = vpop.permute.xlu0 %1999
  %v2006 = vsel %vm156, %v1950, 0
  %v2009 = vsel %vm156, %v1988, 0
  %v2011 = vsel %vm156, %v1986, 0
  %2013 = vmatprep.subr.mxu0 0.0
  %2014 = vmatpush1.msra.mxu0 %v1994
  %2015 = vmatprep.subr.mxu0 0.0
  %2016 = vmatpush1.msra.mxu0 %v1996
  %2017 = vmatprep.subr.mxu0 0.0
  %2018 = vmatpush1.msra.mxu0 %v1998
  %2019 = vmatprep.subr.mxu0 0.0
  %2020 = vmatpush1.msra.mxu0 %v2000
  %2021 = vmatprep.subr.mxu0 0.0
  %2022 = vmatpush1.msra.mxu0 0.0
  %2023 = vmatprep.subr.mxu0 0.0
  %2024 = vmatpush1.msra.mxu0 0.0
  %2025 = vmatprep.subr.mxu0 0.0
  %2026 = vmatpush1.msra.mxu0 0.0
  %2027 = vmatprep.subr.mxu0 0.0
  %2028 = vmatpush1.msra.mxu0 0.0
  %2029 = vmatprep.subr.mxu0 0.0
  %2030 = vmatpush1.msra.mxu0 0.0
  %2031 = vmatprep.subr.mxu0 0.0
  %2032 = vmatpush1.msra.mxu0 0.0
  %2033 = vmatprep.subr.mxu0 0.0
  %2034 = vmatpush1.msra.mxu0 0.0
  %2035 = vmatprep.subr.mxu0 0.0
  %2036 = vmatpush1.msra.mxu0 0.0
  %2037 = vmatprep.subr.mxu0 0.0
  %2038 = vmatpush1.msra.mxu0 0.0
  %2039 = vmatprep.subr.mxu0 0.0
  %2040 = vmatpush1.msra.mxu0 0.0
  %2041 = vmatprep.subr.mxu0 0.0
  %2042 = vmatpush1.msra.mxu0 0.0
  %2043 = vmatprep.subr.mxu0 0.0
  %2044 = vmatpush1.msra.mxu0 0.0
  %2045 = vmatprep.subr.mxu0 0.0
  %2046 = vmatpush1.msra.mxu0 0.0
  %2047 = vmatprep.subr.mxu0 0.0
  %2048 = vmatpush1.msra.mxu0 0.0
  %2049 = vmatprep.subr.mxu0 0.0
  %2050 = vmatpush1.msra.mxu0 0.0
  %2051 = vmatprep.subr.mxu0 0.0
  %2052 = vmatpush1.msra.mxu0 0.0
  %2053 = vmatprep.subr.mxu0 0.0
  %2054 = vmatpush1.msra.mxu0 0.0
  %2055 = vmatprep.subr.mxu0 0.0
  %2056 = vmatpush1.msra.mxu0 0.0
  %2057 = vmatprep.subr.mxu0 0.0
  %2058 = vmatpush1.msra.mxu0 0.0
  %2059 = vmatprep.subr.mxu0 0.0
  %2060 = vmatpush1.msra.mxu0 0.0
  %2061 = vmatprep.subr.mxu0 0.0
  %2062 = vmatpush1.msra.mxu0 0.0
  %2063 = vmatprep.subr.mxu0 0.0
  %2064 = vmatpush1.msra.mxu0 0.0
  %2065 = vmatprep.subr.mxu0 0.0
  %2066 = vmatpush1.msra.mxu0 0.0
  %2067 = vmatprep.subr.mxu0 0.0
  %2068 = vmatpush1.msra.mxu0 0.0
  %2069 = vmatprep.subr.mxu0 0.0
  %2070 = vmatpush1.msra.mxu0 0.0
  %2071 = vmatprep.subr.mxu0 0.0
  %2072 = vmatpush1.msra.mxu0 0.0
  %2073 = vmatprep.subr.mxu0 0.0
  %2074 = vmatpush1.msra.mxu0 0.0
  %2075 = vmatprep.subr.mxu0 0.0
  %2076 = vmatpush1.msra.mxu0 0.0
  %2077 = vmatprep.mubr.f32.mxu0 0.0
  %2078 = vmatmul.mubr.f32.gmra.mrb[0].mxu0 %v2006
  %v2079 = vpop.f32.mrb[0].mxu0
  %v2080 = vadd.f32 0.0, %v2079
  %v2081 = vpop.f32.mrb[0].mxu0
  %2082 = vmatprep.mubr.f32.mxu0 0.0
  %2083 = vmatmul.mubr.f32.gmra.mrb[0].mxu0 %v2009
  %v2084 = vpop.f32.mrb[0].mxu0
  %v2085 = vadd.f32 0.0, %v2084
  %v2086 = vpop.f32.mrb[0].mxu0
  %2087 = vmatprep.mubr.f32.mxu0 0.0
  %2088 = vmatmul.mubr.f32.gmra.mrb[0].mxu0 %v2011
  %v2089 = vpop.f32.mrb[0].mxu0
  %v2090 = vadd.f32 0.0, %v2089
  %v2091 = vpop.f32.mrb[0].mxu0
  %2092 = vdwg.mxu0
  %v2093 = vadd.f32 %v143, %v2080
  %v2094 = vadd.f32 %v148, %v2085
  %v2095 = vadd.f32 %v153, %v2090
  %v2096 = vlaneseq
  %v2097 = vshrl.u32 %v2096, 7
  %v2098 = vsub.s32 5, %v2097
  %v2099 = vrot.slane %v27, %v2098
  %v2100 = vadd.f32 %v2093, %v2099
  %v2101 = vadd.f32 %v2094, %v2099
  %v2102 = vadd.f32 %v2095, %v2099
  %v2103 = vsel %vm156, %v2100, 0.0
  %2104 = vadd.xlane.f32.xlu0 %v2103
  %v2105 = vpop.xlane.xlu0 %2104
  %v2106 = vsel %vm156, %v2101, 0.0
  %2107 = vadd.xlane.f32.xlu0 %v2106
  %v2108 = vpop.xlane.xlu0 %2107
  %v2109 = vsel %vm163, %v2102, 0.0
  %2110 = vadd.xlane.f32.xlu0 %v2109
  %v2111 = vpop.xlane.xlu0 %2110
  %v2112 = vmul.f32 %v2105, %v167
  %v2113 = vmul.f32 %v2108, %v167
  %v2114 = vmul.f32 %v2111, %v167
  %v2115 = vmul.f32 %v2100, %v2100
  %v2116 = vmul.f32 %v2101, %v2101
  %v2117 = vmul.f32 %v2102, %v2102
  %v2118 = vsel %vm156, %v2115, 0.0
  %2119 = vadd.xlane.f32.xlu0 %v2118
  %v2120 = vpop.xlane.xlu0 %2119
  %v2121 = vsel %vm156, %v2116, 0.0
  %2122 = vadd.xlane.f32.xlu0 %v2121
  %v2123 = vpop.xlane.xlu0 %2122
  %v2124 = vsel %vm163, %v2117, 0.0
  %2125 = vadd.xlane.f32.xlu0 %v2124
  %v2126 = vpop.xlane.xlu0 %2125
  %v2127 = vmul.f32 %v2120, %v167
  %v2128 = vmul.f32 %v2123, %v167
  %v2129 = vmul.f32 %v2126, %v167
  %v2130 = vmul.f32 %v2112, %v2112
  %v2131 = vmul.f32 %v2113, %v2113
  %v2132 = vmul.f32 %v2114, %v2114
  %v2133 = vsub.f32 %v2127, %v2130
  %v2134 = vsub.f32 %v2128, %v2131
  %v2135 = vsub.f32 %v2129, %v2132
  %v2136 = vsub.f32 %v2100, %v2112
  %v2137 = vsub.f32 %v2101, %v2113
  %v2138 = vsub.f32 %v2102, %v2114
  %v2139 = vadd.f32 %v2133, 1e-05
  %v2140 = vadd.f32 %v2134, 1e-05
  %v2141 = vadd.f32 %v2135, 1e-05
  %v2142 = vrsqrt.pop %v2139
  %v2143 = vrsqrt.pop %v2140
  %v2144 = vrsqrt.pop %v2141
  %v2145 = vmul.f32 %v2136, %v2142
  %v2146 = vmul.f32 %v2137, %v2143
  %v2147 = vmul.f32 %v2138, %v2144
  %v2148 = vlaneseq
  %v2149 = vshrl.u32 %v2148, 7
  %v2150 = vsub.s32 3, %v2149
  %v2151 = vrot.slane %v27, %v2150
  %v2152 = vmul.f32 %v2145, %v2151
  %v2153 = vmul.f32 %v2146, %v2151
  %v2154 = vmul.f32 %v2147, %v2151
  %v2155 = vlaneseq
  %v2156 = vshrl.u32 %v2155, 7
  %v2157 = vsub.s32 4, %v2156
  %v2158 = vrot.slane %v27, %v2157
  %v2159 = vadd.f32 %v2152, %v2158
  %v2160 = vadd.f32 %v2153, %v2158
  %v2161 = vadd.f32 %v2154, %v2158
  %v2162 = vld [vmem:[%s4] sm:$0xff]
  %v2163 = vld [vmem:[%s4 + $0x8] sm:$0xff]
  %v2164 = vld [vmem:[%s4 + $0x10] sm:$0xff]
  %v2165 = vld [vmem:[%s4 + $0x18] sm:$0xff]
  %v2166 = vld [vmem:[%s4 + $0x20] sm:$0x1]
  %v2167 = vlaneseq
  %v2168 = vshrl.u32 %v2167, 7
  %v2169 = vsub.s32 0, %v2168
  %v2170 = vrot.slane %v2166, %v2169
  %v2172 = vsel %vm156, %v2159, 0
  %v2175 = vsel %vm156, %v2160, 0
  %v2178 = vsel %vm156, %v2161, 0
  %2180 = vmatprep.subr.mxu0 0.0
  %2181 = vmatpush1.msra.mxu0 %v2162
  %2182 = vmatprep.subr.mxu0 0.0
  %2183 = vmatpush1.msra.mxu0 %v2163
  %2184 = vmatprep.subr.mxu0 0.0
  %2185 = vmatpush1.msra.mxu0 %v2164
  %2186 = vmatprep.subr.mxu0 0.0
  %2187 = vmatpush1.msra.mxu0 %v2165
  %2188 = vmatprep.subr.mxu0 0.0
  %2189 = vmatpush1.msra.mxu0 0.0
  %2190 = vmatprep.subr.mxu0 0.0
  %2191 = vmatpush1.msra.mxu0 0.0
  %2192 = vmatprep.subr.mxu0 0.0
  %2193 = vmatpush1.msra.mxu0 0.0
  %2194 = vmatprep.subr.mxu0 0.0
  %2195 = vmatpush1.msra.mxu0 0.0
  %2196 = vmatprep.subr.mxu0 0.0
  %2197 = vmatpush1.msra.mxu0 0.0
  %2198 = vmatprep.subr.mxu0 0.0
  %2199 = vmatpush1.msra.mxu0 0.0
  %2200 = vmatprep.subr.mxu0 0.0
  %2201 = vmatpush1.msra.mxu0 0.0
  %2202 = vmatprep.subr.mxu0 0.0
  %2203 = vmatpush1.msra.mxu0 0.0
  %2204 = vmatprep.subr.mxu0 0.0
  %2205 = vmatpush1.msra.mxu0 0.0
  %2206 = vmatprep.subr.mxu0 0.0
  %2207 = vmatpush1.msra.mxu0 0.0
  %2208 = vmatprep.subr.mxu0 0.0
  %2209 = vmatpush1.msra.mxu0 0.0
  %2210 = vmatprep.subr.mxu0 0.0
  %2211 = vmatpush1.msra.mxu0 0.0
  %2212 = vmatprep.subr.mxu0 0.0
  %2213 = vmatpush1.msra.mxu0 0.0
  %2214 = vmatprep.subr.mxu0 0.0
  %2215 = vmatpush1.msra.mxu0 0.0
  %2216 = vmatprep.subr.mxu0 0.0
  %2217 = vmatpush1.msra.mxu0 0.0
  %2218 = vmatprep.subr.mxu0 0.0
  %2219 = vmatpush1.msra.mxu0 0.0
  %2220 = vmatprep.subr.mxu0 0.0
  %2221 = vmatpush1.msra.mxu0 0.0
  %2222 = vmatprep.subr.mxu0 0.0
  %2223 = vmatpush1.msra.mxu0 0.0
  %2224 = vmatprep.subr.mxu0 0.0
  %2225 = vmatpush1.msra.mxu0 0.0
  %2226 = vmatprep.subr.mxu0 0.0
  %2227 = vmatpush1.msra.mxu0 0.0
  %2228 = vmatprep.subr.mxu0 0.0
  %2229 = vmatpush1.msra.mxu0 0.0
  %2230 = vmatprep.subr.mxu0 0.0
  %2231 = vmatpush1.msra.mxu0 0.0
  %2232 = vmatprep.subr.mxu0 0.0
  %2233 = vmatpush1.msra.mxu0 0.0
  %2234 = vmatprep.subr.mxu0 0.0
  %2235 = vmatpush1.msra.mxu0 0.0
  %2236 = vmatprep.subr.mxu0 0.0
  %2237 = vmatpush1.msra.mxu0 0.0
  %2238 = vmatprep.subr.mxu0 0.0
  %2239 = vmatpush1.msra.mxu0 0.0
  %2240 = vmatprep.subr.mxu0 0.0
  %2241 = vmatpush1.msra.mxu0 0.0
  %2242 = vmatprep.subr.mxu0 0.0
  %2243 = vmatpush1.msra.mxu0 0.0
  %2244 = vmatprep.mubr.f32.mxu0 0.0
  %2245 = vmatmul.mubr.f32.gmra.mrb[0].mxu0 %v2172
  %v2246 = vpop.f32.mrb[0].mxu0
  %v2247 = vadd.f32 %v2170, %v2246
  %v2248 = vpop.f32.mrb[0].mxu0
  %2249 = vmatprep.mubr.f32.mxu0 0.0
  %2250 = vmatmul.mubr.f32.gmra.mrb[0].mxu0 %v2175
  %v2251 = vpop.f32.mrb[0].mxu0
  %v2252 = vadd.f32 %v2170, %v2251
  %v2253 = vpop.f32.mrb[0].mxu0
  %2254 = vmatprep.mubr.f32.mxu0 0.0
  %2255 = vmatmul.mubr.f32.gmra.mrb[0].mxu0 %v2178
  %v2256 = vpop.f32.mrb[0].mxu0
  %v2257 = vadd.f32 %v2170, %v2256
  %v2258 = vpop.f32.mrb[0].mxu0
  %2259 = vdwg.mxu0
  %v2260 = vmul.f32 %v2247, 0.5
  %v2261 = vmul.f32 %v2252, 0.5
  %v2262 = vmul.f32 %v2257, 0.5
  %v2263 = vmul.f32 %v2247, 0.044715
  %v2264 = vmul.f32 %v2252, 0.044715
  %v2265 = vmul.f32 %v2257, 0.044715
  %v2266 = vmul.f32 %v2263, %v2247
  %v2267 = vmul.f32 %v2264, %v2252
  %v2268 = vmul.f32 %v2265, %v2257
  %v2269 = vmul.f32 %v2266, %v2247
  %v2270 = vmul.f32 %v2267, %v2252
  %v2271 = vmul.f32 %v2268, %v2257
  %v2272 = vadd.f32 %v2247, %v2269
  %v2273 = vadd.f32 %v2252, %v2270
  %v2274 = vadd.f32 %v2257, %v2271
  %v2275 = vmul.f32 %v2272, 0.7978846
  %v2276 = vmul.f32 %v2273, 0.7978846
  %v2277 = vmul.f32 %v2274, 0.7978846
  %v2278 = vtanh.pop %v2275
  %v2279 = vtanh.pop %v2276
  %v2280 = vtanh.pop %v2277
  %v2281 = vadd.f32 %v2278, 1.0
  %v2282 = vadd.f32 %v2279, 1.0
  %v2283 = vadd.f32 %v2280, 1.0
  %v2284 = vmul.f32 %v2260, %v2281
  %v2285 = vmul.f32 %v2261, %v2282
  %v2286 = vmul.f32 %v2262, %v2283
  %v2287 = vld [vmem:[%s5] sm:$0xff]
  %v2288 = vld [vmem:[%s5 + $0x8] sm:$0xff]
  %v2289 = vld [vmem:[%s5 + $0x10] sm:$0xff]
  %v2290 = vld [vmem:[%s5 + $0x18] sm:$0xff]
  %v2291 = vld [vmem:[%s5 + $0x20] sm:$0xff]
  %v2292 = vld [vmem:[%s5 + $0x28] sm:$0xff]
  %v2293 = vld [vmem:[%s5 + $0x30] sm:$0xff]
  %v2294 = vld [vmem:[%s5 + $0x38] sm:$0xff]
  %v2295 = vld [vmem:[%s5 + $0x40] sm:$0xff]
  %v2296 = vld [vmem:[%s5 + $0x48] sm:$0xff]
  %v2297 = vld [vmem:[%s5 + $0x50] sm:$0xff]
  %v2298 = vld [vmem:[%s5 + $0x58] sm:$0xff]
  %v2299 = vld [vmem:[%s5 + $0x60] sm:$0xff]
  %v2300 = vld [vmem:[%s5 + $0x68] sm:$0xff]
  %v2301 = vld [vmem:[%s5 + $0x70] sm:$0xff]
  %v2302 = vld [vmem:[%s5 + $0x78] sm:$0xff]
  %2303 = vmatprep.subr.mxu0 0.0
  %2304 = vmatpush1.msra.mxu0 %v2287
  %2305 = vmatprep.subr.mxu0 0.0
  %2306 = vmatpush1.msra.mxu0 %v2288
  %2307 = vmatprep.subr.mxu0 0.0
  %2308 = vmatpush1.msra.mxu0 %v2289
  %2309 = vmatprep.subr.mxu0 0.0
  %2310 = vmatpush1.msra.mxu0 %v2290
  %2311 = vmatprep.subr.mxu0 0.0
  %2312 = vmatpush1.msra.mxu0 %v2291
  %2313 = vmatprep.subr.mxu0 0.0
  %2314 = vmatpush1.msra.mxu0 %v2292
  %2315 = vmatprep.subr.mxu0 0.0
  %2316 = vmatpush1.msra.mxu0 %v2293
  %2317 = vmatprep.subr.mxu0 0.0
  %2318 = vmatpush1.msra.mxu0 %v2294
  %2319 = vmatprep.subr.mxu0 0.0
  %2320 = vmatpush1.msra.mxu0 %v2295
  %2321 = vmatprep.subr.mxu0 0.0
  %2322 = vmatpush1.msra.mxu0 %v2296
  %2323 = vmatprep.subr.mxu0 0.0
  %2324 = vmatpush1.msra.mxu0 %v2297
  %2325 = vmatprep.subr.mxu0 0.0
  %2326 = vmatpush1.msra.mxu0 %v2298
  %2327 = vmatprep.subr.mxu0 0.0
  %2328 = vmatpush1.msra.mxu0 %v2299
  %2329 = vmatprep.subr.mxu0 0.0
  %2330 = vmatpush1.msra.mxu0 %v2300
  %2331 = vmatprep.subr.mxu0 0.0
  %2332 = vmatpush1.msra.mxu0 %v2301
  %2333 = vmatprep.subr.mxu0 0.0
  %2334 = vmatpush1.msra.mxu0 %v2302
  %2335 = vmatprep.subr.mxu0 0.0
  %2336 = vmatpush1.msra.mxu0 0.0
  %2337 = vmatprep.subr.mxu0 0.0
  %2338 = vmatpush1.msra.mxu0 0.0
  %2339 = vmatprep.subr.mxu0 0.0
  %2340 = vmatpush1.msra.mxu0 0.0
  %2341 = vmatprep.subr.mxu0 0.0
  %2342 = vmatpush1.msra.mxu0 0.0
  %2343 = vmatprep.subr.mxu0 0.0
  %2344 = vmatpush1.msra.mxu0 0.0
  %2345 = vmatprep.subr.mxu0 0.0
  %2346 = vmatpush1.msra.mxu0 0.0
  %2347 = vmatprep.subr.mxu0 0.0
  %2348 = vmatpush1.msra.mxu0 0.0
  %2349 = vmatprep.subr.mxu0 0.0
  %2350 = vmatpush1.msra.mxu0 0.0
  %2351 = vmatprep.subr.mxu0 0.0
  %2352 = vmatpush1.msra.mxu0 0.0
  %2353 = vmatprep.subr.mxu0 0.0
  %2354 = vmatpush1.msra.mxu0 0.0
  %2355 = vmatprep.subr.mxu0 0.0
  %2356 = vmatpush1.msra.mxu0 0.0
  %2357 = vmatprep.subr.mxu0 0.0
  %2358 = vmatpush1.msra.mxu0 0.0
  %2359 = vmatprep.subr.mxu0 0.0
  %2360 = vmatpush1.msra.mxu0 0.0
  %2361 = vmatprep.subr.mxu0 0.0
  %2362 = vmatpush1.msra.mxu0 0.0
  %2363 = vmatprep.subr.mxu0 0.0
  %2364 = vmatpush1.msra.mxu0 0.0
  %2365 = vmatprep.subr.mxu0 0.0
  %2366 = vmatpush1.msra.mxu0 0.0
  %2367 = vmatprep.mubr.f32.mxu0 0.0
  %2368 = vmatmul.mubr.f32.gmra.mrb[0].mxu0 %v2284
  %v2369 = vpop.f32.mrb[0].mxu0
  %v2370 = vadd.f32 0.0, %v2369
  %v2371 = vpop.f32.mrb[0].mxu0
  %2372 = vmatprep.mubr.f32.mxu0 0.0
  %2373 = vmatmul.mubr.f32.gmra.mrb[0].mxu0 %v2285
  %v2374 = vpop.f32.mrb[0].mxu0
  %v2375 = vadd.f32 0.0, %v2374
  %v2376 = vpop.f32.mrb[0].mxu0
  %2377 = vmatprep.mubr.f32.mxu0 0.0
  %2378 = vmatmul.mubr.f32.gmra.mrb[0].mxu0 %v2286
  %v2379 = vpop.f32.mrb[0].mxu0
  %v2380 = vadd.f32 0.0, %v2379
  %v2381 = vpop.f32.mrb[0].mxu0
  %2382 = vdwg.mxu0
  %v2383 = vadd.f32 %v2100, %v2370
  %v2384 = vadd.f32 %v2101, %v2375
  %v2385 = vadd.f32 %v2102, %v2380
  %v2386 = vlaneseq
  %v2387 = vshrl.u32 %v2386, 7
  %v2388 = vsub.s32 6, %v2387
  %v2389 = vrot.slane %v27, %v2388
  %v2390 = vadd.f32 %v2383, %v2389
  %v2391 = vadd.f32 %v2384, %v2389
  %v2392 = vadd.f32 %v2385, %v2389
  %v2393 = vsel %vm156, %v2390, 0.0
  %2394 = vadd.xlane.f32.xlu0 %v2393
  %v2395 = vpop.xlane.xlu0 %2394
  %v2396 = vsel %vm156, %v2391, 0.0
  %2397 = vadd.xlane.f32.xlu0 %v2396
  %v2398 = vpop.xlane.xlu0 %2397
  %v2399 = vsel %vm163, %v2392, 0.0
  %2400 = vadd.xlane.f32.xlu0 %v2399
  %v2401 = vpop.xlane.xlu0 %2400
  %v2402 = vmul.f32 %v2395, %v167
  %v2403 = vmul.f32 %v2398, %v167
  %v2404 = vmul.f32 %v2401, %v167
  %v2405 = vmul.f32 %v2390, %v2390
  %v2406 = vmul.f32 %v2391, %v2391
  %v2407 = vmul.f32 %v2392, %v2392
  %v2408 = vsel %vm156, %v2405, 0.0
  %2409 = vadd.xlane.f32.xlu0 %v2408
  %v2410 = vpop.xlane.xlu0 %2409
  %v2411 = vsel %vm156, %v2406, 0.0
  %2412 = vadd.xlane.f32.xlu0 %v2411
  %v2413 = vpop.xlane.xlu0 %2412
  %v2414 = vsel %vm163, %v2407, 0.0
  %2415 = vadd.xlane.f32.xlu0 %v2414
  %v2416 = vpop.xlane.xlu0 %2415
  %v2417 = vmul.f32 %v2410, %v167
  %v2418 = vmul.f32 %v2413, %v167
  %v2419 = vmul.f32 %v2416, %v167
  %v2420 = vmul.f32 %v2402, %v2402
  %v2421 = vmul.f32 %v2403, %v2403
  %v2422 = vmul.f32 %v2404, %v2404
  %v2423 = vsub.f32 %v2417, %v2420
  %v2424 = vsub.f32 %v2418, %v2421
  %v2425 = vsub.f32 %v2419, %v2422
  %v2426 = vsub.f32 %v2390, %v2402
  %v2427 = vsub.f32 %v2391, %v2403
  %v2428 = vsub.f32 %v2392, %v2404
  %v2429 = vadd.f32 %v2423, 1e-05
  %v2430 = vadd.f32 %v2424, 1e-05
  %v2431 = vadd.f32 %v2425, 1e-05
  %v2432 = vrsqrt.pop %v2429
  %v2433 = vrsqrt.pop %v2430
  %v2434 = vrsqrt.pop %v2431
  %v2435 = vmul.f32 %v2426, %v2432
  %v2436 = vmul.f32 %v2427, %v2433
  %v2437 = vmul.f32 %v2428, %v2434
  %v2438 = vlaneseq
  %v2439 = vshrl.u32 %v2438, 7
  %v2440 = vsub.s32 7, %v2439
  %v2441 = vrot.slane %v27, %v2440
  %v2442 = vmul.f32 %v2435, %v2441
  %v2443 = vmul.f32 %v2436, %v2441
  %v2444 = vmul.f32 %v2437, %v2441
  %v2445 = vlaneseq
  %v2446 = vshrl.u32 %v2445, 7
  %v2447 = vsub.s32 0, %v2446
  %v2448 = vrot.slane %v28, %v2447
  %v2449 = vadd.f32 %v2442, %v2448
  %v2450 = vadd.f32 %v2443, %v2448
  %v2451 = vadd.f32 %v2444, %v2448
  %s2452 = scalar_lea.vmem %s3, 32
  %v2453 = vld [vmem:[%s2452] sm:$0xff]
  %v2454 = vld [vmem:[%s2452 + $0x8] sm:$0xff]
  %v2455 = vld [vmem:[%s2452 + $0x10] sm:$0xff]
  %v2456 = vld [vmem:[%s2452 + $0x18] sm:$0xff]
  %v2458 = vsel %vm156, %v2449, 0
  %v2461 = vsel %vm156, %v2450, 0
  %v2464 = vsel %vm156, %v2451, 0
  %2466 = vmatprep.subr.mxu0 0.0
  %2467 = vmatpush1.msra.mxu0 %v2453
  %2468 = vmatprep.subr.mxu0 0.0
  %2469 = vmatpush1.msra.mxu0 %v2454
  %2470 = vmatprep.subr.mxu0 0.0
  %2471 = vmatpush1.msra.mxu0 %v2455
  %2472 = vmatprep.subr.mxu0 0.0
  %2473 = vmatpush1.msra.mxu0 %v2456
  %2474 = vmatprep.subr.mxu0 0.0
  %2475 = vmatpush1.msra.mxu0 0.0
  %2476 = vmatprep.subr.mxu0 0.0
  %2477 = vmatpush1.msra.mxu0 0.0
  %2478 = vmatprep.subr.mxu0 0.0
  %2479 = vmatpush1.msra.mxu0 0.0
  %2480 = vmatprep.subr.mxu0 0.0
  %2481 = vmatpush1.msra.mxu0 0.0
  %2482 = vmatprep.subr.mxu0 0.0
  %2483 = vmatpush1.msra.mxu0 0.0
  %2484 = vmatprep.subr.mxu0 0.0
  %2485 = vmatpush1.msra.mxu0 0.0
  %2486 = vmatprep.subr.mxu0 0.0
  %2487 = vmatpush1.msra.mxu0 0.0
  %2488 = vmatprep.subr.mxu0 0.0
  %2489 = vmatpush1.msra.mxu0 0.0
  %2490 = vmatprep.subr.mxu0 0.0
  %2491 = vmatpush1.msra.mxu0 0.0
  %2492 = vmatprep.subr.mxu0 0.0
  %2493 = vmatpush1.msra.mxu0 0.0
  %2494 = vmatprep.subr.mxu0 0.0
  %2495 = vmatpush1.msra.mxu0 0.0
  %2496 = vmatprep.subr.mxu0 0.0
  %2497 = vmatpush1.msra.mxu0 0.0
  %2498 = vmatprep.subr.mxu0 0.0
  %2499 = vmatpush1.msra.mxu0 0.0
  %2500 = vmatprep.subr.mxu0 0.0
  %2501 = vmatpush1.msra.mxu0 0.0
  %2502 = vmatprep.subr.mxu0 0.0
  %2503 = vmatpush1.msra.mxu0 0.0
  %2504 = vmatprep.subr.mxu0 0.0
  %2505 = vmatpush1.msra.mxu0 0.0
  %2506 = vmatprep.subr.mxu0 0.0
  %2507 = vmatpush1.msra.mxu0 0.0
  %2508 = vmatprep.subr.mxu0 0.0
  %2509 = vmatpush1.msra.mxu0 0.0
  %2510 = vmatprep.subr.mxu0 0.0
  %2511 = vmatpush1.msra.mxu0 0.0
  %2512 = vmatprep.subr.mxu0 0.0
  %2513 = vmatpush1.msra.mxu0 0.0
  %2514 = vmatprep.subr.mxu0 0.0
  %2515 = vmatpush1.msra.mxu0 0.0
  %2516 = vmatprep.subr.mxu0 0.0
  %2517 = vmatpush1.msra.mxu0 0.0
  %2518 = vmatprep.subr.mxu0 0.0
  %2519 = vmatpush1.msra.mxu0 0.0
  %2520 = vmatprep.subr.mxu0 0.0
  %2521 = vmatpush1.msra.mxu0 0.0
  %2522 = vmatprep.subr.mxu0 0.0
  %2523 = vmatpush1.msra.mxu0 0.0
  %2524 = vmatprep.subr.mxu0 0.0
  %2525 = vmatpush1.msra.mxu0 0.0
  %2526 = vmatprep.subr.mxu0 0.0
  %2527 = vmatpush1.msra.mxu0 0.0
  %2528 = vmatprep.subr.mxu0 0.0
  %2529 = vmatpush1.msra.mxu0 0.0
  %2530 = vmatprep.mubr.f32.mxu0 0.0
  %2531 = vmatmul.mubr.f32.gmra.mrb[0].mxu0 %v2458
  %v2532 = vpop.f32.mrb[0].mxu0
  %v2533 = vadd.f32 0.0, %v2532
  %v2534 = vpop.f32.mrb[0].mxu0
  %2535 = vmatprep.mubr.f32.mxu0 0.0
  %2536 = vmatmul.mubr.f32.gmra.mrb[0].mxu0 %v2461
  %v2537 = vpop.f32.mrb[0].mxu0
  %v2538 = vadd.f32 0.0, %v2537
  %v2539 = vpop.f32.mrb[0].mxu0
  %2540 = vmatprep.mubr.f32.mxu0 0.0
  %2541 = vmatmul.mubr.f32.gmra.mrb[0].mxu0 %v2464
  %v2542 = vpop.f32.mrb[0].mxu0
  %v2543 = vadd.f32 0.0, %v2542
  %v2544 = vpop.f32.mrb[0].mxu0
  %2545 = vdwg.mxu0
  %2548 = vrot.lane.b32.xlu0 %v2533, 120
  %v2549 = vpop.permute.xlu0 %2548
  %2550 = vrot.lane.b32.xlu0 %v2538, 120
  %v2551 = vpop.permute.xlu0 %2550
  %2552 = vrot.lane.b32.xlu0 %v2533, 112
  %v2553 = vpop.permute.xlu0 %2552
  %2554 = vrot.lane.b32.xlu0 %v2538, 112
  %v2555 = vpop.permute.xlu0 %2554
  %2556 = vrot.lane.b32.xlu0 %v2533, 104
  %v2557 = vpop.permute.xlu0 %2556
  %2558 = vrot.lane.b32.xlu0 %v2538, 104
  %v2559 = vpop.permute.xlu0 %2558
  %v2561 = vrot.slane %v2538, 1
  %v2562 = vrot.slane %v2543, 1
  %v2563 = vsel %vm326, %v2561, %v2562
  %2564 = vrot.lane.b32.xlu0 %v2563, 120
  %v2565 = vpop.permute.xlu0 %2564
  %2566 = vrot.lane.b32.xlu0 %v2562, 120
  %v2567 = vpop.permute.xlu0 %2566
  %2568 = vrot.lane.b32.xlu0 %v2563, 112
  %v2569 = vpop.permute.xlu0 %2568
  %2570 = vrot.lane.b32.xlu0 %v2562, 112
  %v2571 = vpop.permute.xlu0 %2570
  %2572 = vrot.lane.b32.xlu0 %v2563, 104
  %v2573 = vpop.permute.xlu0 %2572
  %2574 = vrot.lane.b32.xlu0 %v2562, 104
  %v2575 = vpop.permute.xlu0 %2574
  %2576 = vrot.lane.b32.xlu0 %v2533, 96
  %v2577 = vpop.permute.xlu0 %2576
  %2578 = vrot.lane.b32.xlu0 %v2538, 96
  %v2579 = vpop.permute.xlu0 %2578
  %v2580 = vsel %vm346, %v2533, 0
  %v2582 = vsel %vm346, %v2538, 0
  %v2584 = vsel %vm346, %v2577, 0
  %v2586 = vsel %vm346, %v2579, 0
  %2588 = vmatprep.subr.mxu0 0.0
  %2589 = vmatpush1.xpose.msra.mxu0 %v2584
  %2590 = vmatprep.subr.mxu0 0.0
  %2591 = vmatpush1.xpose.msra.mxu0 %v2586
  %2592 = vmatprep.subr.mxu0 0.0
  %2593 = vmatpush1.xpose.msra.mxu0 0.0
  %2594 = vmatprep.subr.mxu0 0.0
  %2595 = vmatpush1.xpose.msra.mxu0 0.0
  %2596 = vmatprep.subr.mxu0 0.0
  %2597 = vmatpush1.xpose.msra.mxu0 0.0
  %2598 = vmatprep.subr.mxu0 0.0
  %2599 = vmatpush1.xpose.msra.mxu0 0.0
  %2600 = vmatprep.subr.mxu0 0.0
  %2601 = vmatpush1.xpose.msra.mxu0 0.0
  %2602 = vmatprep.subr.mxu0 0.0
  %2603 = vmatpush1.xpose.msra.mxu0 0.0
  %2604 = vmatprep.subr.mxu0 0.0
  %2605 = vmatpush1.xpose.msra.mxu0 0.0
  %2606 = vmatprep.subr.mxu0 0.0
  %2607 = vmatpush1.xpose.msra.mxu0 0.0
  %2608 = vmatprep.subr.mxu0 0.0
  %2609 = vmatpush1.xpose.msra.mxu0 0.0
  %2610 = vmatprep.subr.mxu0 0.0
  %2611 = vmatpush1.xpose.msra.mxu0 0.0
  %2612 = vmatprep.subr.mxu0 0.0
  %2613 = vmatpush1.xpose.msra.mxu0 0.0
  %2614 = vmatprep.subr.mxu0 0.0
  %2615 = vmatpush1.xpose.msra.mxu0 0.0
  %2616 = vmatprep.subr.mxu0 0.0
  %2617 = vmatpush1.xpose.msra.mxu0 0.0
  %2618 = vmatprep.subr.mxu0 0.0
  %2619 = vmatpush1.xpose.msra.mxu0 0.0
  %2620 = vmatprep.subr.mxu0 0.0
  %2621 = vmatpush1.xpose.msra.mxu0 0.0
  %2622 = vmatprep.subr.mxu0 0.0
  %2623 = vmatpush1.xpose.msra.mxu0 0.0
  %2624 = vmatprep.subr.mxu0 0.0
  %2625 = vmatpush1.xpose.msra.mxu0 0.0
  %2626 = vmatprep.subr.mxu0 0.0
  %2627 = vmatpush1.xpose.msra.mxu0 0.0
  %2628 = vmatprep.subr.mxu0 0.0
  %2629 = vmatpush1.xpose.msra.mxu0 0.0
  %2630 = vmatprep.subr.mxu0 0.0
  %2631 = vmatpush1.xpose.msra.mxu0 0.0
  %2632 = vmatprep.subr.mxu0 0.0
  %2633 = vmatpush1.xpose.msra.mxu0 0.0
  %2634 = vmatprep.subr.mxu0 0.0
  %2635 = vmatpush1.xpose.msra.mxu0 0.0
  %2636 = vmatprep.subr.mxu0 0.0
  %2637 = vmatpush1.xpose.msra.mxu0 0.0
  %2638 = vmatprep.subr.mxu0 0.0
  %2639 = vmatpush1.xpose.msra.mxu0 0.0
  %2640 = vmatprep.subr.mxu0 0.0
  %2641 = vmatpush1.xpose.msra.mxu0 0.0
  %2642 = vmatprep.subr.mxu0 0.0
  %2643 = vmatpush1.xpose.msra.mxu0 0.0
  %2644 = vmatprep.subr.mxu0 0.0
  %2645 = vmatpush1.xpose.msra.mxu0 0.0
  %2646 = vmatprep.subr.mxu0 0.0
  %2647 = vmatpush1.xpose.msra.mxu0 0.0
  %2648 = vmatprep.subr.mxu0 0.0
  %2649 = vmatpush1.xpose.msra.mxu0 0.0
  %2650 = vmatprep.subr.mxu0 0.0
  %2651 = vmatpush1.xpose.msra.mxu0 0.0
  %2652 = vmatprep.mubr.f32.mxu0 0.0
  %2653 = vmatmul.mubr.f32.gmra.mrb[0].mxu0 %v2580
  %v2654 = vpop.f32.mrb[0].mxu0
  %v2655 = vadd.f32 0.0, %v2654
  %v2656 = vpop.f32.mrb[0].mxu0
  %2657 = vmatprep.mubr.f32.mxu0 0.0
  %2658 = vmatmul.mubr.f32.gmra.mrb[0].mxu0 %v2582
  %v2659 = vpop.f32.mrb[0].mxu0
  %v2660 = vadd.f32 0.0, %v2659
  %v2661 = vpop.f32.mrb[0].mxu0
  %2662 = vdwg.mxu0
  %2663 = vrot.lane.b32.xlu0 %v2549, 96
  %v2664 = vpop.permute.xlu0 %2663
  %2665 = vrot.lane.b32.xlu0 %v2551, 96
  %v2666 = vpop.permute.xlu0 %2665
  %v2667 = vsel %vm346, %v2549, 0
  %v2669 = vsel %vm346, %v2551, 0
  %v2671 = vsel %vm346, %v2664, 0
  %v2673 = vsel %vm346, %v2666, 0
  %2675 = vmatprep.subr.mxu0 0.0
  %2676 = vmatpush1.xpose.msra.mxu0 %v2671
  %2677 = vmatprep.subr.mxu0 0.0
  %2678 = vmatpush1.xpose.msra.mxu0 %v2673
  %2679 = vmatprep.subr.mxu0 0.0
  %2680 = vmatpush1.xpose.msra.mxu0 0.0
  %2681 = vmatprep.subr.mxu0 0.0
  %2682 = vmatpush1.xpose.msra.mxu0 0.0
  %2683 = vmatprep.subr.mxu0 0.0
  %2684 = vmatpush1.xpose.msra.mxu0 0.0
  %2685 = vmatprep.subr.mxu0 0.0
  %2686 = vmatpush1.xpose.msra.mxu0 0.0
  %2687 = vmatprep.subr.mxu0 0.0
  %2688 = vmatpush1.xpose.msra.mxu0 0.0
  %2689 = vmatprep.subr.mxu0 0.0
  %2690 = vmatpush1.xpose.msra.mxu0 0.0
  %2691 = vmatprep.subr.mxu0 0.0
  %2692 = vmatpush1.xpose.msra.mxu0 0.0
  %2693 = vmatprep.subr.mxu0 0.0
  %2694 = vmatpush1.xpose.msra.mxu0 0.0
  %2695 = vmatprep.subr.mxu0 0.0
  %2696 = vmatpush1.xpose.msra.mxu0 0.0
  %2697 = vmatprep.subr.mxu0 0.0
  %2698 = vmatpush1.xpose.msra.mxu0 0.0
  %2699 = vmatprep.subr.mxu0 0.0
  %2700 = vmatpush1.xpose.msra.mxu0 0.0
  %2701 = vmatprep.subr.mxu0 0.0
  %2702 = vmatpush1.xpose.msra.mxu0 0.0
  %2703 = vmatprep.subr.mxu0 0.0
  %2704 = vmatpush1.xpose.msra.mxu0 0.0
  %2705 = vmatprep.subr.mxu0 0.0
  %2706 = vmatpush1.xpose.msra.mxu0 0.0
  %2707 = vmatprep.subr.mxu0 0.0
  %2708 = vmatpush1.xpose.msra.mxu0 0.0
  %2709 = vmatprep.subr.mxu0 0.0
  %2710 = vmatpush1.xpose.msra.mxu0 0.0
  %2711 = vmatprep.subr.mxu0 0.0
  %2712 = vmatpush1.xpose.msra.mxu0 0.0
  %2713 = vmatprep.subr.mxu0 0.0
  %2714 = vmatpush1.xpose.msra.mxu0 0.0
  %2715 = vmatprep.subr.mxu0 0.0
  %2716 = vmatpush1.xpose.msra.mxu0 0.0
  %2717 = vmatprep.subr.mxu0 0.0
  %2718 = vmatpush1.xpose.msra.mxu0 0.0
  %2719 = vmatprep.subr.mxu0 0.0
  %2720 = vmatpush1.xpose.msra.mxu0 0.0
  %2721 = vmatprep.subr.mxu0 0.0
  %2722 = vmatpush1.xpose.msra.mxu0 0.0
  %2723 = vmatprep.subr.mxu0 0.0
  %2724 = vmatpush1.xpose.msra.mxu0 0.0
  %2725 = vmatprep.subr.mxu0 0.0
  %2726 = vmatpush1.xpose.msra.mxu0 0.0
  %2727 = vmatprep.subr.mxu0 0.0
  %2728 = vmatpush1.xpose.msra.mxu0 0.0
  %2729 = vmatprep.subr.mxu0 0.0
  %2730 = vmatpush1.xpose.msra.mxu0 0.0
  %2731 = vmatprep.subr.mxu0 0.0
  %2732 = vmatpush1.xpose.msra.mxu0 0.0
  %2733 = vmatprep.subr.mxu0 0.0
  %2734 = vmatpush1.xpose.msra.mxu0 0.0
  %2735 = vmatprep.subr.mxu0 0.0
  %2736 = vmatpush1.xpose.msra.mxu0 0.0
  %2737 = vmatprep.subr.mxu0 0.0
  %2738 = vmatpush1.xpose.msra.mxu0 0.0
  %2739 = vmatprep.mubr.f32.mxu0 0.0
  %2740 = vmatmul.mubr.f32.gmra.mrb[0].mxu0 %v2667
  %v2741 = vpop.f32.mrb[0].mxu0
  %v2742 = vadd.f32 0.0, %v2741
  %v2743 = vpop.f32.mrb[0].mxu0
  %2744 = vmatprep.mubr.f32.mxu0 0.0
  %2745 = vmatmul.mubr.f32.gmra.mrb[0].mxu0 %v2669
  %v2746 = vpop.f32.mrb[0].mxu0
  %v2747 = vadd.f32 0.0, %v2746
  %v2748 = vpop.f32.mrb[0].mxu0
  %2749 = vdwg.mxu0
  %2750 = vrot.lane.b32.xlu0 %v2553, 96
  %v2751 = vpop.permute.xlu0 %2750
  %2752 = vrot.lane.b32.xlu0 %v2555, 96
  %v2753 = vpop.permute.xlu0 %2752
  %v2754 = vsel %vm346, %v2553, 0
  %v2756 = vsel %vm346, %v2555, 0
  %v2758 = vsel %vm346, %v2751, 0
  %v2760 = vsel %vm346, %v2753, 0
  %2762 = vmatprep.subr.mxu0 0.0
  %2763 = vmatpush1.xpose.msra.mxu0 %v2758
  %2764 = vmatprep.subr.mxu0 0.0
  %2765 = vmatpush1.xpose.msra.mxu0 %v2760
  %2766 = vmatprep.subr.mxu0 0.0
  %2767 = vmatpush1.xpose.msra.mxu0 0.0
  %2768 = vmatprep.subr.mxu0 0.0
  %2769 = vmatpush1.xpose.msra.mxu0 0.0
  %2770 = vmatprep.subr.mxu0 0.0
  %2771 = vmatpush1.xpose.msra.mxu0 0.0
  %2772 = vmatprep.subr.mxu0 0.0
  %2773 = vmatpush1.xpose.msra.mxu0 0.0
  %2774 = vmatprep.subr.mxu0 0.0
  %2775 = vmatpush1.xpose.msra.mxu0 0.0
  %2776 = vmatprep.subr.mxu0 0.0
  %2777 = vmatpush1.xpose.msra.mxu0 0.0
  %2778 = vmatprep.subr.mxu0 0.0
  %2779 = vmatpush1.xpose.msra.mxu0 0.0
  %2780 = vmatprep.subr.mxu0 0.0
  %2781 = vmatpush1.xpose.msra.mxu0 0.0
  %2782 = vmatprep.subr.mxu0 0.0
  %2783 = vmatpush1.xpose.msra.mxu0 0.0
  %2784 = vmatprep.subr.mxu0 0.0
  %2785 = vmatpush1.xpose.msra.mxu0 0.0
  %2786 = vmatprep.subr.mxu0 0.0
  %2787 = vmatpush1.xpose.msra.mxu0 0.0
  %2788 = vmatprep.subr.mxu0 0.0
  %2789 = vmatpush1.xpose.msra.mxu0 0.0
  %2790 = vmatprep.subr.mxu0 0.0
  %2791 = vmatpush1.xpose.msra.mxu0 0.0
  %2792 = vmatprep.subr.mxu0 0.0
  %2793 = vmatpush1.xpose.msra.mxu0 0.0
  %2794 = vmatprep.subr.mxu0 0.0
  %2795 = vmatpush1.xpose.msra.mxu0 0.0
  %2796 = vmatprep.subr.mxu0 0.0
  %2797 = vmatpush1.xpose.msra.mxu0 0.0
  %2798 = vmatprep.subr.mxu0 0.0
  %2799 = vmatpush1.xpose.msra.mxu0 0.0
  %2800 = vmatprep.subr.mxu0 0.0
  %2801 = vmatpush1.xpose.msra.mxu0 0.0
  %2802 = vmatprep.subr.mxu0 0.0
  %2803 = vmatpush1.xpose.msra.mxu0 0.0
  %2804 = vmatprep.subr.mxu0 0.0
  %2805 = vmatpush1.xpose.msra.mxu0 0.0
  %2806 = vmatprep.subr.mxu0 0.0
  %2807 = vmatpush1.xpose.msra.mxu0 0.0
  %2808 = vmatprep.subr.mxu0 0.0
  %2809 = vmatpush1.xpose.msra.mxu0 0.0
  %2810 = vmatprep.subr.mxu0 0.0
  %2811 = vmatpush1.xpose.msra.mxu0 0.0
  %2812 = vmatprep.subr.mxu0 0.0
  %2813 = vmatpush1.xpose.msra.mxu0 0.0
  %2814 = vmatprep.subr.mxu0 0.0
  %2815 = vmatpush1.xpose.msra.mxu0 0.0
  %2816 = vmatprep.subr.mxu0 0.0
  %2817 = vmatpush1.xpose.msra.mxu0 0.0
  %2818 = vmatprep.subr.mxu0 0.0
  %2819 = vmatpush1.xpose.msra.mxu0 0.0
  %2820 = vmatprep.subr.mxu0 0.0
  %2821 = vmatpush1.xpose.msra.mxu0 0.0
  %2822 = vmatprep.subr.mxu0 0.0
  %2823 = vmatpush1.xpose.msra.mxu0 0.0
  %2824 = vmatprep.subr.mxu0 0.0
  %2825 = vmatpush1.xpose.msra.mxu0 0.0
  %2826 = vmatprep.mubr.f32.mxu0 0.0
  %2827 = vmatmul.mubr.f32.gmra.mrb[0].mxu0 %v2754
  %v2828 = vpop.f32.mrb[0].mxu0
  %v2829 = vadd.f32 0.0, %v2828
  %v2830 = vpop.f32.mrb[0].mxu0
  %2831 = vmatprep.mubr.f32.mxu0 0.0
  %2832 = vmatmul.mubr.f32.gmra.mrb[0].mxu0 %v2756
  %v2833 = vpop.f32.mrb[0].mxu0
  %v2834 = vadd.f32 0.0, %v2833
  %v2835 = vpop.f32.mrb[0].mxu0
  %2836 = vdwg.mxu0
  %2837 = vrot.lane.b32.xlu0 %v2557, 96
  %v2838 = vpop.permute.xlu0 %2837
  %2839 = vrot.lane.b32.xlu0 %v2559, 96
  %v2840 = vpop.permute.xlu0 %2839
  %v2841 = vsel %vm346, %v2557, 0
  %v2843 = vsel %vm346, %v2559, 0
  %v2845 = vsel %vm346, %v2838, 0
  %v2847 = vsel %vm346, %v2840, 0
  %2849 = vmatprep.subr.mxu0 0.0
  %2850 = vmatpush1.xpose.msra.mxu0 %v2845
  %2851 = vmatprep.subr.mxu0 0.0
  %2852 = vmatpush1.xpose.msra.mxu0 %v2847
  %2853 = vmatprep.subr.mxu0 0.0
  %2854 = vmatpush1.xpose.msra.mxu0 0.0
  %2855 = vmatprep.subr.mxu0 0.0
  %2856 = vmatpush1.xpose.msra.mxu0 0.0
  %2857 = vmatprep.subr.mxu0 0.0
  %2858 = vmatpush1.xpose.msra.mxu0 0.0
  %2859 = vmatprep.subr.mxu0 0.0
  %2860 = vmatpush1.xpose.msra.mxu0 0.0
  %2861 = vmatprep.subr.mxu0 0.0
  %2862 = vmatpush1.xpose.msra.mxu0 0.0
  %2863 = vmatprep.subr.mxu0 0.0
  %2864 = vmatpush1.xpose.msra.mxu0 0.0
  %2865 = vmatprep.subr.mxu0 0.0
  %2866 = vmatpush1.xpose.msra.mxu0 0.0
  %2867 = vmatprep.subr.mxu0 0.0
  %2868 = vmatpush1.xpose.msra.mxu0 0.0
  %2869 = vmatprep.subr.mxu0 0.0
  %2870 = vmatpush1.xpose.msra.mxu0 0.0
  %2871 = vmatprep.subr.mxu0 0.0
  %2872 = vmatpush1.xpose.msra.mxu0 0.0
  %2873 = vmatprep.subr.mxu0 0.0
  %2874 = vmatpush1.xpose.msra.mxu0 0.0
  %2875 = vmatprep.subr.mxu0 0.0
  %2876 = vmatpush1.xpose.msra.mxu0 0.0
  %2877 = vmatprep.subr.mxu0 0.0
  %2878 = vmatpush1.xpose.msra.mxu0 0.0
  %2879 = vmatprep.subr.mxu0 0.0
  %2880 = vmatpush1.xpose.msra.mxu0 0.0
  %2881 = vmatprep.subr.mxu0 0.0
  %2882 = vmatpush1.xpose.msra.mxu0 0.0
  %2883 = vmatprep.subr.mxu0 0.0
  %2884 = vmatpush1.xpose.msra.mxu0 0.0
  %2885 = vmatprep.subr.mxu0 0.0
  %2886 = vmatpush1.xpose.msra.mxu0 0.0
  %2887 = vmatprep.subr.mxu0 0.0
  %2888 = vmatpush1.xpose.msra.mxu0 0.0
  %2889 = vmatprep.subr.mxu0 0.0
  %2890 = vmatpush1.xpose.msra.mxu0 0.0
  %2891 = vmatprep.subr.mxu0 0.0
  %2892 = vmatpush1.xpose.msra.mxu0 0.0
  %2893 = vmatprep.subr.mxu0 0.0
  %2894 = vmatpush1.xpose.msra.mxu0 0.0
  %2895 = vmatprep.subr.mxu0 0.0
  %2896 = vmatpush1.xpose.msra.mxu0 0.0
  %2897 = vmatprep.subr.mxu0 0.0
  %2898 = vmatpush1.xpose.msra.mxu0 0.0
  %2899 = vmatprep.subr.mxu0 0.0
  %2900 = vmatpush1.xpose.msra.mxu0 0.0
  %2901 = vmatprep.subr.mxu0 0.0
  %2902 = vmatpush1.xpose.msra.mxu0 0.0
  %2903 = vmatprep.subr.mxu0 0.0
  %2904 = vmatpush1.xpose.msra.mxu0 0.0
  %2905 = vmatprep.subr.mxu0 0.0
  %2906 = vmatpush1.xpose.msra.mxu0 0.0
  %2907 = vmatprep.subr.mxu0 0.0
  %2908 = vmatpush1.xpose.msra.mxu0 0.0
  %2909 = vmatprep.subr.mxu0 0.0
  %2910 = vmatpush1.xpose.msra.mxu0 0.0
  %2911 = vmatprep.subr.mxu0 0.0
  %2912 = vmatpush1.xpose.msra.mxu0 0.0
  %2913 = vmatprep.mubr.f32.mxu0 0.0
  %2914 = vmatmul.mubr.f32.gmra.mrb[0].mxu0 %v2841
  %v2915 = vpop.f32.mrb[0].mxu0
  %v2916 = vadd.f32 0.0, %v2915
  %v2917 = vpop.f32.mrb[0].mxu0
  %2918 = vmatprep.mubr.f32.mxu0 0.0
  %2919 = vmatmul.mubr.f32.gmra.mrb[0].mxu0 %v2843
  %v2920 = vpop.f32.mrb[0].mxu0
  %v2921 = vadd.f32 0.0, %v2920
  %v2922 = vpop.f32.mrb[0].mxu0
  %2923 = vdwg.mxu0
  %2924 = vrot.lane.b32.xlu0 %v2563, 96
  %v2925 = vpop.permute.xlu0 %2924
  %2926 = vrot.lane.b32.xlu0 %v2562, 96
  %v2927 = vpop.permute.xlu0 %2926
  %v2928 = vsel %vm346, %v2563, 0
  %v2930 = vsel %vm346, %v2562, 0
  %v2932 = vsel %vm346, %v2925, 0
  %v2934 = vsel %vm346, %v2927, 0
  %2936 = vmatprep.subr.mxu0 0.0
  %2937 = vmatpush1.xpose.msra.mxu0 %v2932
  %2938 = vmatprep.subr.mxu0 0.0
  %2939 = vmatpush1.xpose.msra.mxu0 %v2934
  %2940 = vmatprep.subr.mxu0 0.0
  %2941 = vmatpush1.xpose.msra.mxu0 0.0
  %2942 = vmatprep.subr.mxu0 0.0
  %2943 = vmatpush1.xpose.msra.mxu0 0.0
  %2944 = vmatprep.subr.mxu0 0.0
  %2945 = vmatpush1.xpose.msra.mxu0 0.0
  %2946 = vmatprep.subr.mxu0 0.0
  %2947 = vmatpush1.xpose.msra.mxu0 0.0
  %2948 = vmatprep.subr.mxu0 0.0
  %2949 = vmatpush1.xpose.msra.mxu0 0.0
  %2950 = vmatprep.subr.mxu0 0.0
  %2951 = vmatpush1.xpose.msra.mxu0 0.0
  %2952 = vmatprep.subr.mxu0 0.0
  %2953 = vmatpush1.xpose.msra.mxu0 0.0
  %2954 = vmatprep.subr.mxu0 0.0
  %2955 = vmatpush1.xpose.msra.mxu0 0.0
  %2956 = vmatprep.subr.mxu0 0.0
  %2957 = vmatpush1.xpose.msra.mxu0 0.0
  %2958 = vmatprep.subr.mxu0 0.0
  %2959 = vmatpush1.xpose.msra.mxu0 0.0
  %2960 = vmatprep.subr.mxu0 0.0
  %2961 = vmatpush1.xpose.msra.mxu0 0.0
  %2962 = vmatprep.subr.mxu0 0.0
  %2963 = vmatpush1.xpose.msra.mxu0 0.0
  %2964 = vmatprep.subr.mxu0 0.0
  %2965 = vmatpush1.xpose.msra.mxu0 0.0
  %2966 = vmatprep.subr.mxu0 0.0
  %2967 = vmatpush1.xpose.msra.mxu0 0.0
  %2968 = vmatprep.subr.mxu0 0.0
  %2969 = vmatpush1.xpose.msra.mxu0 0.0
  %2970 = vmatprep.subr.mxu0 0.0
  %2971 = vmatpush1.xpose.msra.mxu0 0.0
  %2972 = vmatprep.subr.mxu0 0.0
  %2973 = vmatpush1.xpose.msra.mxu0 0.0
  %2974 = vmatprep.subr.mxu0 0.0
  %2975 = vmatpush1.xpose.msra.mxu0 0.0
  %2976 = vmatprep.subr.mxu0 0.0
  %2977 = vmatpush1.xpose.msra.mxu0 0.0
  %2978 = vmatprep.subr.mxu0 0.0
  %2979 = vmatpush1.xpose.msra.mxu0 0.0
  %2980 = vmatprep.subr.mxu0 0.0
  %2981 = vmatpush1.xpose.msra.mxu0 0.0
  %2982 = vmatprep.subr.mxu0 0.0
  %2983 = vmatpush1.xpose.msra.mxu0 0.0
  %2984 = vmatprep.subr.mxu0 0.0
  %2985 = vmatpush1.xpose.msra.mxu0 0.0
  %2986 = vmatprep.subr.mxu0 0.0
  %2987 = vmatpush1.xpose.msra.mxu0 0.0
  %2988 = vmatprep.subr.mxu0 0.0
  %2989 = vmatpush1.xpose.msra.mxu0 0.0
  %2990 = vmatprep.subr.mxu0 0.0
  %2991 = vmatpush1.xpose.msra.mxu0 0.0
  %2992 = vmatprep.subr.mxu0 0.0
  %2993 = vmatpush1.xpose.msra.mxu0 0.0
  %2994 = vmatprep.subr.mxu0 0.0
  %2995 = vmatpush1.xpose.msra.mxu0 0.0
  %2996 = vmatprep.subr.mxu0 0.0
  %2997 = vmatpush1.xpose.msra.mxu0 0.0
  %2998 = vmatprep.subr.mxu0 0.0
  %2999 = vmatpush1.xpose.msra.mxu0 0.0
  %3000 = vmatprep.mubr.f32.mxu0 0.0
  %3001 = vmatmul.mubr.f32.gmra.mrb[0].mxu0 %v2928
  %v3002 = vpop.f32.mrb[0].mxu0
  %v3003 = vadd.f32 0.0, %v3002
  %v3004 = vpop.f32.mrb[0].mxu0
  %3005 = vmatprep.mubr.f32.mxu0 0.0
  %3006 = vmatmul.mubr.f32.gmra.mrb[0].mxu0 %v2930
  %v3007 = vpop.f32.mrb[0].mxu0
  %v3008 = vadd.f32 0.0, %v3007
  %v3009 = vpop.f32.mrb[0].mxu0
  %3010 = vdwg.mxu0
  %3011 = vrot.lane.b32.xlu0 %v2565, 96
  %v3012 = vpop.permute.xlu0 %3011
  %3013 = vrot.lane.b32.xlu0 %v2567, 96
  %v3014 = vpop.permute.xlu0 %3013
  %v3015 = vsel %vm346, %v2565, 0
  %v3017 = vsel %vm346, %v2567, 0
  %v3019 = vsel %vm346, %v3012, 0
  %v3021 = vsel %vm346, %v3014, 0
  %3023 = vmatprep.subr.mxu0 0.0
  %3024 = vmatpush1.xpose.msra.mxu0 %v3019
  %3025 = vmatprep.subr.mxu0 0.0
  %3026 = vmatpush1.xpose.msra.mxu0 %v3021
  %3027 = vmatprep.subr.mxu0 0.0
  %3028 = vmatpush1.xpose.msra.mxu0 0.0
  %3029 = vmatprep.subr.mxu0 0.0
  %3030 = vmatpush1.xpose.msra.mxu0 0.0
  %3031 = vmatprep.subr.mxu0 0.0
  %3032 = vmatpush1.xpose.msra.mxu0 0.0
  %3033 = vmatprep.subr.mxu0 0.0
  %3034 = vmatpush1.xpose.msra.mxu0 0.0
  %3035 = vmatprep.subr.mxu0 0.0
  %3036 = vmatpush1.xpose.msra.mxu0 0.0
  %3037 = vmatprep.subr.mxu0 0.0
  %3038 = vmatpush1.xpose.msra.mxu0 0.0
  %3039 = vmatprep.subr.mxu0 0.0
  %3040 = vmatpush1.xpose.msra.mxu0 0.0
  %3041 = vmatprep.subr.mxu0 0.0
  %3042 = vmatpush1.xpose.msra.mxu0 0.0
  %3043 = vmatprep.subr.mxu0 0.0
  %3044 = vmatpush1.xpose.msra.mxu0 0.0
  %3045 = vmatprep.subr.mxu0 0.0
  %3046 = vmatpush1.xpose.msra.mxu0 0.0
  %3047 = vmatprep.subr.mxu0 0.0
  %3048 = vmatpush1.xpose.msra.mxu0 0.0
  %3049 = vmatprep.subr.mxu0 0.0
  %3050 = vmatpush1.xpose.msra.mxu0 0.0
  %3051 = vmatprep.subr.mxu0 0.0
  %3052 = vmatpush1.xpose.msra.mxu0 0.0
  %3053 = vmatprep.subr.mxu0 0.0
  %3054 = vmatpush1.xpose.msra.mxu0 0.0
  %3055 = vmatprep.subr.mxu0 0.0
  %3056 = vmatpush1.xpose.msra.mxu0 0.0
  %3057 = vmatprep.subr.mxu0 0.0
  %3058 = vmatpush1.xpose.msra.mxu0 0.0
  %3059 = vmatprep.subr.mxu0 0.0
  %3060 = vmatpush1.xpose.msra.mxu0 0.0
  %3061 = vmatprep.subr.mxu0 0.0
  %3062 = vmatpush1.xpose.msra.mxu0 0.0
  %3063 = vmatprep.subr.mxu0 0.0
  %3064 = vmatpush1.xpose.msra.mxu0 0.0
  %3065 = vmatprep.subr.mxu0 0.0
  %3066 = vmatpush1.xpose.msra.mxu0 0.0
  %3067 = vmatprep.subr.mxu0 0.0
  %3068 = vmatpush1.xpose.msra.mxu0 0.0
  %3069 = vmatprep.subr.mxu0 0.0
  %3070 = vmatpush1.xpose.msra.mxu0 0.0
  %3071 = vmatprep.subr.mxu0 0.0
  %3072 = vmatpush1.xpose.msra.mxu0 0.0
  %3073 = vmatprep.subr.mxu0 0.0
  %3074 = vmatpush1.xpose.msra.mxu0 0.0
  %3075 = vmatprep.subr.mxu0 0.0
  %3076 = vmatpush1.xpose.msra.mxu0 0.0
  %3077 = vmatprep.subr.mxu0 0.0
  %3078 = vmatpush1.xpose.msra.mxu0 0.0
  %3079 = vmatprep.subr.mxu0 0.0
  %3080 = vmatpush1.xpose.msra.mxu0 0.0
  %3081 = vmatprep.subr.mxu0 0.0
  %3082 = vmatpush1.xpose.msra.mxu0 0.0
  %3083 = vmatprep.subr.mxu0 0.0
  %3084 = vmatpush1.xpose.msra.mxu0 0.0
  %3085 = vmatprep.subr.mxu0 0.0
  %3086 = vmatpush1.xpose.msra.mxu0 0.0
  %3087 = vmatprep.mubr.f32.mxu0 0.0
  %3088 = vmatmul.mubr.f32.gmra.mrb[0].mxu0 %v3015
  %v3089 = vpop.f32.mrb[0].mxu0
  %v3090 = vadd.f32 0.0, %v3089
  %v3091 = vpop.f32.mrb[0].mxu0
  %3092 = vmatprep.mubr.f32.mxu0 0.0
  %3093 = vmatmul.mubr.f32.gmra.mrb[0].mxu0 %v3017
  %v3094 = vpop.f32.mrb[0].mxu0
  %v3095 = vadd.f32 0.0, %v3094
  %v3096 = vpop.f32.mrb[0].mxu0
  %3097 = vdwg.mxu0
  %3098 = vrot.lane.b32.xlu0 %v2569, 96
  %v3099 = vpop.permute.xlu0 %3098
  %3100 = vrot.lane.b32.xlu0 %v2571, 96
  %v3101 = vpop.permute.xlu0 %3100
  %v3102 = vsel %vm346, %v2569, 0
  %v3104 = vsel %vm346, %v2571, 0
  %v3106 = vsel %vm346, %v3099, 0
  %v3108 = vsel %vm346, %v3101, 0
  %3110 = vmatprep.subr.mxu0 0.0
  %3111 = vmatpush1.xpose.msra.mxu0 %v3106
  %3112 = vmatprep.subr.mxu0 0.0
  %3113 = vmatpush1.xpose.msra.mxu0 %v3108
  %3114 = vmatprep.subr.mxu0 0.0
  %3115 = vmatpush1.xpose.msra.mxu0 0.0
  %3116 = vmatprep.subr.mxu0 0.0
  %3117 = vmatpush1.xpose.msra.mxu0 0.0
  %3118 = vmatprep.subr.mxu0 0.0
  %3119 = vmatpush1.xpose.msra.mxu0 0.0
  %3120 = vmatprep.subr.mxu0 0.0
  %3121 = vmatpush1.xpose.msra.mxu0 0.0
  %3122 = vmatprep.subr.mxu0 0.0
  %3123 = vmatpush1.xpose.msra.mxu0 0.0
  %3124 = vmatprep.subr.mxu0 0.0
  %3125 = vmatpush1.xpose.msra.mxu0 0.0
  %3126 = vmatprep.subr.mxu0 0.0
  %3127 = vmatpush1.xpose.msra.mxu0 0.0
  %3128 = vmatprep.subr.mxu0 0.0
  %3129 = vmatpush1.xpose.msra.mxu0 0.0
  %3130 = vmatprep.subr.mxu0 0.0
  %3131 = vmatpush1.xpose.msra.mxu0 0.0
  %3132 = vmatprep.subr.mxu0 0.0
  %3133 = vmatpush1.xpose.msra.mxu0 0.0
  %3134 = vmatprep.subr.mxu0 0.0
  %3135 = vmatpush1.xpose.msra.mxu0 0.0
  %3136 = vmatprep.subr.mxu0 0.0
  %3137 = vmatpush1.xpose.msra.mxu0 0.0
  %3138 = vmatprep.subr.mxu0 0.0
  %3139 = vmatpush1.xpose.msra.mxu0 0.0
  %3140 = vmatprep.subr.mxu0 0.0
  %3141 = vmatpush1.xpose.msra.mxu0 0.0
  %3142 = vmatprep.subr.mxu0 0.0
  %3143 = vmatpush1.xpose.msra.mxu0 0.0
  %3144 = vmatprep.subr.mxu0 0.0
  %3145 = vmatpush1.xpose.msra.mxu0 0.0
  %3146 = vmatprep.subr.mxu0 0.0
  %3147 = vmatpush1.xpose.msra.mxu0 0.0
  %3148 = vmatprep.subr.mxu0 0.0
  %3149 = vmatpush1.xpose.msra.mxu0 0.0
  %3150 = vmatprep.subr.mxu0 0.0
  %3151 = vmatpush1.xpose.msra.mxu0 0.0
  %3152 = vmatprep.subr.mxu0 0.0
  %3153 = vmatpush1.xpose.msra.mxu0 0.0
  %3154 = vmatprep.subr.mxu0 0.0
  %3155 = vmatpush1.xpose.msra.mxu0 0.0
  %3156 = vmatprep.subr.mxu0 0.0
  %3157 = vmatpush1.xpose.msra.mxu0 0.0
  %3158 = vmatprep.subr.mxu0 0.0
  %3159 = vmatpush1.xpose.msra.mxu0 0.0
  %3160 = vmatprep.subr.mxu0 0.0
  %3161 = vmatpush1.xpose.msra.mxu0 0.0
  %3162 = vmatprep.subr.mxu0 0.0
  %3163 = vmatpush1.xpose.msra.mxu0 0.0
  %3164 = vmatprep.subr.mxu0 0.0
  %3165 = vmatpush1.xpose.msra.mxu0 0.0
  %3166 = vmatprep.subr.mxu0 0.0
  %3167 = vmatpush1.xpose.msra.mxu0 0.0
  %3168 = vmatprep.subr.mxu0 0.0
  %3169 = vmatpush1.xpose.msra.mxu0 0.0
  %3170 = vmatprep.subr.mxu0 0.0
  %3171 = vmatpush1.xpose.msra.mxu0 0.0
  %3172 = vmatprep.subr.mxu0 0.0
  %3173 = vmatpush1.xpose.msra.mxu0 0.0
  %3174 = vmatprep.mubr.f32.mxu0 0.0
  %3175 = vmatmul.mubr.f32.gmra.mrb[0].mxu0 %v3102
  %v3176 = vpop.f32.mrb[0].mxu0
  %v3177 = vadd.f32 0.0, %v3176
  %v3178 = vpop.f32.mrb[0].mxu0
  %3179 = vmatprep.mubr.f32.mxu0 0.0
  %3180 = vmatmul.mubr.f32.gmra.mrb[0].mxu0 %v3104
  %v3181 = vpop.f32.mrb[0].mxu0
  %v3182 = vadd.f32 0.0, %v3181
  %v3183 = vpop.f32.mrb[0].mxu0
  %3184 = vdwg.mxu0
  %3185 = vrot.lane.b32.xlu0 %v2573, 96
  %v3186 = vpop.permute.xlu0 %3185
  %3187 = vrot.lane.b32.xlu0 %v2575, 96
  %v3188 = vpop.permute.xlu0 %3187
  %v3189 = vsel %vm346, %v2573, 0
  %v3191 = vsel %vm346, %v2575, 0
  %v3193 = vsel %vm346, %v3186, 0
  %v3195 = vsel %vm346, %v3188, 0
  %3197 = vmatprep.subr.mxu0 0.0
  %3198 = vmatpush1.xpose.msra.mxu0 %v3193
  %3199 = vmatprep.subr.mxu0 0.0
  %3200 = vmatpush1.xpose.msra.mxu0 %v3195
  %3201 = vmatprep.subr.mxu0 0.0
  %3202 = vmatpush1.xpose.msra.mxu0 0.0
  %3203 = vmatprep.subr.mxu0 0.0
  %3204 = vmatpush1.xpose.msra.mxu0 0.0
  %3205 = vmatprep.subr.mxu0 0.0
  %3206 = vmatpush1.xpose.msra.mxu0 0.0
  %3207 = vmatprep.subr.mxu0 0.0
  %3208 = vmatpush1.xpose.msra.mxu0 0.0
  %3209 = vmatprep.subr.mxu0 0.0
  %3210 = vmatpush1.xpose.msra.mxu0 0.0
  %3211 = vmatprep.subr.mxu0 0.0
  %3212 = vmatpush1.xpose.msra.mxu0 0.0
  %3213 = vmatprep.subr.mxu0 0.0
  %3214 = vmatpush1.xpose.msra.mxu0 0.0
  %3215 = vmatprep.subr.mxu0 0.0
  %3216 = vmatpush1.xpose.msra.mxu0 0.0
  %3217 = vmatprep.subr.mxu0 0.0
  %3218 = vmatpush1.xpose.msra.mxu0 0.0
  %3219 = vmatprep.subr.mxu0 0.0
  %3220 = vmatpush1.xpose.msra.mxu0 0.0
  %3221 = vmatprep.subr.mxu0 0.0
  %3222 = vmatpush1.xpose.msra.mxu0 0.0
  %3223 = vmatprep.subr.mxu0 0.0
  %3224 = vmatpush1.xpose.msra.mxu0 0.0
  %3225 = vmatprep.subr.mxu0 0.0
  %3226 = vmatpush1.xpose.msra.mxu0 0.0
  %3227 = vmatprep.subr.mxu0 0.0
  %3228 = vmatpush1.xpose.msra.mxu0 0.0
  %3229 = vmatprep.subr.mxu0 0.0
  %3230 = vmatpush1.xpose.msra.mxu0 0.0
  %3231 = vmatprep.subr.mxu0 0.0
  %3232 = vmatpush1.xpose.msra.mxu0 0.0
  %3233 = vmatprep.subr.mxu0 0.0
  %3234 = vmatpush1.xpose.msra.mxu0 0.0
  %3235 = vmatprep.subr.mxu0 0.0
  %3236 = vmatpush1.xpose.msra.mxu0 0.0
  %3237 = vmatprep.subr.mxu0 0.0
  %3238 = vmatpush1.xpose.msra.mxu0 0.0
  %3239 = vmatprep.subr.mxu0 0.0
  %3240 = vmatpush1.xpose.msra.mxu0 0.0
  %3241 = vmatprep.subr.mxu0 0.0
  %3242 = vmatpush1.xpose.msra.mxu0 0.0
  %3243 = vmatprep.subr.mxu0 0.0
  %3244 = vmatpush1.xpose.msra.mxu0 0.0
  %3245 = vmatprep.subr.mxu0 0.0
  %3246 = vmatpush1.xpose.msra.mxu0 0.0
  %3247 = vmatprep.subr.mxu0 0.0
  %3248 = vmatpush1.xpose.msra.mxu0 0.0
  %3249 = vmatprep.subr.mxu0 0.0
  %3250 = vmatpush1.xpose.msra.mxu0 0.0
  %3251 = vmatprep.subr.mxu0 0.0
  %3252 = vmatpush1.xpose.msra.mxu0 0.0
  %3253 = vmatprep.subr.mxu0 0.0
  %3254 = vmatpush1.xpose.msra.mxu0 0.0
  %3255 = vmatprep.subr.mxu0 0.0
  %3256 = vmatpush1.xpose.msra.mxu0 0.0
  %3257 = vmatprep.subr.mxu0 0.0
  %3258 = vmatpush1.xpose.msra.mxu0 0.0
  %3259 = vmatprep.subr.mxu0 0.0
  %3260 = vmatpush1.xpose.msra.mxu0 0.0
  %3261 = vmatprep.mubr.f32.mxu0 0.0
  %3262 = vmatmul.mubr.f32.gmra.mrb[0].mxu0 %v3189
  %v3263 = vpop.f32.mrb[0].mxu0
  %v3264 = vadd.f32 0.0, %v3263
  %v3265 = vpop.f32.mrb[0].mxu0
  %3266 = vmatprep.mubr.f32.mxu0 0.0
  %3267 = vmatmul.mubr.f32.gmra.mrb[0].mxu0 %v3191
  %v3268 = vpop.f32.mrb[0].mxu0
  %v3269 = vadd.f32 0.0, %v3268
  %v3270 = vpop.f32.mrb[0].mxu0
  %3271 = vdwg.mxu0
  %v3272 = vsel %vm63, %v2655, -inf
  %3273 = vmax.xlane.f32.xlu0 %v3272
  %v3274 = vpop.xlane.xlu0 %3273
  %v3275 = vsel %vm1042, %v2660, -inf
  %3276 = vmax.xlane.f32.xlu0 %v3275
  %v3277 = vpop.xlane.xlu0 %3276
  %v3278 = vsel %vm63, %v2742, -inf
  %3279 = vmax.xlane.f32.xlu0 %v3278
  %v3280 = vpop.xlane.xlu0 %3279
  %v3281 = vsel %vm1042, %v2747, -inf
  %3282 = vmax.xlane.f32.xlu0 %v3281
  %v3283 = vpop.xlane.xlu0 %3282
  %v3284 = vsel %vm63, %v2829, -inf
  %3285 = vmax.xlane.f32.xlu0 %v3284
  %v3286 = vpop.xlane.xlu0 %3285
  %v3287 = vsel %vm1042, %v2834, -inf
  %3288 = vmax.xlane.f32.xlu0 %v3287
  %v3289 = vpop.xlane.xlu0 %3288
  %v3290 = vsel %vm63, %v2916, -inf
  %3291 = vmax.xlane.f32.xlu0 %v3290
  %v3292 = vpop.xlane.xlu0 %3291
  %v3293 = vsel %vm1042, %v2921, -inf
  %3294 = vmax.xlane.f32.xlu0 %v3293
  %v3295 = vpop.xlane.xlu0 %3294
  %v3296 = vsel %vm63, %v3003, -inf
  %3297 = vmax.xlane.f32.xlu0 %v3296
  %v3298 = vpop.xlane.xlu0 %3297
  %v3299 = vsel %vm1042, %v3008, -inf
  %3300 = vmax.xlane.f32.xlu0 %v3299
  %v3301 = vpop.xlane.xlu0 %3300
  %v3302 = vsel %vm63, %v3090, -inf
  %3303 = vmax.xlane.f32.xlu0 %v3302
  %v3304 = vpop.xlane.xlu0 %3303
  %v3305 = vsel %vm1042, %v3095, -inf
  %3306 = vmax.xlane.f32.xlu0 %v3305
  %v3307 = vpop.xlane.xlu0 %3306
  %v3308 = vsel %vm63, %v3177, -inf
  %3309 = vmax.xlane.f32.xlu0 %v3308
  %v3310 = vpop.xlane.xlu0 %3309
  %v3311 = vsel %vm1042, %v3182, -inf
  %3312 = vmax.xlane.f32.xlu0 %v3311
  %v3313 = vpop.xlane.xlu0 %3312
  %v3314 = vsel %vm63, %v3264, -inf
  %3315 = vmax.xlane.f32.xlu0 %v3314
  %v3316 = vpop.xlane.xlu0 %3315
  %v3317 = vsel %vm1042, %v3269, -inf
  %3318 = vmax.xlane.f32.xlu0 %v3317
  %v3319 = vpop.xlane.xlu0 %3318
  %v3320 = vsub.f32 %v2655, %v3274
  %v3321 = vsub.f32 %v2660, %v3277
  %v3322 = vsub.f32 %v2742, %v3280
  %v3323 = vsub.f32 %v2747, %v3283
  %v3324 = vsub.f32 %v2829, %v3286
  %v3325 = vsub.f32 %v2834, %v3289
  %v3326 = vsub.f32 %v2916, %v3292
  %v3327 = vsub.f32 %v2921, %v3295
  %v3328 = vsub.f32 %v3003, %v3298
  %v3329 = vsub.f32 %v3008, %v3301
  %v3330 = vsub.f32 %v3090, %v3304
  %v3331 = vsub.f32 %v3095, %v3307
  %v3332 = vsub.f32 %v3177, %v3310
  %v3333 = vsub.f32 %v3182, %v3313
  %v3334 = vsub.f32 %v3264, %v3316
  %v3335 = vsub.f32 %v3269, %v3319
  %v3336 = vmul.f32 %v3320, 1.442695
  %v3337 = vpow.pop %v3336
  %v3338 = vmul.f32 %v3321, 1.442695
  %v3339 = vpow.pop %v3338
  %v3340 = vmul.f32 %v3322, 1.442695
  %v3341 = vpow.pop %v3340
  %v3342 = vmul.f32 %v3323, 1.442695
  %v3343 = vpow.pop %v3342
  %v3344 = vmul.f32 %v3324, 1.442695
  %v3345 = vpow.pop %v3344
  %v3346 = vmul.f32 %v3325, 1.442695
  %v3347 = vpow.pop %v3346
  %v3348 = vmul.f32 %v3326, 1.442695
  %v3349 = vpow.pop %v3348
  %v3350 = vmul.f32 %v3327, 1.442695
  %v3351 = vpow.pop %v3350
  %v3352 = vmul.f32 %v3328, 1.442695
  %v3353 = vpow.pop %v3352
  %v3354 = vmul.f32 %v3329, 1.442695
  %v3355 = vpow.pop %v3354
  %v3356 = vmul.f32 %v3330, 1.442695
  %v3357 = vpow.pop %v3356
  %v3358 = vmul.f32 %v3331, 1.442695
  %v3359 = vpow.pop %v3358
  %v3360 = vmul.f32 %v3332, 1.442695
  %v3361 = vpow.pop %v3360
  %v3362 = vmul.f32 %v3333, 1.442695
  %v3363 = vpow.pop %v3362
  %v3364 = vmul.f32 %v3334, 1.442695
  %v3365 = vpow.pop %v3364
  %v3366 = vmul.f32 %v3335, 1.442695
  %v3367 = vpow.pop %v3366
  %v3368 = vsel %vm63, %v3337, 0.0
  %3369 = vadd.xlane.f32.xlu0 %v3368
  %v3370 = vpop.xlane.xlu0 %3369
  %v3371 = vsel %vm1042, %v3339, 0.0
  %3372 = vadd.xlane.f32.xlu0 %v3371
  %v3373 = vpop.xlane.xlu0 %3372
  %v3374 = vsel %vm63, %v3341, 0.0
  %3375 = vadd.xlane.f32.xlu0 %v3374
  %v3376 = vpop.xlane.xlu0 %3375
  %v3377 = vsel %vm1042, %v3343, 0.0
  %3378 = vadd.xlane.f32.xlu0 %v3377
  %v3379 = vpop.xlane.xlu0 %3378
  %v3380 = vsel %vm63, %v3345, 0.0
  %3381 = vadd.xlane.f32.xlu0 %v3380
  %v3382 = vpop.xlane.xlu0 %3381
  %v3383 = vsel %vm1042, %v3347, 0.0
  %3384 = vadd.xlane.f32.xlu0 %v3383
  %v3385 = vpop.xlane.xlu0 %3384
  %v3386 = vsel %vm63, %v3349, 0.0
  %3387 = vadd.xlane.f32.xlu0 %v3386
  %v3388 = vpop.xlane.xlu0 %3387
  %v3389 = vsel %vm1042, %v3351, 0.0
  %3390 = vadd.xlane.f32.xlu0 %v3389
  %v3391 = vpop.xlane.xlu0 %3390
  %v3392 = vsel %vm63, %v3353, 0.0
  %3393 = vadd.xlane.f32.xlu0 %v3392
  %v3394 = vpop.xlane.xlu0 %3393
  %v3395 = vsel %vm1042, %v3355, 0.0
  %3396 = vadd.xlane.f32.xlu0 %v3395
  %v3397 = vpop.xlane.xlu0 %3396
  %v3398 = vsel %vm63, %v3357, 0.0
  %3399 = vadd.xlane.f32.xlu0 %v3398
  %v3400 = vpop.xlane.xlu0 %3399
  %v3401 = vsel %vm1042, %v3359, 0.0
  %3402 = vadd.xlane.f32.xlu0 %v3401
  %v3403 = vpop.xlane.xlu0 %3402
  %v3404 = vsel %vm63, %v3361, 0.0
  %3405 = vadd.xlane.f32.xlu0 %v3404
  %v3406 = vpop.xlane.xlu0 %3405
  %v3407 = vsel %vm1042, %v3363, 0.0
  %3408 = vadd.xlane.f32.xlu0 %v3407
  %v3409 = vpop.xlane.xlu0 %3408
  %v3410 = vsel %vm63, %v3365, 0.0
  %3411 = vadd.xlane.f32.xlu0 %v3410
  %v3412 = vpop.xlane.xlu0 %3411
  %v3413 = vsel %vm1042, %v3367, 0.0
  %3414 = vadd.xlane.f32.xlu0 %v3413
  %v3415 = vpop.xlane.xlu0 %3414
  %v3416 = vrcp.pop %v3370
  %v3417 = vrcp.pop %v3373
  %v3418 = vrcp.pop %v3376
  %v3419 = vrcp.pop %v3379
  %v3420 = vrcp.pop %v3382
  %v3421 = vrcp.pop %v3385
  %v3422 = vrcp.pop %v3388
  %v3423 = vrcp.pop %v3391
  %v3424 = vrcp.pop %v3394
  %v3425 = vrcp.pop %v3397
  %v3426 = vrcp.pop %v3400
  %v3427 = vrcp.pop %v3403
  %v3428 = vrcp.pop %v3406
  %v3429 = vrcp.pop %v3409
  %v3430 = vrcp.pop %v3412
  %v3431 = vrcp.pop %v3415
  %v3432 = vmul.f32 %v3337, %v3416
  %v3433 = vmul.f32 %v3339, %v3417
  %v3434 = vmul.f32 %v3341, %v3418
  %v3435 = vmul.f32 %v3343, %v3419
  %v3436 = vmul.f32 %v3345, %v3420
  %v3437 = vmul.f32 %v3347, %v3421
  %v3438 = vmul.f32 %v3349, %v3422
  %v3439 = vmul.f32 %v3351, %v3423
  %v3440 = vmul.f32 %v3353, %v3424
  %v3441 = vmul.f32 %v3355, %v3425
  %v3442 = vmul.f32 %v3357, %v3426
  %v3443 = vmul.f32 %v3359, %v3427
  %v3444 = vmul.f32 %v3361, %v3428
  %v3445 = vmul.f32 %v3363, %v3429
  %v3446 = vmul.f32 %v3365, %v3430
  %v3447 = vmul.f32 %v3367, %v3431
  %3448 = vrot.lane.b32.xlu0 %v2533, 64
  %v3449 = vpop.permute.xlu0 %3448
  %3450 = vrot.lane.b32.xlu0 %v2538, 64
  %v3451 = vpop.permute.xlu0 %3450
  %v3454 = vsel %vm63, %v3432, 0
  %v3457 = vsel %vm63, %v3433, 0
  %v3459 = vsel %vm56, %v3451, 0
  %3461 = vmatprep.subr.mxu0 0.0
  %3462 = vmatpush1.msra.mxu0 %v3449
  %3463 = vmatprep.subr.mxu0 0.0
  %3464 = vmatpush1.msra.mxu0 %v3459
  %3465 = vmatprep.subr.mxu0 0.0
  %3466 = vmatpush1.msra.mxu0 0.0
  %3467 = vmatprep.subr.mxu0 0.0
  %3468 = vmatpush1.msra.mxu0 0.0
  %3469 = vmatprep.subr.mxu0 0.0
  %3470 = vmatpush1.msra.mxu0 0.0
  %3471 = vmatprep.subr.mxu0 0.0
  %3472 = vmatpush1.msra.mxu0 0.0
  %3473 = vmatprep.subr.mxu0 0.0
  %3474 = vmatpush1.msra.mxu0 0.0
  %3475 = vmatprep.subr.mxu0 0.0
  %3476 = vmatpush1.msra.mxu0 0.0
  %3477 = vmatprep.subr.mxu0 0.0
  %3478 = vmatpush1.msra.mxu0 0.0
  %3479 = vmatprep.subr.mxu0 0.0
  %3480 = vmatpush1.msra.mxu0 0.0
  %3481 = vmatprep.subr.mxu0 0.0
  %3482 = vmatpush1.msra.mxu0 0.0
  %3483 = vmatprep.subr.mxu0 0.0
  %3484 = vmatpush1.msra.mxu0 0.0
  %3485 = vmatprep.subr.mxu0 0.0
  %3486 = vmatpush1.msra.mxu0 0.0
  %3487 = vmatprep.subr.mxu0 0.0
  %3488 = vmatpush1.msra.mxu0 0.0
  %3489 = vmatprep.subr.mxu0 0.0
  %3490 = vmatpush1.msra.mxu0 0.0
  %3491 = vmatprep.subr.mxu0 0.0
  %3492 = vmatpush1.msra.mxu0 0.0
  %3493 = vmatprep.subr.mxu0 0.0
  %3494 = vmatpush1.msra.mxu0 0.0
  %3495 = vmatprep.subr.mxu0 0.0
  %3496 = vmatpush1.msra.mxu0 0.0
  %3497 = vmatprep.subr.mxu0 0.0
  %3498 = vmatpush1.msra.mxu0 0.0
  %3499 = vmatprep.subr.mxu0 0.0
  %3500 = vmatpush1.msra.mxu0 0.0
  %3501 = vmatprep.subr.mxu0 0.0
  %3502 = vmatpush1.msra.mxu0 0.0
  %3503 = vmatprep.subr.mxu0 0.0
  %3504 = vmatpush1.msra.mxu0 0.0
  %3505 = vmatprep.subr.mxu0 0.0
  %3506 = vmatpush1.msra.mxu0 0.0
  %3507 = vmatprep.subr.mxu0 0.0
  %3508 = vmatpush1.msra.mxu0 0.0
  %3509 = vmatprep.subr.mxu0 0.0
  %3510 = vmatpush1.msra.mxu0 0.0
  %3511 = vmatprep.subr.mxu0 0.0
  %3512 = vmatpush1.msra.mxu0 0.0
  %3513 = vmatprep.subr.mxu0 0.0
  %3514 = vmatpush1.msra.mxu0 0.0
  %3515 = vmatprep.subr.mxu0 0.0
  %3516 = vmatpush1.msra.mxu0 0.0
  %3517 = vmatprep.subr.mxu0 0.0
  %3518 = vmatpush1.msra.mxu0 0.0
  %3519 = vmatprep.subr.mxu0 0.0
  %3520 = vmatpush1.msra.mxu0 0.0
  %3521 = vmatprep.subr.mxu0 0.0
  %3522 = vmatpush1.msra.mxu0 0.0
  %3523 = vmatprep.subr.mxu0 0.0
  %3524 = vmatpush1.msra.mxu0 0.0
  %3525 = vmatprep.mubr.f32.mxu0 0.0
  %3526 = vmatmul.mubr.f32.gmra.mrb[0].mxu0 %v3454
  %v3527 = vpop.f32.mrb[0].mxu0
  %v3528 = vadd.f32 0.0, %v3527
  %v3529 = vpop.f32.mrb[0].mxu0
  %3530 = vmatprep.mubr.f32.mxu0 0.0
  %3531 = vmatmul.mubr.f32.gmra.mrb[0].mxu0 %v3457
  %v3532 = vpop.f32.mrb[0].mxu0
  %v3533 = vadd.f32 0.0, %v3532
  %v3534 = vpop.f32.mrb[0].mxu0
  %3535 = vdwg.mxu0
  %3536 = vrot.lane.b32.xlu0 %v2549, 64
  %v3537 = vpop.permute.xlu0 %3536
  %3538 = vrot.lane.b32.xlu0 %v2551, 64
  %v3539 = vpop.permute.xlu0 %3538
  %v3542 = vsel %vm63, %v3434, 0
  %v3545 = vsel %vm63, %v3435, 0
  %v3547 = vsel %vm56, %v3539, 0
  %3549 = vmatprep.subr.mxu0 0.0
  %3550 = vmatpush1.msra.mxu0 %v3537
  %3551 = vmatprep.subr.mxu0 0.0
  %3552 = vmatpush1.msra.mxu0 %v3547
  %3553 = vmatprep.subr.mxu0 0.0
  %3554 = vmatpush1.msra.mxu0 0.0
  %3555 = vmatprep.subr.mxu0 0.0
  %3556 = vmatpush1.msra.mxu0 0.0
  %3557 = vmatprep.subr.mxu0 0.0
  %3558 = vmatpush1.msra.mxu0 0.0
  %3559 = vmatprep.subr.mxu0 0.0
  %3560 = vmatpush1.msra.mxu0 0.0
  %3561 = vmatprep.subr.mxu0 0.0
  %3562 = vmatpush1.msra.mxu0 0.0
  %3563 = vmatprep.subr.mxu0 0.0
  %3564 = vmatpush1.msra.mxu0 0.0
  %3565 = vmatprep.subr.mxu0 0.0
  %3566 = vmatpush1.msra.mxu0 0.0
  %3567 = vmatprep.subr.mxu0 0.0
  %3568 = vmatpush1.msra.mxu0 0.0
  %3569 = vmatprep.subr.mxu0 0.0
  %3570 = vmatpush1.msra.mxu0 0.0
  %3571 = vmatprep.subr.mxu0 0.0
  %3572 = vmatpush1.msra.mxu0 0.0
  %3573 = vmatprep.subr.mxu0 0.0
  %3574 = vmatpush1.msra.mxu0 0.0
  %3575 = vmatprep.subr.mxu0 0.0
  %3576 = vmatpush1.msra.mxu0 0.0
  %3577 = vmatprep.subr.mxu0 0.0
  %3578 = vmatpush1.msra.mxu0 0.0
  %3579 = vmatprep.subr.mxu0 0.0
  %3580 = vmatpush1.msra.mxu0 0.0
  %3581 = vmatprep.subr.mxu0 0.0
  %3582 = vmatpush1.msra.mxu0 0.0
  %3583 = vmatprep.subr.mxu0 0.0
  %3584 = vmatpush1.msra.mxu0 0.0
  %3585 = vmatprep.subr.mxu0 0.0
  %3586 = vmatpush1.msra.mxu0 0.0
  %3587 = vmatprep.subr.mxu0 0.0
  %3588 = vmatpush1.msra.mxu0 0.0
  %3589 = vmatprep.subr.mxu0 0.0
  %3590 = vmatpush1.msra.mxu0 0.0
  %3591 = vmatprep.subr.mxu0 0.0
  %3592 = vmatpush1.msra.mxu0 0.0
  %3593 = vmatprep.subr.mxu0 0.0
  %3594 = vmatpush1.msra.mxu0 0.0
  %3595 = vmatprep.subr.mxu0 0.0
  %3596 = vmatpush1.msra.mxu0 0.0
  %3597 = vmatprep.subr.mxu0 0.0
  %3598 = vmatpush1.msra.mxu0 0.0
  %3599 = vmatprep.subr.mxu0 0.0
  %3600 = vmatpush1.msra.mxu0 0.0
  %3601 = vmatprep.subr.mxu0 0.0
  %3602 = vmatpush1.msra.mxu0 0.0
  %3603 = vmatprep.subr.mxu0 0.0
  %3604 = vmatpush1.msra.mxu0 0.0
  %3605 = vmatprep.subr.mxu0 0.0
  %3606 = vmatpush1.msra.mxu0 0.0
  %3607 = vmatprep.subr.mxu0 0.0
  %3608 = vmatpush1.msra.mxu0 0.0
  %3609 = vmatprep.subr.mxu0 0.0
  %3610 = vmatpush1.msra.mxu0 0.0
  %3611 = vmatprep.subr.mxu0 0.0
  %3612 = vmatpush1.msra.mxu0 0.0
  %3613 = vmatprep.mubr.f32.mxu0 0.0
  %3614 = vmatmul.mubr.f32.gmra.mrb[0].mxu0 %v3542
  %v3615 = vpop.f32.mrb[0].mxu0
  %v3616 = vadd.f32 0.0, %v3615
  %v3617 = vpop.f32.mrb[0].mxu0
  %3618 = vmatprep.mubr.f32.mxu0 0.0
  %3619 = vmatmul.mubr.f32.gmra.mrb[0].mxu0 %v3545
  %v3620 = vpop.f32.mrb[0].mxu0
  %v3621 = vadd.f32 0.0, %v3620
  %v3622 = vpop.f32.mrb[0].mxu0
  %3623 = vdwg.mxu0
  %3624 = vrot.lane.b32.xlu0 %v2553, 64
  %v3625 = vpop.permute.xlu0 %3624
  %3626 = vrot.lane.b32.xlu0 %v2555, 64
  %v3627 = vpop.permute.xlu0 %3626
  %v3630 = vsel %vm63, %v3436, 0
  %v3633 = vsel %vm63, %v3437, 0
  %v3635 = vsel %vm56, %v3627, 0
  %3637 = vmatprep.subr.mxu0 0.0
  %3638 = vmatpush1.msra.mxu0 %v3625
  %3639 = vmatprep.subr.mxu0 0.0
  %3640 = vmatpush1.msra.mxu0 %v3635
  %3641 = vmatprep.subr.mxu0 0.0
  %3642 = vmatpush1.msra.mxu0 0.0
  %3643 = vmatprep.subr.mxu0 0.0
  %3644 = vmatpush1.msra.mxu0 0.0
  %3645 = vmatprep.subr.mxu0 0.0
  %3646 = vmatpush1.msra.mxu0 0.0
  %3647 = vmatprep.subr.mxu0 0.0
  %3648 = vmatpush1.msra.mxu0 0.0
  %3649 = vmatprep.subr.mxu0 0.0
  %3650 = vmatpush1.msra.mxu0 0.0
  %3651 = vmatprep.subr.mxu0 0.0
  %3652 = vmatpush1.msra.mxu0 0.0
  %3653 = vmatprep.subr.mxu0 0.0
  %3654 = vmatpush1.msra.mxu0 0.0
  %3655 = vmatprep.subr.mxu0 0.0
  %3656 = vmatpush1.msra.mxu0 0.0
  %3657 = vmatprep.subr.mxu0 0.0
  %3658 = vmatpush1.msra.mxu0 0.0
  %3659 = vmatprep.subr.mxu0 0.0
  %3660 = vmatpush1.msra.mxu0 0.0
  %3661 = vmatprep.subr.mxu0 0.0
  %3662 = vmatpush1.msra.mxu0 0.0
  %3663 = vmatprep.subr.mxu0 0.0
  %3664 = vmatpush1.msra.mxu0 0.0
  %3665 = vmatprep.subr.mxu0 0.0
  %3666 = vmatpush1.msra.mxu0 0.0
  %3667 = vmatprep.subr.mxu0 0.0
  %3668 = vmatpush1.msra.mxu0 0.0
  %3669 = vmatprep.subr.mxu0 0.0
  %3670 = vmatpush1.msra.mxu0 0.0
  %3671 = vmatprep.subr.mxu0 0.0
  %3672 = vmatpush1.msra.mxu0 0.0
  %3673 = vmatprep.subr.mxu0 0.0
  %3674 = vmatpush1.msra.mxu0 0.0
  %3675 = vmatprep.subr.mxu0 0.0
  %3676 = vmatpush1.msra.mxu0 0.0
  %3677 = vmatprep.subr.mxu0 0.0
  %3678 = vmatpush1.msra.mxu0 0.0
  %3679 = vmatprep.subr.mxu0 0.0
  %3680 = vmatpush1.msra.mxu0 0.0
  %3681 = vmatprep.subr.mxu0 0.0
  %3682 = vmatpush1.msra.mxu0 0.0
  %3683 = vmatprep.subr.mxu0 0.0
  %3684 = vmatpush1.msra.mxu0 0.0
  %3685 = vmatprep.subr.mxu0 0.0
  %3686 = vmatpush1.msra.mxu0 0.0
  %3687 = vmatprep.subr.mxu0 0.0
  %3688 = vmatpush1.msra.mxu0 0.0
  %3689 = vmatprep.subr.mxu0 0.0
  %3690 = vmatpush1.msra.mxu0 0.0
  %3691 = vmatprep.subr.mxu0 0.0
  %3692 = vmatpush1.msra.mxu0 0.0
  %3693 = vmatprep.subr.mxu0 0.0
  %3694 = vmatpush1.msra.mxu0 0.0
  %3695 = vmatprep.subr.mxu0 0.0
  %3696 = vmatpush1.msra.mxu0 0.0
  %3697 = vmatprep.subr.mxu0 0.0
  %3698 = vmatpush1.msra.mxu0 0.0
  %3699 = vmatprep.subr.mxu0 0.0
  %3700 = vmatpush1.msra.mxu0 0.0
  %3701 = vmatprep.mubr.f32.mxu0 0.0
  %3702 = vmatmul.mubr.f32.gmra.mrb[0].mxu0 %v3630
  %v3703 = vpop.f32.mrb[0].mxu0
  %v3704 = vadd.f32 0.0, %v3703
  %v3705 = vpop.f32.mrb[0].mxu0
  %3706 = vmatprep.mubr.f32.mxu0 0.0
  %3707 = vmatmul.mubr.f32.gmra.mrb[0].mxu0 %v3633
  %v3708 = vpop.f32.mrb[0].mxu0
  %v3709 = vadd.f32 0.0, %v3708
  %v3710 = vpop.f32.mrb[0].mxu0
  %3711 = vdwg.mxu0
  %3712 = vrot.lane.b32.xlu0 %v2557, 64
  %v3713 = vpop.permute.xlu0 %3712
  %3714 = vrot.lane.b32.xlu0 %v2559, 64
  %v3715 = vpop.permute.xlu0 %3714
  %v3718 = vsel %vm63, %v3438, 0
  %v3721 = vsel %vm63, %v3439, 0
  %v3723 = vsel %vm56, %v3715, 0
  %3725 = vmatprep.subr.mxu0 0.0
  %3726 = vmatpush1.msra.mxu0 %v3713
  %3727 = vmatprep.subr.mxu0 0.0
  %3728 = vmatpush1.msra.mxu0 %v3723
  %3729 = vmatprep.subr.mxu0 0.0
  %3730 = vmatpush1.msra.mxu0 0.0
  %3731 = vmatprep.subr.mxu0 0.0
  %3732 = vmatpush1.msra.mxu0 0.0
  %3733 = vmatprep.subr.mxu0 0.0
  %3734 = vmatpush1.msra.mxu0 0.0
  %3735 = vmatprep.subr.mxu0 0.0
  %3736 = vmatpush1.msra.mxu0 0.0
  %3737 = vmatprep.subr.mxu0 0.0
  %3738 = vmatpush1.msra.mxu0 0.0
  %3739 = vmatprep.subr.mxu0 0.0
  %3740 = vmatpush1.msra.mxu0 0.0
  %3741 = vmatprep.subr.mxu0 0.0
  %3742 = vmatpush1.msra.mxu0 0.0
  %3743 = vmatprep.subr.mxu0 0.0
  %3744 = vmatpush1.msra.mxu0 0.0
  %3745 = vmatprep.subr.mxu0 0.0
  %3746 = vmatpush1.msra.mxu0 0.0
  %3747 = vmatprep.subr.mxu0 0.0
  %3748 = vmatpush1.msra.mxu0 0.0
  %3749 = vmatprep.subr.mxu0 0.0
  %3750 = vmatpush1.msra.mxu0 0.0
  %3751 = vmatprep.subr.mxu0 0.0
  %3752 = vmatpush1.msra.mxu0 0.0
  %3753 = vmatprep.subr.mxu0 0.0
  %3754 = vmatpush1.msra.mxu0 0.0
  %3755 = vmatprep.subr.mxu0 0.0
  %3756 = vmatpush1.msra.mxu0 0.0
  %3757 = vmatprep.subr.mxu0 0.0
  %3758 = vmatpush1.msra.mxu0 0.0
  %3759 = vmatprep.subr.mxu0 0.0
  %3760 = vmatpush1.msra.mxu0 0.0
  %3761 = vmatprep.subr.mxu0 0.0
  %3762 = vmatpush1.msra.mxu0 0.0
  %3763 = vmatprep.subr.mxu0 0.0
  %3764 = vmatpush1.msra.mxu0 0.0
  %3765 = vmatprep.subr.mxu0 0.0
  %3766 = vmatpush1.msra.mxu0 0.0
  %3767 = vmatprep.subr.mxu0 0.0
  %3768 = vmatpush1.msra.mxu0 0.0
  %3769 = vmatprep.subr.mxu0 0.0
  %3770 = vmatpush1.msra.mxu0 0.0
  %3771 = vmatprep.subr.mxu0 0.0
  %3772 = vmatpush1.msra.mxu0 0.0
  %3773 = vmatprep.subr.mxu0 0.0
  %3774 = vmatpush1.msra.mxu0 0.0
  %3775 = vmatprep.subr.mxu0 0.0
  %3776 = vmatpush1.msra.mxu0 0.0
  %3777 = vmatprep.subr.mxu0 0.0
  %3778 = vmatpush1.msra.mxu0 0.0
  %3779 = vmatprep.subr.mxu0 0.0
  %3780 = vmatpush1.msra.mxu0 0.0
  %3781 = vmatprep.subr.mxu0 0.0
  %3782 = vmatpush1.msra.mxu0 0.0
  %3783 = vmatprep.subr.mxu0 0.0
  %3784 = vmatpush1.msra.mxu0 0.0
  %3785 = vmatprep.subr.mxu0 0.0
  %3786 = vmatpush1.msra.mxu0 0.0
  %3787 = vmatprep.subr.mxu0 0.0
  %3788 = vmatpush1.msra.mxu0 0.0
  %3789 = vmatprep.mubr.f32.mxu0 0.0
  %3790 = vmatmul.mubr.f32.gmra.mrb[0].mxu0 %v3718
  %v3791 = vpop.f32.mrb[0].mxu0
  %v3792 = vadd.f32 0.0, %v3791
  %v3793 = vpop.f32.mrb[0].mxu0
  %3794 = vmatprep.mubr.f32.mxu0 0.0
  %3795 = vmatmul.mubr.f32.gmra.mrb[0].mxu0 %v3721
  %v3796 = vpop.f32.mrb[0].mxu0
  %v3797 = vadd.f32 0.0, %v3796
  %v3798 = vpop.f32.mrb[0].mxu0
  %3799 = vdwg.mxu0
  %3800 = vrot.lane.b32.xlu0 %v2563, 64
  %v3801 = vpop.permute.xlu0 %3800
  %3802 = vrot.lane.b32.xlu0 %v2562, 64
  %v3803 = vpop.permute.xlu0 %3802
  %v3806 = vsel %vm63, %v3440, 0
  %v3809 = vsel %vm63, %v3441, 0
  %v3811 = vsel %vm56, %v3803, 0
  %3813 = vmatprep.subr.mxu0 0.0
  %3814 = vmatpush1.msra.mxu0 %v3801
  %3815 = vmatprep.subr.mxu0 0.0
  %3816 = vmatpush1.msra.mxu0 %v3811
  %3817 = vmatprep.subr.mxu0 0.0
  %3818 = vmatpush1.msra.mxu0 0.0
  %3819 = vmatprep.subr.mxu0 0.0
  %3820 = vmatpush1.msra.mxu0 0.0
  %3821 = vmatprep.subr.mxu0 0.0
  %3822 = vmatpush1.msra.mxu0 0.0
  %3823 = vmatprep.subr.mxu0 0.0
  %3824 = vmatpush1.msra.mxu0 0.0
  %3825 = vmatprep.subr.mxu0 0.0
  %3826 = vmatpush1.msra.mxu0 0.0
  %3827 = vmatprep.subr.mxu0 0.0
  %3828 = vmatpush1.msra.mxu0 0.0
  %3829 = vmatprep.subr.mxu0 0.0
  %3830 = vmatpush1.msra.mxu0 0.0
  %3831 = vmatprep.subr.mxu0 0.0
  %3832 = vmatpush1.msra.mxu0 0.0
  %3833 = vmatprep.subr.mxu0 0.0
  %3834 = vmatpush1.msra.mxu0 0.0
  %3835 = vmatprep.subr.mxu0 0.0
  %3836 = vmatpush1.msra.mxu0 0.0
  %3837 = vmatprep.subr.mxu0 0.0
  %3838 = vmatpush1.msra.mxu0 0.0
  %3839 = vmatprep.subr.mxu0 0.0
  %3840 = vmatpush1.msra.mxu0 0.0
  %3841 = vmatprep.subr.mxu0 0.0
  %3842 = vmatpush1.msra.mxu0 0.0
  %3843 = vmatprep.subr.mxu0 0.0
  %3844 = vmatpush1.msra.mxu0 0.0
  %3845 = vmatprep.subr.mxu0 0.0
  %3846 = vmatpush1.msra.mxu0 0.0
  %3847 = vmatprep.subr.mxu0 0.0
  %3848 = vmatpush1.msra.mxu0 0.0
  %3849 = vmatprep.subr.mxu0 0.0
  %3850 = vmatpush1.msra.mxu0 0.0
  %3851 = vmatprep.subr.mxu0 0.0
  %3852 = vmatpush1.msra.mxu0 0.0
  %3853 = vmatprep.subr.mxu0 0.0
  %3854 = vmatpush1.msra.mxu0 0.0
  %3855 = vmatprep.subr.mxu0 0.0
  %3856 = vmatpush1.msra.mxu0 0.0
  %3857 = vmatprep.subr.mxu0 0.0
  %3858 = vmatpush1.msra.mxu0 0.0
  %3859 = vmatprep.subr.mxu0 0.0
  %3860 = vmatpush1.msra.mxu0 0.0
  %3861 = vmatprep.subr.mxu0 0.0
  %3862 = vmatpush1.msra.mxu0 0.0
  %3863 = vmatprep.subr.mxu0 0.0
  %3864 = vmatpush1.msra.mxu0 0.0
  %3865 = vmatprep.subr.mxu0 0.0
  %3866 = vmatpush1.msra.mxu0 0.0
  %3867 = vmatprep.subr.mxu0 0.0
  %3868 = vmatpush1.msra.mxu0 0.0
  %3869 = vmatprep.subr.mxu0 0.0
  %3870 = vmatpush1.msra.mxu0 0.0
  %3871 = vmatprep.subr.mxu0 0.0
  %3872 = vmatpush1.msra.mxu0 0.0
  %3873 = vmatprep.subr.mxu0 0.0
  %3874 = vmatpush1.msra.mxu0 0.0
  %3875 = vmatprep.subr.mxu0 0.0
  %3876 = vmatpush1.msra.mxu0 0.0
  %3877 = vmatprep.mubr.f32.mxu0 0.0
  %3878 = vmatmul.mubr.f32.gmra.mrb[0].mxu0 %v3806
  %v3879 = vpop.f32.mrb[0].mxu0
  %v3880 = vadd.f32 0.0, %v3879
  %v3881 = vpop.f32.mrb[0].mxu0
  %3882 = vmatprep.mubr.f32.mxu0 0.0
  %3883 = vmatmul.mubr.f32.gmra.mrb[0].mxu0 %v3809
  %v3884 = vpop.f32.mrb[0].mxu0
  %v3885 = vadd.f32 0.0, %v3884
  %v3886 = vpop.f32.mrb[0].mxu0
  %3887 = vdwg.mxu0
  %3888 = vrot.lane.b32.xlu0 %v2565, 64
  %v3889 = vpop.permute.xlu0 %3888
  %3890 = vrot.lane.b32.xlu0 %v2567, 64
  %v3891 = vpop.permute.xlu0 %3890
  %v3894 = vsel %vm63, %v3442, 0
  %v3897 = vsel %vm63, %v3443, 0
  %v3899 = vsel %vm56, %v3891, 0
  %3901 = vmatprep.subr.mxu0 0.0
  %3902 = vmatpush1.msra.mxu0 %v3889
  %3903 = vmatprep.subr.mxu0 0.0
  %3904 = vmatpush1.msra.mxu0 %v3899
  %3905 = vmatprep.subr.mxu0 0.0
  %3906 = vmatpush1.msra.mxu0 0.0
  %3907 = vmatprep.subr.mxu0 0.0
  %3908 = vmatpush1.msra.mxu0 0.0
  %3909 = vmatprep.subr.mxu0 0.0
  %3910 = vmatpush1.msra.mxu0 0.0
  %3911 = vmatprep.subr.mxu0 0.0
  %3912 = vmatpush1.msra.mxu0 0.0
  %3913 = vmatprep.subr.mxu0 0.0
  %3914 = vmatpush1.msra.mxu0 0.0
  %3915 = vmatprep.subr.mxu0 0.0
  %3916 = vmatpush1.msra.mxu0 0.0
  %3917 = vmatprep.subr.mxu0 0.0
  %3918 = vmatpush1.msra.mxu0 0.0
  %3919 = vmatprep.subr.mxu0 0.0
  %3920 = vmatpush1.msra.mxu0 0.0
  %3921 = vmatprep.subr.mxu0 0.0
  %3922 = vmatpush1.msra.mxu0 0.0
  %3923 = vmatprep.subr.mxu0 0.0
  %3924 = vmatpush1.msra.mxu0 0.0
  %3925 = vmatprep.subr.mxu0 0.0
  %3926 = vmatpush1.msra.mxu0 0.0
  %3927 = vmatprep.subr.mxu0 0.0
  %3928 = vmatpush1.msra.mxu0 0.0
  %3929 = vmatprep.subr.mxu0 0.0
  %3930 = vmatpush1.msra.mxu0 0.0
  %3931 = vmatprep.subr.mxu0 0.0
  %3932 = vmatpush1.msra.mxu0 0.0
  %3933 = vmatprep.subr.mxu0 0.0
  %3934 = vmatpush1.msra.mxu0 0.0
  %3935 = vmatprep.subr.mxu0 0.0
  %3936 = vmatpush1.msra.mxu0 0.0
  %3937 = vmatprep.subr.mxu0 0.0
  %3938 = vmatpush1.msra.mxu0 0.0
  %3939 = vmatprep.subr.mxu0 0.0
  %3940 = vmatpush1.msra.mxu0 0.0
  %3941 = vmatprep.subr.mxu0 0.0
  %3942 = vmatpush1.msra.mxu0 0.0
  %3943 = vmatprep.subr.mxu0 0.0
  %3944 = vmatpush1.msra.mxu0 0.0
  %3945 = vmatprep.subr.mxu0 0.0
  %3946 = vmatpush1.msra.mxu0 0.0
  %3947 = vmatprep.subr.mxu0 0.0
  %3948 = vmatpush1.msra.mxu0 0.0
  %3949 = vmatprep.subr.mxu0 0.0
  %3950 = vmatpush1.msra.mxu0 0.0
  %3951 = vmatprep.subr.mxu0 0.0
  %3952 = vmatpush1.msra.mxu0 0.0
  %3953 = vmatprep.subr.mxu0 0.0
  %3954 = vmatpush1.msra.mxu0 0.0
  %3955 = vmatprep.subr.mxu0 0.0
  %3956 = vmatpush1.msra.mxu0 0.0
  %3957 = vmatprep.subr.mxu0 0.0
  %3958 = vmatpush1.msra.mxu0 0.0
  %3959 = vmatprep.subr.mxu0 0.0
  %3960 = vmatpush1.msra.mxu0 0.0
  %3961 = vmatprep.subr.mxu0 0.0
  %3962 = vmatpush1.msra.mxu0 0.0
  %3963 = vmatprep.subr.mxu0 0.0
  %3964 = vmatpush1.msra.mxu0 0.0
  %3965 = vmatprep.mubr.f32.mxu0 0.0
  %3966 = vmatmul.mubr.f32.gmra.mrb[0].mxu0 %v3894
  %v3967 = vpop.f32.mrb[0].mxu0
  %v3968 = vadd.f32 0.0, %v3967
  %v3969 = vpop.f32.mrb[0].mxu0
  %3970 = vmatprep.mubr.f32.mxu0 0.0
  %3971 = vmatmul.mubr.f32.gmra.mrb[0].mxu0 %v3897
  %v3972 = vpop.f32.mrb[0].mxu0
  %v3973 = vadd.f32 0.0, %v3972
  %v3974 = vpop.f32.mrb[0].mxu0
  %3975 = vdwg.mxu0
  %3976 = vrot.lane.b32.xlu0 %v2569, 64
  %v3977 = vpop.permute.xlu0 %3976
  %3978 = vrot.lane.b32.xlu0 %v2571, 64
  %v3979 = vpop.permute.xlu0 %3978
  %v3982 = vsel %vm63, %v3444, 0
  %v3985 = vsel %vm63, %v3445, 0
  %v3987 = vsel %vm56, %v3979, 0
  %3989 = vmatprep.subr.mxu0 0.0
  %3990 = vmatpush1.msra.mxu0 %v3977
  %3991 = vmatprep.subr.mxu0 0.0
  %3992 = vmatpush1.msra.mxu0 %v3987
  %3993 = vmatprep.subr.mxu0 0.0
  %3994 = vmatpush1.msra.mxu0 0.0
  %3995 = vmatprep.subr.mxu0 0.0
  %3996 = vmatpush1.msra.mxu0 0.0
  %3997 = vmatprep.subr.mxu0 0.0
  %3998 = vmatpush1.msra.mxu0 0.0
  %3999 = vmatprep.subr.mxu0 0.0
  %4000 = vmatpush1.msra.mxu0 0.0
  %4001 = vmatprep.subr.mxu0 0.0
  %4002 = vmatpush1.msra.mxu0 0.0
  %4003 = vmatprep.subr.mxu0 0.0
  %4004 = vmatpush1.msra.mxu0 0.0
  %4005 = vmatprep.subr.mxu0 0.0
  %4006 = vmatpush1.msra.mxu0 0.0
  %4007 = vmatprep.subr.mxu0 0.0
  %4008 = vmatpush1.msra.mxu0 0.0
  %4009 = vmatprep.subr.mxu0 0.0
  %4010 = vmatpush1.msra.mxu0 0.0
  %4011 = vmatprep.subr.mxu0 0.0
  %4012 = vmatpush1.msra.mxu0 0.0
  %4013 = vmatprep.subr.mxu0 0.0
  %4014 = vmatpush1.msra.mxu0 0.0
  %4015 = vmatprep.subr.mxu0 0.0
  %4016 = vmatpush1.msra.mxu0 0.0
  %4017 = vmatprep.subr.mxu0 0.0
  %4018 = vmatpush1.msra.mxu0 0.0
  %4019 = vmatprep.subr.mxu0 0.0
  %4020 = vmatpush1.msra.mxu0 0.0
  %4021 = vmatprep.subr.mxu0 0.0
  %4022 = vmatpush1.msra.mxu0 0.0
  %4023 = vmatprep.subr.mxu0 0.0
  %4024 = vmatpush1.msra.mxu0 0.0
  %4025 = vmatprep.subr.mxu0 0.0
  %4026 = vmatpush1.msra.mxu0 0.0
  %4027 = vmatprep.subr.mxu0 0.0
  %4028 = vmatpush1.msra.mxu0 0.0
  %4029 = vmatprep.subr.mxu0 0.0
  %4030 = vmatpush1.msra.mxu0 0.0
  %4031 = vmatprep.subr.mxu0 0.0
  %4032 = vmatpush1.msra.mxu0 0.0
  %4033 = vmatprep.subr.mxu0 0.0
  %4034 = vmatpush1.msra.mxu0 0.0
  %4035 = vmatprep.subr.mxu0 0.0
  %4036 = vmatpush1.msra.mxu0 0.0
  %4037 = vmatprep.subr.mxu0 0.0
  %4038 = vmatpush1.msra.mxu0 0.0
  %4039 = vmatprep.subr.mxu0 0.0
  %4040 = vmatpush1.msra.mxu0 0.0
  %4041 = vmatprep.subr.mxu0 0.0
  %4042 = vmatpush1.msra.mxu0 0.0
  %4043 = vmatprep.subr.mxu0 0.0
  %4044 = vmatpush1.msra.mxu0 0.0
  %4045 = vmatprep.subr.mxu0 0.0
  %4046 = vmatpush1.msra.mxu0 0.0
  %4047 = vmatprep.subr.mxu0 0.0
  %4048 = vmatpush1.msra.mxu0 0.0
  %4049 = vmatprep.subr.mxu0 0.0
  %4050 = vmatpush1.msra.mxu0 0.0
  %4051 = vmatprep.subr.mxu0 0.0
  %4052 = vmatpush1.msra.mxu0 0.0
  %4053 = vmatprep.mubr.f32.mxu0 0.0
  %4054 = vmatmul.mubr.f32.gmra.mrb[0].mxu0 %v3982
  %v4055 = vpop.f32.mrb[0].mxu0
  %v4056 = vadd.f32 0.0, %v4055
  %v4057 = vpop.f32.mrb[0].mxu0
  %4058 = vmatprep.mubr.f32.mxu0 0.0
  %4059 = vmatmul.mubr.f32.gmra.mrb[0].mxu0 %v3985
  %v4060 = vpop.f32.mrb[0].mxu0
  %v4061 = vadd.f32 0.0, %v4060
  %v4062 = vpop.f32.mrb[0].mxu0
  %4063 = vdwg.mxu0
  %4064 = vrot.lane.b32.xlu0 %v2573, 64
  %v4065 = vpop.permute.xlu0 %4064
  %4066 = vrot.lane.b32.xlu0 %v2575, 64
  %v4067 = vpop.permute.xlu0 %4066
  %v4070 = vsel %vm63, %v3446, 0
  %v4073 = vsel %vm63, %v3447, 0
  %v4075 = vsel %vm56, %v4067, 0
  %4077 = vmatprep.subr.mxu0 0.0
  %4078 = vmatpush1.msra.mxu0 %v4065
  %4079 = vmatprep.subr.mxu0 0.0
  %4080 = vmatpush1.msra.mxu0 %v4075
  %4081 = vmatprep.subr.mxu0 0.0
  %4082 = vmatpush1.msra.mxu0 0.0
  %4083 = vmatprep.subr.mxu0 0.0
  %4084 = vmatpush1.msra.mxu0 0.0
  %4085 = vmatprep.subr.mxu0 0.0
  %4086 = vmatpush1.msra.mxu0 0.0
  %4087 = vmatprep.subr.mxu0 0.0
  %4088 = vmatpush1.msra.mxu0 0.0
  %4089 = vmatprep.subr.mxu0 0.0
  %4090 = vmatpush1.msra.mxu0 0.0
  %4091 = vmatprep.subr.mxu0 0.0
  %4092 = vmatpush1.msra.mxu0 0.0
  %4093 = vmatprep.subr.mxu0 0.0
  %4094 = vmatpush1.msra.mxu0 0.0
  %4095 = vmatprep.subr.mxu0 0.0
  %4096 = vmatpush1.msra.mxu0 0.0
  %4097 = vmatprep.subr.mxu0 0.0
  %4098 = vmatpush1.msra.mxu0 0.0
  %4099 = vmatprep.subr.mxu0 0.0
  %4100 = vmatpush1.msra.mxu0 0.0
  %4101 = vmatprep.subr.mxu0 0.0
  %4102 = vmatpush1.msra.mxu0 0.0
  %4103 = vmatprep.subr.mxu0 0.0
  %4104 = vmatpush1.msra.mxu0 0.0
  %4105 = vmatprep.subr.mxu0 0.0
  %4106 = vmatpush1.msra.mxu0 0.0
  %4107 = vmatprep.subr.mxu0 0.0
  %4108 = vmatpush1.msra.mxu0 0.0
  %4109 = vmatprep.subr.mxu0 0.0
  %4110 = vmatpush1.msra.mxu0 0.0
  %4111 = vmatprep.subr.mxu0 0.0
  %4112 = vmatpush1.msra.mxu0 0.0
  %4113 = vmatprep.subr.mxu0 0.0
  %4114 = vmatpush1.msra.mxu0 0.0
  %4115 = vmatprep.subr.mxu0 0.0
  %4116 = vmatpush1.msra.mxu0 0.0
  %4117 = vmatprep.subr.mxu0 0.0
  %4118 = vmatpush1.msra.mxu0 0.0
  %4119 = vmatprep.subr.mxu0 0.0
  %4120 = vmatpush1.msra.mxu0 0.0
  %4121 = vmatprep.subr.mxu0 0.0
  %4122 = vmatpush1.msra.mxu0 0.0
  %4123 = vmatprep.subr.mxu0 0.0
  %4124 = vmatpush1.msra.mxu0 0.0
  %4125 = vmatprep.subr.mxu0 0.0
  %4126 = vmatpush1.msra.mxu0 0.0
  %4127 = vmatprep.subr.mxu0 0.0
  %4128 = vmatpush1.msra.mxu0 0.0
  %4129 = vmatprep.subr.mxu0 0.0
  %4130 = vmatpush1.msra.mxu0 0.0
  %4131 = vmatprep.subr.mxu0 0.0
  %4132 = vmatpush1.msra.mxu0 0.0
  %4133 = vmatprep.subr.mxu0 0.0
  %4134 = vmatpush1.msra.mxu0 0.0
  %4135 = vmatprep.subr.mxu0 0.0
  %4136 = vmatpush1.msra.mxu0 0.0
  %4137 = vmatprep.subr.mxu0 0.0
  %4138 = vmatpush1.msra.mxu0 0.0
  %4139 = vmatprep.subr.mxu0 0.0
  %4140 = vmatpush1.msra.mxu0 0.0
  %4141 = vmatprep.mubr.f32.mxu0 0.0
  %4142 = vmatmul.mubr.f32.gmra.mrb[0].mxu0 %v4070
  %v4143 = vpop.f32.mrb[0].mxu0
  %v4144 = vadd.f32 0.0, %v4143
  %v4145 = vpop.f32.mrb[0].mxu0
  %4146 = vmatprep.mubr.f32.mxu0 0.0
  %4147 = vmatmul.mubr.f32.gmra.mrb[0].mxu0 %v4073
  %v4148 = vpop.f32.mrb[0].mxu0
  %v4149 = vadd.f32 0.0, %v4148
  %v4150 = vpop.f32.mrb[0].mxu0
  %4151 = vdwg.mxu0
  %4154 = vrot.lane.b32.xlu0 %v3616, 8
  %v4155 = vpop.permute.xlu0 %4154
  %4156 = vrot.lane.b32.xlu0 %v3621, 8
  %v4157 = vpop.permute.xlu0 %4156
  %4162 = vrot.lane.b32.xlu0 %v3704, 16
  %v4163 = vpop.permute.xlu0 %4162
  %4164 = vrot.lane.b32.xlu0 %v3709, 16
  %v4165 = vpop.permute.xlu0 %4164
  %4170 = vrot.lane.b32.xlu0 %v3792, 24
  %v4171 = vpop.permute.xlu0 %4170
  %4172 = vrot.lane.b32.xlu0 %v3797, 24
  %v4173 = vpop.permute.xlu0 %4172
  %v4176 = vsel %vm346, %v3528, %v4155
  %v4177 = vsel %vm346, %v3533, %v4157
  %v4178 = vsel %vm1946, %v4176, %v4163
  %v4179 = vsel %vm1946, %v4177, %v4165
  %v4180 = vsel %vm1949, %v4178, %v4171
  %v4181 = vsel %vm1949, %v4179, %v4173
  %4184 = vrot.lane.b32.xlu0 %v3968, 8
  %v4185 = vpop.permute.xlu0 %4184
  %4186 = vrot.lane.b32.xlu0 %v3973, 8
  %v4187 = vpop.permute.xlu0 %4186
  %4192 = vrot.lane.b32.xlu0 %v4056, 16
  %v4193 = vpop.permute.xlu0 %4192
  %4194 = vrot.lane.b32.xlu0 %v4061, 16
  %v4195 = vpop.permute.xlu0 %4194
  %4200 = vrot.lane.b32.xlu0 %v4144, 24
  %v4201 = vpop.permute.xlu0 %4200
  %4202 = vrot.lane.b32.xlu0 %v4149, 24
  %v4203 = vpop.permute.xlu0 %4202
  %v4206 = vsel %vm346, %v3880, %v4185
  %v4207 = vsel %vm346, %v3885, %v4187
  %v4208 = vsel %vm1946, %v4206, %v4193
  %v4209 = vsel %vm1946, %v4207, %v4195
  %v4210 = vsel %vm1949, %v4208, %v4201
  %v4211 = vsel %vm1949, %v4209, %v4203
  %v4214 = vrot.slane %v4210, 7
  %v4215 = vrot.slane %v4211, 7
  %v4216 = vsel %vm56, %v4214, %v4215
  %v4218 = vsel %vm56, %v4181, %v4214
  %4223 = vrot.lane.b32.xlu0 %v2453, 32
  %v4224 = vpop.permute.xlu0 %4223
  %4225 = vrot.lane.b32.xlu0 %v2454, 32
  %v4226 = vpop.permute.xlu0 %4225
  %4227 = vrot.lane.b32.xlu0 %v2455, 32
  %v4228 = vpop.permute.xlu0 %4227
  %4229 = vrot.lane.b32.xlu0 %v2456, 32
  %v4230 = vpop.permute.xlu0 %4229
  %v4236 = vsel %vm156, %v4180, 0
  %v4239 = vsel %vm156, %v4218, 0
  %v4241 = vsel %vm156, %v4216, 0
  %4243 = vmatprep.subr.mxu0 0.0
  %4244 = vmatpush1.msra.mxu0 %v4224
  %4245 = vmatprep.subr.mxu0 0.0
  %4246 = vmatpush1.msra.mxu0 %v4226
  %4247 = vmatprep.subr.mxu0 0.0
  %4248 = vmatpush1.msra.mxu0 %v4228
  %4249 = vmatprep.subr.mxu0 0.0
  %4250 = vmatpush1.msra.mxu0 %v4230
  %4251 = vmatprep.subr.mxu0 0.0
  %4252 = vmatpush1.msra.mxu0 0.0
  %4253 = vmatprep.subr.mxu0 0.0
  %4254 = vmatpush1.msra.mxu0 0.0
  %4255 = vmatprep.subr.mxu0 0.0
  %4256 = vmatpush1.msra.mxu0 0.0
  %4257 = vmatprep.subr.mxu0 0.0
  %4258 = vmatpush1.msra.mxu0 0.0
  %4259 = vmatprep.subr.mxu0 0.0
  %4260 = vmatpush1.msra.mxu0 0.0
  %4261 = vmatprep.subr.mxu0 0.0
  %4262 = vmatpush1.msra.mxu0 0.0
  %4263 = vmatprep.subr.mxu0 0.0
  %4264 = vmatpush1.msra.mxu0 0.0
  %4265 = vmatprep.subr.mxu0 0.0
  %4266 = vmatpush1.msra.mxu0 0.0
  %4267 = vmatprep.subr.mxu0 0.0
  %4268 = vmatpush1.msra.mxu0 0.0
  %4269 = vmatprep.subr.mxu0 0.0
  %4270 = vmatpush1.msra.mxu0 0.0
  %4271 = vmatprep.subr.mxu0 0.0
  %4272 = vmatpush1.msra.mxu0 0.0
  %4273 = vmatprep.subr.mxu0 0.0
  %4274 = vmatpush1.msra.mxu0 0.0
  %4275 = vmatprep.subr.mxu0 0.0
  %4276 = vmatpush1.msra.mxu0 0.0
  %4277 = vmatprep.subr.mxu0 0.0
  %4278 = vmatpush1.msra.mxu0 0.0
  %4279 = vmatprep.subr.mxu0 0.0
  %4280 = vmatpush1.msra.mxu0 0.0
  %4281 = vmatprep.subr.mxu0 0.0
  %4282 = vmatpush1.msra.mxu0 0.0
  %4283 = vmatprep.subr.mxu0 0.0
  %4284 = vmatpush1.msra.mxu0 0.0
  %4285 = vmatprep.subr.mxu0 0.0
  %4286 = vmatpush1.msra.mxu0 0.0
  %4287 = vmatprep.subr.mxu0 0.0
  %4288 = vmatpush1.msra.mxu0 0.0
  %4289 = vmatprep.subr.mxu0 0.0
  %4290 = vmatpush1.msra.mxu0 0.0
  %4291 = vmatprep.subr.mxu0 0.0
  %4292 = vmatpush1.msra.mxu0 0.0
  %4293 = vmatprep.subr.mxu0 0.0
  %4294 = vmatpush1.msra.mxu0 0.0
  %4295 = vmatprep.subr.mxu0 0.0
  %4296 = vmatpush1.msra.mxu0 0.0
  %4297 = vmatprep.subr.mxu0 0.0
  %4298 = vmatpush1.msra.mxu0 0.0
  %4299 = vmatprep.subr.mxu0 0.0
  %4300 = vmatpush1.msra.mxu0 0.0
  %4301 = vmatprep.subr.mxu0 0.0
  %4302 = vmatpush1.msra.mxu0 0.0
  %4303 = vmatprep.subr.mxu0 0.0
  %4304 = vmatpush1.msra.mxu0 0.0
  %4305 = vmatprep.subr.mxu0 0.0
  %4306 = vmatpush1.msra.mxu0 0.0
  %4307 = vmatprep.mubr.f32.mxu0 0.0
  %4308 = vmatmul.mubr.f32.gmra.mrb[0].mxu0 %v4236
  %v4309 = vpop.f32.mrb[0].mxu0
  %v4310 = vadd.f32 0.0, %v4309
  %v4311 = vpop.f32.mrb[0].mxu0
  %4312 = vmatprep.mubr.f32.mxu0 0.0
  %4313 = vmatmul.mubr.f32.gmra.mrb[0].mxu0 %v4239
  %v4314 = vpop.f32.mrb[0].mxu0
  %v4315 = vadd.f32 0.0, %v4314
  %v4316 = vpop.f32.mrb[0].mxu0
  %4317 = vmatprep.mubr.f32.mxu0 0.0
  %4318 = vmatmul.mubr.f32.gmra.mrb[0].mxu0 %v4241
  %v4319 = vpop.f32.mrb[0].mxu0
  %v4320 = vadd.f32 0.0, %v4319
  %v4321 = vpop.f32.mrb[0].mxu0
  %4322 = vdwg.mxu0
  %v4323 = vadd.f32 %v2390, %v4310
  %v4324 = vadd.f32 %v2391, %v4315
  %v4325 = vadd.f32 %v2392, %v4320
  %v4326 = vlaneseq
  %v4327 = vshrl.u32 %v4326, 7
  %v4328 = vsub.s32 3, %v4327
  %v4329 = vrot.slane %v28, %v4328
  %v4330 = vadd.f32 %v4323, %v4329
  %v4331 = vadd.f32 %v4324, %v4329
  %v4332 = vadd.f32 %v4325, %v4329
  %v4333 = vsel %vm156, %v4330, 0.0
  %4334 = vadd.xlane.f32.xlu0 %v4333
  %v4335 = vpop.xlane.xlu0 %4334
  %v4336 = vsel %vm156, %v4331, 0.0
  %4337 = vadd.xlane.f32.xlu0 %v4336
  %v4338 = vpop.xlane.xlu0 %4337
  %v4339 = vsel %vm163, %v4332, 0.0
  %4340 = vadd.xlane.f32.xlu0 %v4339
  %v4341 = vpop.xlane.xlu0 %4340
  %v4342 = vmul.f32 %v4335, %v167
  %v4343 = vmul.f32 %v4338, %v167
  %v4344 = vmul.f32 %v4341, %v167
  %v4345 = vmul.f32 %v4330, %v4330
  %v4346 = vmul.f32 %v4331, %v4331
  %v4347 = vmul.f32 %v4332, %v4332
  %v4348 = vsel %vm156, %v4345, 0.0
  %4349 = vadd.xlane.f32.xlu0 %v4348
  %v4350 = vpop.xlane.xlu0 %4349
  %v4351 = vsel %vm156, %v4346, 0.0
  %4352 = vadd.xlane.f32.xlu0 %v4351
  %v4353 = vpop.xlane.xlu0 %4352
  %v4354 = vsel %vm163, %v4347, 0.0
  %4355 = vadd.xlane.f32.xlu0 %v4354
  %v4356 = vpop.xlane.xlu0 %4355
  %v4357 = vmul.f32 %v4350, %v167
  %v4358 = vmul.f32 %v4353, %v167
  %v4359 = vmul.f32 %v4356, %v167
  %v4360 = vmul.f32 %v4342, %v4342
  %v4361 = vmul.f32 %v4343, %v4343
  %v4362 = vmul.f32 %v4344, %v4344
  %v4363 = vsub.f32 %v4357, %v4360
  %v4364 = vsub.f32 %v4358, %v4361
  %v4365 = vsub.f32 %v4359, %v4362
  %v4366 = vsub.f32 %v4330, %v4342
  %v4367 = vsub.f32 %v4331, %v4343
  %v4368 = vsub.f32 %v4332, %v4344
  %v4369 = vadd.f32 %v4363, 1e-05
  %v4370 = vadd.f32 %v4364, 1e-05
  %v4371 = vadd.f32 %v4365, 1e-05
  %v4372 = vrsqrt.pop %v4369
  %v4373 = vrsqrt.pop %v4370
  %v4374 = vrsqrt.pop %v4371
  %v4375 = vmul.f32 %v4366, %v4372
  %v4376 = vmul.f32 %v4367, %v4373
  %v4377 = vmul.f32 %v4368, %v4374
  %v4378 = vlaneseq
  %v4379 = vshrl.u32 %v4378, 7
  %v4380 = vsub.s32 1, %v4379
  %v4381 = vrot.slane %v28, %v4380
  %v4382 = vmul.f32 %v4375, %v4381
  %v4383 = vmul.f32 %v4376, %v4381
  %v4384 = vmul.f32 %v4377, %v4381
  %v4385 = vlaneseq
  %v4386 = vshrl.u32 %v4385, 7
  %v4387 = vsub.s32 2, %v4386
  %v4388 = vrot.slane %v28, %v4387
  %v4389 = vadd.f32 %v4382, %v4388
  %v4390 = vadd.f32 %v4383, %v4388
  %v4391 = vadd.f32 %v4384, %v4388
  %s4392 = scalar_lea.vmem %s4, 40
  %v4393 = vld [vmem:[%s4392] sm:$0xff]
  %v4394 = vld [vmem:[%s4392 + $0x8] sm:$0xff]
  %v4395 = vld [vmem:[%s4392 + $0x10] sm:$0xff]
  %v4396 = vld [vmem:[%s4392 + $0x18] sm:$0xff]
  %v4397 = vld [vmem:[%s4392 + $0x20] sm:$0x1]
  %v4398 = vlaneseq
  %v4399 = vshrl.u32 %v4398, 7
  %v4400 = vsub.s32 0, %v4399
  %v4401 = vrot.slane %v4397, %v4400
  %v4403 = vsel %vm156, %v4389, 0
  %v4406 = vsel %vm156, %v4390, 0
  %v4409 = vsel %vm156, %v4391, 0
  %4411 = vmatprep.subr.mxu0 0.0
  %4412 = vmatpush1.msra.mxu0 %v4393
  %4413 = vmatprep.subr.mxu0 0.0
  %4414 = vmatpush1.msra.mxu0 %v4394
  %4415 = vmatprep.subr.mxu0 0.0
  %4416 = vmatpush1.msra.mxu0 %v4395
  %4417 = vmatprep.subr.mxu0 0.0
  %4418 = vmatpush1.msra.mxu0 %v4396
  %4419 = vmatprep.subr.mxu0 0.0
  %4420 = vmatpush1.msra.mxu0 0.0
  %4421 = vmatprep.subr.mxu0 0.0
  %4422 = vmatpush1.msra.mxu0 0.0
  %4423 = vmatprep.subr.mxu0 0.0
  %4424 = vmatpush1.msra.mxu0 0.0
  %4425 = vmatprep.subr.mxu0 0.0
  %4426 = vmatpush1.msra.mxu0 0.0
  %4427 = vmatprep.subr.mxu0 0.0
  %4428 = vmatpush1.msra.mxu0 0.0
  %4429 = vmatprep.subr.mxu0 0.0
  %4430 = vmatpush1.msra.mxu0 0.0
  %4431 = vmatprep.subr.mxu0 0.0
  %4432 = vmatpush1.msra.mxu0 0.0
  %4433 = vmatprep.subr.mxu0 0.0
  %4434 = vmatpush1.msra.mxu0 0.0
  %4435 = vmatprep.subr.mxu0 0.0
  %4436 = vmatpush1.msra.mxu0 0.0
  %4437 = vmatprep.subr.mxu0 0.0
  %4438 = vmatpush1.msra.mxu0 0.0
  %4439 = vmatprep.subr.mxu0 0.0
  %4440 = vmatpush1.msra.mxu0 0.0
  %4441 = vmatprep.subr.mxu0 0.0
  %4442 = vmatpush1.msra.mxu0 0.0
  %4443 = vmatprep.subr.mxu0 0.0
  %4444 = vmatpush1.msra.mxu0 0.0
  %4445 = vmatprep.subr.mxu0 0.0
  %4446 = vmatpush1.msra.mxu0 0.0
  %4447 = vmatprep.subr.mxu0 0.0
  %4448 = vmatpush1.msra.mxu0 0.0
  %4449 = vmatprep.subr.mxu0 0.0
  %4450 = vmatpush1.msra.mxu0 0.0
  %4451 = vmatprep.subr.mxu0 0.0
  %4452 = vmatpush1.msra.mxu0 0.0
  %4453 = vmatprep.subr.mxu0 0.0
  %4454 = vmatpush1.msra.mxu0 0.0
  %4455 = vmatprep.subr.mxu0 0.0
  %4456 = vmatpush1.msra.mxu0 0.0
  %4457 = vmatprep.subr.mxu0 0.0
  %4458 = vmatpush1.msra.mxu0 0.0
  %4459 = vmatprep.subr.mxu0 0.0
  %4460 = vmatpush1.msra.mxu0 0.0
  %4461 = vmatprep.subr.mxu0 0.0
  %4462 = vmatpush1.msra.mxu0 0.0
  %4463 = vmatprep.subr.mxu0 0.0
  %4464 = vmatpush1.msra.mxu0 0.0
  %4465 = vmatprep.subr.mxu0 0.0
  %4466 = vmatpush1.msra.mxu0 0.0
  %4467 = vmatprep.subr.mxu0 0.0
  %4468 = vmatpush1.msra.mxu0 0.0
  %4469 = vmatprep.subr.mxu0 0.0
  %4470 = vmatpush1.msra.mxu0 0.0
  %4471 = vmatprep.subr.mxu0 0.0
  %4472 = vmatpush1.msra.mxu0 0.0
  %4473 = vmatprep.subr.mxu0 0.0
  %4474 = vmatpush1.msra.mxu0 0.0
  %4475 = vmatprep.mubr.f32.mxu0 0.0
  %4476 = vmatmul.mubr.f32.gmra.mrb[0].mxu0 %v4403
  %v4477 = vpop.f32.mrb[0].mxu0
  %v4478 = vadd.f32 %v4401, %v4477
  %v4479 = vpop.f32.mrb[0].mxu0
  %4480 = vmatprep.mubr.f32.mxu0 0.0
  %4481 = vmatmul.mubr.f32.gmra.mrb[0].mxu0 %v4406
  %v4482 = vpop.f32.mrb[0].mxu0
  %v4483 = vadd.f32 %v4401, %v4482
  %v4484 = vpop.f32.mrb[0].mxu0
  %4485 = vmatprep.mubr.f32.mxu0 0.0
  %4486 = vmatmul.mubr.f32.gmra.mrb[0].mxu0 %v4409
  %v4487 = vpop.f32.mrb[0].mxu0
  %v4488 = vadd.f32 %v4401, %v4487
  %v4489 = vpop.f32.mrb[0].mxu0
  %4490 = vdwg.mxu0
  %v4491 = vmul.f32 %v4478, 0.5
  %v4492 = vmul.f32 %v4483, 0.5
  %v4493 = vmul.f32 %v4488, 0.5
  %v4494 = vmul.f32 %v4478, 0.044715
  %v4495 = vmul.f32 %v4483, 0.044715
  %v4496 = vmul.f32 %v4488, 0.044715
  %v4497 = vmul.f32 %v4494, %v4478
  %v4498 = vmul.f32 %v4495, %v4483
  %v4499 = vmul.f32 %v4496, %v4488
  %v4500 = vmul.f32 %v4497, %v4478
  %v4501 = vmul.f32 %v4498, %v4483
  %v4502 = vmul.f32 %v4499, %v4488
  %v4503 = vadd.f32 %v4478, %v4500
  %v4504 = vadd.f32 %v4483, %v4501
  %v4505 = vadd.f32 %v4488, %v4502
  %v4506 = vmul.f32 %v4503, 0.7978846
  %v4507 = vmul.f32 %v4504, 0.7978846
  %v4508 = vmul.f32 %v4505, 0.7978846
  %v4509 = vtanh.pop %v4506
  %v4510 = vtanh.pop %v4507
  %v4511 = vtanh.pop %v4508
  %v4512 = vadd.f32 %v4509, 1.0
  %v4513 = vadd.f32 %v4510, 1.0
  %v4514 = vadd.f32 %v4511, 1.0
  %v4515 = vmul.f32 %v4491, %v4512
  %v4516 = vmul.f32 %v4492, %v4513
  %v4517 = vmul.f32 %v4493, %v4514
  %s4518 = scalar_lea.vmem %s5, 128
  %v4519 = vld [vmem:[%s4518] sm:$0xff]
  %v4520 = vld [vmem:[%s4518 + $0x8] sm:$0xff]
  %v4521 = vld [vmem:[%s4518 + $0x10] sm:$0xff]
  %v4522 = vld [vmem:[%s4518 + $0x18] sm:$0xff]
  %v4523 = vld [vmem:[%s4518 + $0x20] sm:$0xff]
  %v4524 = vld [vmem:[%s4518 + $0x28] sm:$0xff]
  %v4525 = vld [vmem:[%s4518 + $0x30] sm:$0xff]
  %v4526 = vld [vmem:[%s4518 + $0x38] sm:$0xff]
  %v4527 = vld [vmem:[%s4518 + $0x40] sm:$0xff]
  %v4528 = vld [vmem:[%s4518 + $0x48] sm:$0xff]
  %v4529 = vld [vmem:[%s4518 + $0x50] sm:$0xff]
  %v4530 = vld [vmem:[%s4518 + $0x58] sm:$0xff]
  %v4531 = vld [vmem:[%s4518 + $0x60] sm:$0xff]
  %v4532 = vld [vmem:[%s4518 + $0x68] sm:$0xff]
  %v4533 = vld [vmem:[%s4518 + $0x70] sm:$0xff]
  %v4534 = vld [vmem:[%s4518 + $0x78] sm:$0xff]
  %4535 = vmatprep.subr.mxu0 0.0
  %4536 = vmatpush1.msra.mxu0 %v4519
  %4537 = vmatprep.subr.mxu0 0.0
  %4538 = vmatpush1.msra.mxu0 %v4520
  %4539 = vmatprep.subr.mxu0 0.0
  %4540 = vmatpush1.msra.mxu0 %v4521
  %4541 = vmatprep.subr.mxu0 0.0
  %4542 = vmatpush1.msra.mxu0 %v4522
  %4543 = vmatprep.subr.mxu0 0.0
  %4544 = vmatpush1.msra.mxu0 %v4523
  %4545 = vmatprep.subr.mxu0 0.0
  %4546 = vmatpush1.msra.mxu0 %v4524
  %4547 = vmatprep.subr.mxu0 0.0
  %4548 = vmatpush1.msra.mxu0 %v4525
  %4549 = vmatprep.subr.mxu0 0.0
  %4550 = vmatpush1.msra.mxu0 %v4526
  %4551 = vmatprep.subr.mxu0 0.0
  %4552 = vmatpush1.msra.mxu0 %v4527
  %4553 = vmatprep.subr.mxu0 0.0
  %4554 = vmatpush1.msra.mxu0 %v4528
  %4555 = vmatprep.subr.mxu0 0.0
  %4556 = vmatpush1.msra.mxu0 %v4529
  %4557 = vmatprep.subr.mxu0 0.0
  %4558 = vmatpush1.msra.mxu0 %v4530
  %4559 = vmatprep.subr.mxu0 0.0
  %4560 = vmatpush1.msra.mxu0 %v4531
  %4561 = vmatprep.subr.mxu0 0.0
  %4562 = vmatpush1.msra.mxu0 %v4532
  %4563 = vmatprep.subr.mxu0 0.0
  %4564 = vmatpush1.msra.mxu0 %v4533
  %4565 = vmatprep.subr.mxu0 0.0
  %4566 = vmatpush1.msra.mxu0 %v4534
  %4567 = vmatprep.subr.mxu0 0.0
  %4568 = vmatpush1.msra.mxu0 0.0
  %4569 = vmatprep.subr.mxu0 0.0
  %4570 = vmatpush1.msra.mxu0 0.0
  %4571 = vmatprep.subr.mxu0 0.0
  %4572 = vmatpush1.msra.mxu0 0.0
  %4573 = vmatprep.subr.mxu0 0.0
  %4574 = vmatpush1.msra.mxu0 0.0
  %4575 = vmatprep.subr.mxu0 0.0
  %4576 = vmatpush1.msra.mxu0 0.0
  %4577 = vmatprep.subr.mxu0 0.0
  %4578 = vmatpush1.msra.mxu0 0.0
  %4579 = vmatprep.subr.mxu0 0.0
  %4580 = vmatpush1.msra.mxu0 0.0
  %4581 = vmatprep.subr.mxu0 0.0
  %4582 = vmatpush1.msra.mxu0 0.0
  %4583 = vmatprep.subr.mxu0 0.0
  %4584 = vmatpush1.msra.mxu0 0.0
  %4585 = vmatprep.subr.mxu0 0.0
  %4586 = vmatpush1.msra.mxu0 0.0
  %4587 = vmatprep.subr.mxu0 0.0
  %4588 = vmatpush1.msra.mxu0 0.0
  %4589 = vmatprep.subr.mxu0 0.0
  %4590 = vmatpush1.msra.mxu0 0.0
  %4591 = vmatprep.subr.mxu0 0.0
  %4592 = vmatpush1.msra.mxu0 0.0
  %4593 = vmatprep.subr.mxu0 0.0
  %4594 = vmatpush1.msra.mxu0 0.0
  %4595 = vmatprep.subr.mxu0 0.0
  %4596 = vmatpush1.msra.mxu0 0.0
  %4597 = vmatprep.subr.mxu0 0.0
  %4598 = vmatpush1.msra.mxu0 0.0
  %4599 = vmatprep.mubr.f32.mxu0 0.0
  %4600 = vmatmul.mubr.f32.gmra.mrb[0].mxu0 %v4515
  %v4601 = vpop.f32.mrb[0].mxu0
  %v4602 = vadd.f32 0.0, %v4601
  %v4603 = vpop.f32.mrb[0].mxu0
  %4604 = vmatprep.mubr.f32.mxu0 0.0
  %4605 = vmatmul.mubr.f32.gmra.mrb[0].mxu0 %v4516
  %v4606 = vpop.f32.mrb[0].mxu0
  %v4607 = vadd.f32 0.0, %v4606
  %v4608 = vpop.f32.mrb[0].mxu0
  %4609 = vmatprep.mubr.f32.mxu0 0.0
  %4610 = vmatmul.mubr.f32.gmra.mrb[0].mxu0 %v4517
  %v4611 = vpop.f32.mrb[0].mxu0
  %v4612 = vadd.f32 0.0, %v4611
  %v4613 = vpop.f32.mrb[0].mxu0
  %4614 = vdwg.mxu0
  %v4615 = vadd.f32 %v4330, %v4602
  %v4616 = vadd.f32 %v4331, %v4607
  %v4617 = vadd.f32 %v4332, %v4612
  %v4618 = vlaneseq
  %v4619 = vshrl.u32 %v4618, 7
  %v4620 = vsub.s32 4, %v4619
  %v4621 = vrot.slane %v28, %v4620
  %v4622 = vadd.f32 %v4615, %v4621
  %v4623 = vadd.f32 %v4616, %v4621
  %v4624 = vadd.f32 %v4617, %v4621
  %v4625 = vld [vmem:[%s6] sm:$0xff]
  %v4626 = vld [vmem:[%s6 + $0x8] sm:$0xff]
  %v4627 = vld [vmem:[%s6 + $0x10] sm:$0xff]
  %v4628 = vld [vmem:[%s6 + $0x18] sm:$0xff]
  %v4629 = vld [vmem:[%s6 + $0x20] sm:$0x1]
  %v4630 = vlaneseq
  %v4631 = vshrl.u32 %v4630, 7
  %v4632 = vsub.s32 0, %v4631
  %v4633 = vrot.slane %v4629, %v4632
  %v4635 = vsel %vm156, %v4622, 0
  %v4638 = vsel %vm156, %v4623, 0
  %v4641 = vsel %vm156, %v4624, 0
  %4643 = vmatprep.subr.mxu0 0.0
  %4644 = vmatpush1.msra.mxu0 %v4625
  %4645 = vmatprep.subr.mxu0 0.0
  %4646 = vmatpush1.msra.mxu0 %v4626
  %4647 = vmatprep.subr.mxu0 0.0
  %4648 = vmatpush1.msra.mxu0 %v4627
  %4649 = vmatprep.subr.mxu0 0.0
  %4650 = vmatpush1.msra.mxu0 %v4628
  %4651 = vmatprep.subr.mxu0 0.0
  %4652 = vmatpush1.msra.mxu0 0.0
  %4653 = vmatprep.subr.mxu0 0.0
  %4654 = vmatpush1.msra.mxu0 0.0
  %4655 = vmatprep.subr.mxu0 0.0
  %4656 = vmatpush1.msra.mxu0 0.0
  %4657 = vmatprep.subr.mxu0 0.0
  %4658 = vmatpush1.msra.mxu0 0.0
  %4659 = vmatprep.subr.mxu0 0.0
  %4660 = vmatpush1.msra.mxu0 0.0
  %4661 = vmatprep.subr.mxu0 0.0
  %4662 = vmatpush1.msra.mxu0 0.0
  %4663 = vmatprep.subr.mxu0 0.0
  %4664 = vmatpush1.msra.mxu0 0.0
  %4665 = vmatprep.subr.mxu0 0.0
  %4666 = vmatpush1.msra.mxu0 0.0
  %4667 = vmatprep.subr.mxu0 0.0
  %4668 = vmatpush1.msra.mxu0 0.0
  %4669 = vmatprep.subr.mxu0 0.0
  %4670 = vmatpush1.msra.mxu0 0.0
  %4671 = vmatprep.subr.mxu0 0.0
  %4672 = vmatpush1.msra.mxu0 0.0
  %4673 = vmatprep.subr.mxu0 0.0
  %4674 = vmatpush1.msra.mxu0 0.0
  %4675 = vmatprep.subr.mxu0 0.0
  %4676 = vmatpush1.msra.mxu0 0.0
  %4677 = vmatprep.subr.mxu0 0.0
  %4678 = vmatpush1.msra.mxu0 0.0
  %4679 = vmatprep.subr.mxu0 0.0
  %4680 = vmatpush1.msra.mxu0 0.0
  %4681 = vmatprep.subr.mxu0 0.0
  %4682 = vmatpush1.msra.mxu0 0.0
  %4683 = vmatprep.subr.mxu0 0.0
  %4684 = vmatpush1.msra.mxu0 0.0
  %4685 = vmatprep.subr.mxu0 0.0
  %4686 = vmatpush1.msra.mxu0 0.0
  %4687 = vmatprep.subr.mxu0 0.0
  %4688 = vmatpush1.msra.mxu0 0.0
  %4689 = vmatprep.subr.mxu0 0.0
  %4690 = vmatpush1.msra.mxu0 0.0
  %4691 = vmatprep.subr.mxu0 0.0
  %4692 = vmatpush1.msra.mxu0 0.0
  %4693 = vmatprep.subr.mxu0 0.0
  %4694 = vmatpush1.msra.mxu0 0.0
  %4695 = vmatprep.subr.mxu0 0.0
  %4696 = vmatpush1.msra.mxu0 0.0
  %4697 = vmatprep.subr.mxu0 0.0
  %4698 = vmatpush1.msra.mxu0 0.0
  %4699 = vmatprep.subr.mxu0 0.0
  %4700 = vmatpush1.msra.mxu0 0.0
  %4701 = vmatprep.subr.mxu0 0.0
  %4702 = vmatpush1.msra.mxu0 0.0
  %4703 = vmatprep.subr.mxu0 0.0
  %4704 = vmatpush1.msra.mxu0 0.0
  %4705 = vmatprep.subr.mxu0 0.0
  %4706 = vmatpush1.msra.mxu0 0.0
  %4707 = vmatprep.mubr.f32.mxu0 0.0
  %4708 = vmatmul.mubr.f32.gmra.mrb[0].mxu0 %v4635
  %v4709 = vpop.f32.mrb[0].mxu0
  %v4710 = vadd.f32 %v4633, %v4709
  %v4711 = vpop.f32.mrb[0].mxu0
  %4712 = vmatprep.mubr.f32.mxu0 0.0
  %4713 = vmatmul.mubr.f32.gmra.mrb[0].mxu0 %v4638
  %v4714 = vpop.f32.mrb[0].mxu0
  %v4715 = vadd.f32 %v4633, %v4714
  %v4716 = vpop.f32.mrb[0].mxu0
  %4717 = vmatprep.mubr.f32.mxu0 0.0
  %4718 = vmatmul.mubr.f32.gmra.mrb[0].mxu0 %v4641
  %v4719 = vpop.f32.mrb[0].mxu0
  %v4720 = vadd.f32 %v4633, %v4719
  %v4721 = vpop.f32.mrb[0].mxu0
  %4722 = vdwg.mxu0
  %4723 = vst [vmem:[%s7] sm:$0xff] %v4710
  %4724 = vst [vmem:[%s7 + $0x8] sm:$0xff] %v4715
  %4725 = vst [vmem:[%s7 + $0x10] sm:$0x3] %v4720
  // Predicated region
  $region30: #{mae_decoder_forward.1} parent=0 // pred_check
    _
  $region31: #{mae_decoder_forward.1} parent=0 // pred_check_branch
    %4727 = sbr.rel (0) target = $region33
  $region32: #{mae_decoder_forward.1} parent=0 // pred_region
    _
  $region33: #{mae_decoder_forward.1} parent=0 // pred_fallthru
    _
  // Predicated region
  $region34: #{mae_decoder_forward.1} parent=0 // pred_check
    _
  $region35: #{mae_decoder_forward.1} parent=0 // pred_check_branch
    %4729 = sbr.rel (0) target = $region37
  $region36: #{mae_decoder_forward.1} parent=0 // pred_region
    _
  $region37: #{mae_decoder_forward.1} parent=0 // pred_fallthru
    _

</llo_original>
